<compile_context>
chip_gen: v6e
topology: v6e:2x2x1
jax: 0.10.0
libtpu: 0.0.40
codegen_flags: <defaults>
</compile_context>

<pallas_src>
import functools

import jax
import jax.numpy as jnp
from jax.experimental import pallas as pl
from jax.experimental.pallas import tpu as pltpu

BN_EPS = 1e-5
EXPANSION = 4
_VMEM_LIMIT = 48 * 1024 * 1024  # above 16/32 MiB scoped defaults, below v7x 64 MiB


# ---------------------------------------------------------------------------
# small static helpers
# ---------------------------------------------------------------------------
def _round_up(x, m):
    return (x + m - 1) // m * m


def _cpad(c):
    return max(128, _round_up(c, 128))


def _pad1(v, c):
    return jnp.pad(v, (0, c - v.shape[0]))


def _pad2(w, r, c):
    return jnp.pad(w, ((0, r - w.shape[0]), (0, c - w.shape[1])))


def _pick_tile(dim, cands=(512, 256, 128)):
    for c in cands:
        if dim % c == 0:
            return c
    return dim


def _pick_row_tile(rows):
    for c in (512, 256, 128, 64, 32, 16, 8):
        if rows % c == 0:
            return c
    return rows


def _row_tiling(rows):
    """Pick a row tile and the padded row count it implies."""
    for c in (512, 256, 128):
        if rows % c == 0:
            return c, rows
    if rows <= 512:
        t = _round_up(rows, 8)
        return t, t
    return 512, _round_up(rows, 512)


# ---------------------------------------------------------------------------
# Pallas kernel 1: tiled matmul (1x1 conv) + per-tile BN partial statistics
#   grid = (row_tiles, cout_tiles, k_tiles); K is the innermost "arbitrary"
#   reduction axis; f32 accumulator lives in a VMEM scratch.
# ---------------------------------------------------------------------------
def _matmul_stats_kernel(x_ref, w_ref, y_ref, st_ref, acc_ref):
    k = pl.program_id(2)

    @pl.when(k == 0)
    def _():
        acc_ref[...] = jnp.zeros_like(acc_ref)

    acc_ref[...] += jnp.dot(x_ref[...], w_ref[...],
                            preferred_element_type=jnp.float32)

    @pl.when(k == pl.num_programs(2) - 1)
    def _():
        y = acc_ref[...]
        y_ref[...] = y.astype(y_ref.dtype)
        s1 = jnp.sum(y, axis=0, keepdims=True)          # per-channel sum
        s2 = jnp.sum(y * y, axis=0, keepdims=True)      # per-channel sum of squares
        pad = jnp.zeros((6, y.shape[1]), jnp.float32)
        st_ref[...] = jnp.concatenate([s1, s2, pad], axis=0)


def conv1x1_raw(x, w, tile_rows):
    """x: (Rp, K) bf16 (rows/channels pre-padded), w: (K, Cout_p) bf16.
    Returns raw conv output (bf16) plus per-channel sum / sum-of-squares."""
    rp, kdim = x.shape
    cout = w.shape[1]
    tk = _pick_tile(kdim)
    tn = _pick_tile(cout)
    nr, nn, nk = rp // tile_rows, cout // tn, kdim // tk

    y, st = pl.pallas_call(
        _matmul_stats_kernel,
        grid_spec=pltpu.PrefetchScalarGridSpec(
            num_scalar_prefetch=0,
            grid=(nr, nn, nk),
            in_specs=[
                pl.BlockSpec((tile_rows, tk), lambda i, j, k: (i, k)),
                pl.BlockSpec((tk, tn), lambda i, j, k: (k, j)),
            ],
            out_specs=[
                pl.BlockSpec((tile_rows, tn), lambda i, j, k: (i, j)),
                pl.BlockSpec((8, tn), lambda i, j, k: (i, j)),
            ],
            scratch_shapes=[pltpu.VMEM((tile_rows, tn), jnp.float32)],
        ),
        out_shape=(jax.ShapeDtypeStruct((rp, cout), jnp.bfloat16),
                   jax.ShapeDtypeStruct((nr * 8, cout), jnp.float32)),
        compiler_params=pltpu.CompilerParams(
            dimension_semantics=("parallel", "parallel", "arbitrary"),
            vmem_limit_bytes=_VMEM_LIMIT),
    )(x, w)

    st = st.reshape(nr, 8, cout)
    return y, jnp.sum(st[:, 0, :], axis=0), jnp.sum(st[:, 1, :], axis=0)


# ---------------------------------------------------------------------------
# Pallas kernel 2: stride-1 K2xK2 conv (the 3x3 conv, possibly space-to-depth
# transformed) as K2*K2 accumulated dots over shifted windows of one image.
# No im2col materialization; weights stay resident in VMEM.
# ---------------------------------------------------------------------------
def _conv_kxk_stats_kernel(z_ref, w_ref, y_ref, st_ref, *, k2, ho, wo):
    cz = z_ref.shape[-1]
    cout = w_ref.shape[-1]
    acc = jnp.zeros((ho * wo, cout), jnp.float32)
    for dh in range(k2):
        for dw in range(k2):
            patch = z_ref[0, dh:dh + ho, dw:dw + wo, :]
            patch = patch.reshape(ho * wo, cz)
            acc = acc + jnp.dot(patch, w_ref[dh, dw],
                                preferred_element_type=jnp.float32)
    y_ref[0] = acc.astype(y_ref.dtype)
    s1 = jnp.sum(acc, axis=0, keepdims=True)
    s2 = jnp.sum(acc * acc, axis=0, keepdims=True)
    st_ref[0] = jnp.concatenate(
        [s1, s2, jnp.zeros((6, cout), jnp.float32)], axis=0)


def conv3x3_raw(a, w2, stride):
    """a: (N, H, W, Cp) bf16 (channels already lane-padded); w2: (3,3,Cin,Cout).
    Returns raw conv output (N*Ho*Wo, Cout_p) bf16 + per-channel sum/sumsq."""
    n, h, w, cp = a.shape
    s = stride
    ho = (h + 2 - 3) // s + 1
    wo = (w + 2 - 3) // s + 1
    cin, cout = w2.shape[2], w2.shape[3]
    cout_p = _cpad(cout)

    xp = jnp.pad(a, ((0, 0), (1, 1), (1, 1), (0, 0)))      # spatial pad=1
    hp, wp = h + 2, w + 2
    if s == 1:
        z, hz, wz, cz, k2 = xp, hp, wp, cp, 3
    else:
        # space-to-depth: stride-s 3x3 conv -> stride-1 k2 x k2 conv (1x data)
        hp2, wp2 = _round_up(hp, s), _round_up(wp, s)
        xp = jnp.pad(xp, ((0, 0), (0, hp2 - hp), (0, wp2 - wp), (0, 0)))
        hz, wz = hp2 // s, wp2 // s
        cz = s * s * cp
        k2 = 2 // s + 1
        z = xp.reshape(n, hz, s, wz, s, cp).transpose(0, 1, 3, 2, 4, 5)
        z = z.reshape(n, hz, wz, cz)
    assert hz >= ho + k2 - 1 and wz >= wo + k2 - 1

    # regroup 3x3 weights for the (possibly phase-stacked) stride-1 conv
    wt = jnp.zeros((k2, k2, cz, cout_p), jnp.float32)
    for kh in range(3):
        for kw in range(3):
            dh, aa = divmod(kh, s)
            dw, bb = divmod(kw, s)
            off = (aa * s + bb) * cp
            wt = wt.at[dh, dw, off:off + cin, :cout].set(w2[kh, kw])
    wt = wt.astype(jnp.bfloat16)

    y, st = pl.pallas_call(
        functools.partial(_conv_kxk_stats_kernel, k2=k2, ho=ho, wo=wo),
        grid_spec=pltpu.PrefetchScalarGridSpec(
            num_scalar_prefetch=0,
            grid=(n,),
            in_specs=[
                pl.BlockSpec((1, hz, wz, cz), lambda i: (i, 0, 0, 0)),
                pl.BlockSpec((k2, k2, cz, cout_p), lambda i: (0, 0, 0, 0)),
            ],
            out_specs=[
                pl.BlockSpec((1, ho * wo, cout_p), lambda i: (i, 0, 0)),
                pl.BlockSpec((1, 8, cout_p), lambda i: (i, 0, 0)),
            ],
        ),
        out_shape=(jax.ShapeDtypeStruct((n, ho * wo, cout_p), jnp.bfloat16),
                   jax.ShapeDtypeStruct((n, 8, cout_p), jnp.float32)),
        compiler_params=pltpu.CompilerParams(
            dimension_semantics=("parallel",),
            vmem_limit_bytes=_VMEM_LIMIT),
    )(z, wt)

    s1 = jnp.sum(st[:, 0, :], axis=0)
    s2 = jnp.sum(st[:, 1, :], axis=0)
    return y.reshape(n * ho * wo, cout_p), s1, s2


# ---------------------------------------------------------------------------
# Pallas kernel 3: BN affine epilogue (y*scale + bias), optional residual add
# (which carries its own scale/bias), optional ReLU, optional row masking for
# padded rows.  Lane-dense output, row grid axis "parallel".
# ---------------------------------------------------------------------------
def _bn_act_kernel(y_ref, sc_ref, bs_ref, *rest, relu, has_add,
                   true_rows, tile_rows):
    if has_add:
        ay_ref, asc_ref, ab_ref, o_ref = rest
    else:
        (o_ref,) = rest
    out = y_ref[...].astype(jnp.float32) * sc_ref[...] + bs_ref[...]
    if has_add:
        out = out + ay_ref[...].astype(jnp.float32) * asc_ref[...] + ab_ref[...]
    if relu:
        out = jnp.maximum(out, 0.0)
    if true_rows is not None:
        rows = tile_rows * pl.program_id(0) + jax.lax.broadcasted_iota(
            jnp.int32, out.shape, 0)
        out = jnp.where(rows < true_rows, out, 0.0)
    o_ref[...] = out.astype(o_ref.dtype)


def bn_act(y, scale, bias, *, relu, out_dtype, add=None, true_rows=None):
    rp, c = y.shape
    tr = _pick_row_tile(rp)
    nr = rp // tr

    inputs = [y, scale, bias]
    in_specs = [pl.BlockSpec((tr, c), lambda i: (i, 0)),
                pl.BlockSpec((1, c), lambda i: (0, 0)),
                pl.BlockSpec((1, c), lambda i: (0, 0))]
    if add is not None:
        ay, asc, ab = add
        inputs += [ay, asc, ab]
        in_specs += [pl.BlockSpec((tr, c), lambda i: (i, 0)),
                     pl.BlockSpec((1, c), lambda i: (0, 0)),
                     pl.BlockSpec((1, c), lambda i: (0, 0))]

    kernel = functools.partial(_bn_act_kernel, relu=relu, has_add=add is not None,
                               true_rows=true_rows, tile_rows=tr)
    return pl.pallas_call(
        kernel,
        grid_spec=pltpu.PrefetchScalarGridSpec(
            num_scalar_prefetch=0,
            grid=(nr,),
            in_specs=in_specs,
            out_specs=pl.BlockSpec((tr, c), lambda i: (i, 0)),
        ),
        out_shape=jax.ShapeDtypeStruct((rp, c), out_dtype),
        compiler_params=pltpu.CompilerParams(
            dimension_semantics=("parallel",),
            vmem_limit_bytes=_VMEM_LIMIT),
    )(*inputs)


def bn_scale_bias(s1, s2, count, gamma_p, beta_p):
    """Training-mode BN (biased variance) folded into one per-channel FMA."""
    mean = s1 / count
    var = jnp.maximum(s2 / count - mean * mean, 0.0)
    scale = gamma_p.astype(jnp.float32) * jax.lax.rsqrt(var + BN_EPS)
    bias = beta_p.astype(jnp.float32) - mean * scale
    return scale.reshape(1, -1), bias.reshape(1, -1)


# ---------------------------------------------------------------------------
# Bottleneck forward
# ---------------------------------------------------------------------------
def bottleneck_forward(x_nchw, params, in_planes, res_planes, p_stride):
    out_planes = EXPANSION * res_planes
    n, c, h, w = x_nchw.shape
    assert c == in_planes
    s = p_stride
    ho = (h + 2 - 3) // s + 1
    wo = (w + 2 - 3) // s + 1
    cp_in, cp_mid, cp_out = _cpad(in_planes), _cpad(res_planes), _cpad(out_planes)

    # NCHW -> NHWC, lane-pad channels, bf16 operands for the MXU.
    x_nhwc = jnp.transpose(x_nchw, (0, 2, 3, 1)).astype(jnp.float32)
    x_nhwc = jnp.pad(x_nhwc, ((0, 0), (0, 0), (0, 0), (0, cp_in - in_planes)))
    x_bf = x_nhwc.astype(jnp.bfloat16)

    # ----- conv1 (1x1) + BN1 + ReLU -----
    r1 = n * h * w
    tr1, r1p = _row_tiling(r1)
    x1 = x_bf.reshape(r1, cp_in)
    if r1p > r1:
        x1 = jnp.pad(x1, ((0, r1p - r1), (0, 0)))
    w1 = _pad2(params["w1"], cp_in, cp_mid).astype(jnp.bfloat16)
    y1, a_s, a_q = conv1x1_raw(x1, w1, tr1)
    sc1, bs1 = bn_scale_bias(a_s, a_q, r1, _pad1(params["g1"], cp_mid),
                             _pad1(params["b1"], cp_mid))
    a1 = bn_act(y1, sc1, bs1, relu=True, out_dtype=jnp.bfloat16,
                true_rows=r1 if r1p > r1 else None)
    a1 = a1[:r1].reshape(n, h, w, cp_mid)

    # ----- conv2 (3x3, stride, pad=1) + BN2 + ReLU -----
    y2, b_s, b_q = conv3x3_raw(a1, params["w2"], s)
    r2 = n * ho * wo
    sc2, bs2 = bn_scale_bias(b_s, b_q, r2, _pad1(params["g2"], cp_mid),
                             _pad1(params["b2"], cp_mid))
    tr2, r2p = _row_tiling(r2)
    if r2p > r2:
        y2 = jnp.pad(y2, ((0, r2p - r2), (0, 0)))
    a2 = bn_act(y2, sc2, bs2, relu=True, out_dtype=jnp.bfloat16,
                true_rows=r2 if r2p > r2 else None)

    # ----- conv3 (1x1) + BN3 -----
    w3 = _pad2(params["w3"], cp_mid, cp_out).astype(jnp.bfloat16)
    y3, c_s, c_q = conv1x1_raw(a2, w3, tr2)
    sc3, bs3 = bn_scale_bias(c_s, c_q, r2, _pad1(params["g3"], cp_out),
                             _pad1(params["b3"], cp_out))

    # ----- shortcut -----
    if s != 1 or in_planes != out_planes:
        xs = x_bf[:, ::s, ::s, :].reshape(r2, cp_in)
        if r2p > r2:
            xs = jnp.pad(xs, ((0, r2p - r2), (0, 0)))
        ws = _pad2(params["ws"], cp_in, cp_out).astype(jnp.bfloat16)
        ysc, d_s, d_q = conv1x1_raw(xs, ws, tr2)
        scs, bss = bn_scale_bias(d_s, d_q, r2, _pad1(params["gs"], cp_out),
                                 _pad1(params["bs"], cp_out))
        add = (ysc, scs, bss)
    else:
        add = (x1, jnp.ones((1, cp_out), jnp.float32),
               jnp.zeros((1, cp_out), jnp.float32))

    # ----- BN3 affine + residual add + final ReLU, fused in one kernel -----
    out = bn_act(y3, sc3, bs3, relu=True, out_dtype=jnp.float32, add=add)
    out = out[:r2].reshape(n, ho, wo, cp_out)[..., :out_planes]
    return jnp.transpose(out, (0, 3, 1, 2))


# ---------------------------------------------------------------------------
# Deterministic synthetic parameters + pure-JAX reference for validation
# ---------------------------------------------------------------------------
def init_params(key, in_planes, res_planes, p_stride):
    out_planes = EXPANSION * res_planes
    ks = jax.random.split(key, 12)
    params = {
        "w1": 0.1 * jax.random.normal(ks[0], (in_planes, res_planes), jnp.float32),
        "g1": 1.0 + 0.1 * jax.random.normal(ks[1], (res_planes,), jnp.float32),
        "b1": 0.1 * jax.random.normal(ks[2], (res_planes,), jnp.float32),
        "w2": 0.1 * jax.random.normal(ks[3], (3, 3, res_planes, res_planes), jnp.float32),
        "g2": 1.0 + 0.1 * jax.random.normal(ks[4], (res_planes,), jnp.float32),
        "b2": 0.1 * jax.random.normal(ks[5], (res_planes,), jnp.float32),
        "w3": 0.1 * jax.random.normal(ks[6], (res_planes, out_planes), jnp.float32),
        "g3": 1.0 + 0.1 * jax.random.normal(ks[7], (out_planes,), jnp.float32),
        "b3": 0.1 * jax.random.normal(ks[8], (out_planes,), jnp.float32),
    }
    if p_stride != 1 or in_planes != out_planes:
        params["ws"] = 0.1 * jax.random.normal(ks[9], (in_planes, out_planes), jnp.float32)
        params["gs"] = 1.0 + 0.1 * jax.random.normal(ks[10], (out_planes,), jnp.float32)
        params["bs"] = 0.1 * jax.random.normal(ks[11], (out_planes,), jnp.float32)
    return params


def ref_bottleneck(x, params, in_planes, res_planes, p_stride):
    out_planes = EXPANSION * res_planes

    def bn(y, g, b):
        mean = jnp.mean(y, axis=(0, 2, 3), keepdims=True)
        var = jnp.mean((y - mean) ** 2, axis=(0, 2, 3), keepdims=True)
        yhat = (y - mean) / jnp.sqrt(var + BN_EPS)
        return yhat * g.reshape(1, -1, 1, 1) + b.reshape(1, -1, 1, 1)

    def conv(x, w_hwio, stride, pad):
        return jax.lax.conv_general_dilated(
            x, w_hwio, (stride, stride), [(pad, pad), (pad, pad)],
            dimension_numbers=("NCHW", "HWIO", "NCHW"),
            precision=jax.lax.Precision.HIGHEST)

    w1 = params["w1"].reshape(1, 1, in_planes, res_planes)
    w3 = params["w3"].reshape(1, 1, res_planes, out_planes)
    y = jax.nn.relu(bn(conv(x, w1, 1, 0), params["g1"], params["b1"]))
    y = jax.nn.relu(bn(conv(y, params["w2"], p_stride, 1), params["g2"], params["b2"]))
    y = bn(conv(y, w3, 1, 0), params["g3"], params["b3"])
    if p_stride != 1 or in_planes != out_planes:
        ws = params["ws"].reshape(1, 1, in_planes, out_planes)
        sc = bn(conv(x, ws, p_stride, 0), params["gs"], params["bs"])
    else:
        sc = x
    return jax.nn.relu(y + sc)


if __name__ == "__main__":
    fwd = jax.jit(bottleneck_forward, static_argnums=(2, 3, 4))

    def run_case(in_planes, res_planes, p_stride, N=2, H=16, W=16, seed=0):
        key = jax.random.PRNGKey(seed)
        kx, kp = jax.random.split(key)
        x = jax.random.normal(kx, (N, in_planes, H, W), jnp.float32)
        params = init_params(kp, in_planes, res_planes, p_stride)

        out = jax.block_until_ready(fwd(x, params, in_planes, res_planes, p_stride))
        ref = jax.block_until_ready(
            ref_bottleneck(x, params, in_planes, res_planes, p_stride))

        ho = (H + 2 - 3) // p_stride + 1
        assert out.shape == (N, EXPANSION * res_planes, ho, ho), out.shape
        assert bool(jnp.all(jnp.isfinite(out)))
        max_err = float(jnp.max(jnp.abs(out - ref)))
        mean_err = float(jnp.mean(jnp.abs(out - ref)))
        # bf16 MXU operands + bf16 intermediates vs f32 HIGHEST-precision reference:
        # tolerance is loosened accordingly (real bugs produce O(1) errors).
        assert max_err < 2.5e-1 and mean_err < 3e-2, (max_err, mean_err)

    run_case(4, 4, 2)    # strided block, projection shortcut, space-to-depth conv2 path
    run_case(16, 4, 1)   # stride-1 block, identity shortcut, direct 3x3 conv2 path
    print("KERNEL_OK")
</pallas_src>

<mosaic_0001>
module attributes {stable_mosaic.version = 11 : i64} {
  func.func @_matmul_stats_kernel(%arg0: i32, %arg1: i32, %arg2: i32, %arg3: memref<512x128xbf16, #tpu.memory_space<vmem>>, %arg4: memref<128x128xbf16, #tpu.memory_space<vmem>>, %arg5: memref<512x128xbf16, #tpu.memory_space<vmem>>, %arg6: memref<8x128xf32, #tpu.memory_space<vmem>>, %arg7: memref<512x128xf32, #tpu.memory_space<vmem>>) attributes {dimension_semantics = [#tpu.dimension_semantics<parallel>, #tpu.dimension_semantics<parallel>, #tpu.dimension_semantics<arbitrary>], iteration_bounds = array<i64: 1, 1, 1>, scalar_prefetch = 0 : i64, scratch_operands = 1 : i64, tpu.core_type = #tpu.core_type<tc>, window_params = [{transform_indices = @transform_0, window_bounds = array<i64: 512, 128>}, {transform_indices = @transform_1, window_bounds = array<i64: 128, 128>}, {transform_indices = @transform_2, window_bounds = array<i64: 512, 128>}, {transform_indices = @transform_3, window_bounds = array<i64: 8, 128>}]} {
    %c0_i32 = arith.constant 0 : i32
    %0 = arith.cmpi eq, %arg2, %c0_i32 : i32
    %1 = arith.extui %0 : i1 to i32
    %c0_i32_0 = arith.constant 0 : i32
    %2 = arith.cmpi ne, %1, %c0_i32_0 : i32
    scf.if %2 {
      %cst_10 = arith.constant 0.000000e+00 : f32
      %12 = vector.broadcast %cst_10 : f32 to vector<512x128xf32>
      %c0_11 = arith.constant 0 : index
      %c0_12 = arith.constant 0 : index
      %13 = vector.load %arg7[%c0_11, %c0_12] : memref<512x128xf32, #tpu.memory_space<vmem>>, vector<512x128xf32>
      tpu.vector_store %arg7[%c0_11, %c0_12], %12 {strides = array<i32>} : memref<512x128xf32, #tpu.memory_space<vmem>>, vector<512x128xf32>,
    } else {
    }
    %c0 = arith.constant 0 : index
    %c0_1 = arith.constant 0 : index
    %3 = vector.load %arg7[%c0, %c0_1] : memref<512x128xf32, #tpu.memory_space<vmem>>, vector<512x128xf32>
    %c0_2 = arith.constant 0 : index
    %c0_3 = arith.constant 0 : index
    %4 = vector.load %arg3[%c0_2, %c0_3] : memref<512x128xbf16, #tpu.memory_space<vmem>>, vector<512x128xbf16>
    %c0_4 = arith.constant 0 : index
    %c0_5 = arith.constant 0 : index
    %5 = vector.load %arg4[%c0_4, %c0_5] : memref<128x128xbf16, #tpu.memory_space<vmem>>, vector<128x128xbf16>
    %cst = arith.constant dense<0.000000e+00> : vector<512x128xf32>
    %6 = tpu.matmul %4, %5, %cst {dimension_numbers = #tpu.dot_dimension_numbers<[1], [0], [0], [1], [0, 0, 1, 1], [], []>} : vector<512x128xbf16>, vector<128x128xbf16>, vector<512x128xf32> -> vector<512x128xf32>
    %7 = arith.addf %3, %6 : vector<512x128xf32>
    %c0_6 = arith.constant 0 : index
    %c0_7 = arith.constant 0 : index
    %8 = vector.load %arg7[%c0_6, %c0_7] : memref<512x128xf32, #tpu.memory_space<vmem>>, vector<512x128xf32>
    tpu.vector_store %arg7[%c0_6, %c0_7], %7 {strides = array<i32>} : memref<512x128xf32, #tpu.memory_space<vmem>>, vector<512x128xf32>,
    %c0_i32_8 = arith.constant 0 : i32
    %9 = arith.cmpi eq, %arg2, %c0_i32_8 : i32
    %10 = arith.extui %9 : i1 to i32
    %c0_i32_9 = arith.constant 0 : i32
    %11 = arith.cmpi ne, %10, %c0_i32_9 : i32
    scf.if %11 {
      %c0_10 = arith.constant 0 : index
      %c0_11 = arith.constant 0 : index
      %12 = vector.load %arg7[%c0_10, %c0_11] : memref<512x128xf32, #tpu.memory_space<vmem>>, vector<512x128xf32>
      %13 = arith.truncf %12 : vector<512x128xf32> to vector<512x128xbf16>
      %c0_12 = arith.constant 0 : index
      %c0_13 = arith.constant 0 : index
      %14 = vector.load %arg5[%c0_12, %c0_13] : memref<512x128xbf16, #tpu.memory_space<vmem>>, vector<512x128xbf16>
      tpu.vector_store %arg5[%c0_12, %c0_13], %13 {strides = array<i32>} : memref<512x128xbf16, #tpu.memory_space<vmem>>, vector<512x128xbf16>,
      %cst_14 = arith.constant dense<0.000000e+00> : vector<128xf32>
      %15 = vector.multi_reduction <add>, %12, %cst_14 [0] : vector<512x128xf32> to vector<128xf32>
      %16 = vector.shape_cast %15 : vector<128xf32> to vector<1x128xf32>
      %17 = arith.mulf %12, %12 : vector<512x128xf32>
      %cst_15 = arith.constant dense<0.000000e+00> : vector<128xf32>
      %18 = vector.multi_reduction <add>, %17, %cst_15 [0] : vector<512x128xf32> to vector<128xf32>
      %19 = vector.shape_cast %18 : vector<128xf32> to vector<1x128xf32>
      %cst_16 = arith.constant 0.000000e+00 : f32
      %20 = vector.broadcast %cst_16 : f32 to vector<6x128xf32>
      %21 = tpu.concatenate %16, %19, %20 in 0 : vector<1x128xf32>, vector<1x128xf32>, vector<6x128xf32> -> vector<8x128xf32>
      %c0_17 = arith.constant 0 : index
      %c0_18 = arith.constant 0 : index
      %22 = vector.load %arg6[%c0_17, %c0_18] : memref<8x128xf32, #tpu.memory_space<vmem>>, vector<8x128xf32>
      tpu.vector_store %arg6[%c0_17, %c0_18], %21 {strides = array<i32>} : memref<8x128xf32, #tpu.memory_space<vmem>>, vector<8x128xf32>,
    } else {
    }
    return
  }
  func.func @transform_0(%arg0: i32, %arg1: i32, %arg2: i32) -> (i32, i32) {
    %c0_i32 = arith.constant 0 : i32
    return %arg0, %arg2 : i32, i32
  }
  func.func @transform_1(%arg0: i32, %arg1: i32, %arg2: i32) -> (i32, i32) {
    %c0_i32 = arith.constant 0 : i32
    return %arg2, %arg1 : i32, i32
  }
  func.func @transform_2(%arg0: i32, %arg1: i32, %arg2: i32) -> (i32, i32) {
    %c0_i32 = arith.constant 0 : i32
    return %arg0, %arg1 : i32, i32
  }
  func.func @transform_3(%arg0: i32, %arg1: i32, %arg2: i32) -> (i32, i32) {
    %c0_i32 = arith.constant 0 : i32
    return %arg0, %arg1 : i32, i32
  }
}

module attributes {stable_mosaic.version = 11 : i64} {
  func.func @_bn_act_kernel(%arg0: i32, %arg1: memref<512x128xbf16, #tpu.memory_space<vmem>>, %arg2: memref<1x128xf32, #tpu.memory_space<vmem>>, %arg3: memref<1x128xf32, #tpu.memory_space<vmem>>, %arg4: memref<512x128xbf16, #tpu.memory_space<vmem>>) attributes {dimension_semantics = [#tpu.dimension_semantics<parallel>], iteration_bounds = array<i64: 1>, scalar_prefetch = 0 : i64, scratch_operands = 0 : i64, tpu.core_type = #tpu.core_type<tc>, window_params = [{transform_indices = @transform_0, window_bounds = array<i64: 512, 128>}, {pipeline_mode = #tpu.pipeline_mode<synchronous>, transform_indices = @transform_1, window_bounds = array<i64: 1, 128>}, {pipeline_mode = #tpu.pipeline_mode<synchronous>, transform_indices = @transform_2, window_bounds = array<i64: 1, 128>}, {transform_indices = @transform_3, window_bounds = array<i64: 512, 128>}]} {
    %c0 = arith.constant 0 : index
    %c0_0 = arith.constant 0 : index
    %0 = vector.load %arg1[%c0, %c0_0] : memref<512x128xbf16, #tpu.memory_space<vmem>>, vector<512x128xbf16>
    %1 = arith.extf %0 : vector<512x128xbf16> to vector<512x128xf32>
    %c0_1 = arith.constant 0 : index
    %c0_2 = arith.constant 0 : index
    %2 = vector.load %arg2[%c0_1, %c0_2] : memref<1x128xf32, #tpu.memory_space<vmem>>, vector<1x128xf32>
    %3 = vector.broadcast %2 : vector<1x128xf32> to vector<512x128xf32>
    %4 = arith.mulf %1, %3 : vector<512x128xf32>
    %c0_3 = arith.constant 0 : index
    %c0_4 = arith.constant 0 : index
    %5 = vector.load %arg3[%c0_3, %c0_4] : memref<1x128xf32, #tpu.memory_space<vmem>>, vector<1x128xf32>
    %6 = vector.broadcast %5 : vector<1x128xf32> to vector<512x128xf32>
    %7 = arith.addf %4, %6 : vector<512x128xf32>
    %cst = arith.constant 0.000000e+00 : f32
    %8 = vector.broadcast %cst : f32 to vector<512x128xf32>
    %9 = arith.maximumf %7, %8 : vector<512x128xf32>
    %10 = arith.truncf %9 : vector<512x128xf32> to vector<512x128xbf16>
    %c0_5 = arith.constant 0 : index
    %c0_6 = arith.constant 0 : index
    %11 = vector.load %arg4[%c0_5, %c0_6] : memref<512x128xbf16, #tpu.memory_space<vmem>>, vector<512x128xbf16>
    tpu.vector_store %arg4[%c0_5, %c0_6], %10 {strides = array<i32>} : memref<512x128xbf16, #tpu.memory_space<vmem>>, vector<512x128xbf16>,
    return
  }
  func.func @transform_0(%arg0: i32) -> (i32, i32) {
    %c0_i32 = arith.constant 0 : i32
    %c0_i32_0 = arith.constant 0 : i32
    return %arg0, %c0_i32 : i32, i32
  }
  func.func @transform_1(%arg0: i32) -> (i32, i32) {
    %c0_i32 = arith.constant 0 : i32
    %c0_i32_0 = arith.constant 0 : i32
    %c0_i32_1 = arith.constant 0 : i32
    return %c0_i32, %c0_i32_0 : i32, i32
  }
  func.func @transform_2(%arg0: i32) -> (i32, i32) {
    %c0_i32 = arith.constant 0 : i32
    %c0_i32_0 = arith.constant 0 : i32
    %c0_i32_1 = arith.constant 0 : i32
    return %c0_i32, %c0_i32_0 : i32, i32
  }
  func.func @transform_3(%arg0: i32) -> (i32, i32) {
    %c0_i32 = arith.constant 0 : i32
    %c0_i32_0 = arith.constant 0 : i32
    return %arg0, %c0_i32 : i32, i32
  }
}

module attributes {stable_mosaic.version = 11 : i64} {
  func.func @_conv_kxk_stats_kernel(%arg0: i32, %arg1: memref<1x9x9x512xbf16, #tpu.memory_space<vmem>>, %arg2: memref<2x2x512x128xbf16, #tpu.memory_space<vmem>>, %arg3: memref<1x64x128xbf16, #tpu.memory_space<vmem>>, %arg4: memref<1x8x128xf32, #tpu.memory_space<vmem>>) attributes {dimension_semantics = [#tpu.dimension_semantics<parallel>], iteration_bounds = array<i64: 2>, scalar_prefetch = 0 : i64, scratch_operands = 0 : i64, tpu.core_type = #tpu.core_type<tc>, window_params = [{transform_indices = @transform_0, window_bounds = array<i64: 1, 9, 9, 512>}, {pipeline_mode = #tpu.pipeline_mode<synchronous>, transform_indices = @transform_1, window_bounds = array<i64: 2, 2, 512, 128>}, {transform_indices = @transform_2, window_bounds = array<i64: 1, 64, 128>}, {transform_indices = @transform_3, window_bounds = array<i64: 1, 8, 128>}]} {
    %cst = arith.constant 0.000000e+00 : f32
    %0 = vector.broadcast %cst : f32 to vector<64x128xf32>
    %c0 = arith.constant 0 : index
    %c0_0 = arith.constant 0 : index
    %c0_1 = arith.constant 0 : index
    %c0_2 = arith.constant 0 : index
    %1 = vector.load %arg1[%c0, %c0_0, %c0_1, %c0_2] : memref<1x9x9x512xbf16, #tpu.memory_space<vmem>>, vector<1x8x8x512xbf16>
    %2 = vector.shape_cast %1 : vector<1x8x8x512xbf16> to vector<8x8x512xbf16>
    %3 = vector.shape_cast %2 : vector<8x8x512xbf16> to vector<64x512xbf16>
    %c0_3 = arith.constant 0 : index
    %c0_4 = arith.constant 0 : index
    %c0_5 = arith.constant 0 : index
    %c0_6 = arith.constant 0 : index
    %4 = vector.load %arg2[%c0_3, %c0_4, %c0_5, %c0_6] : memref<2x2x512x128xbf16, #tpu.memory_space<vmem>>, vector<1x1x512x128xbf16>
    %5 = vector.shape_cast %4 : vector<1x1x512x128xbf16> to vector<512x128xbf16>
    %cst_7 = arith.constant dense<0.000000e+00> : vector<64x128xf32>
    %6 = tpu.matmul %3, %5, %cst_7 {dimension_numbers = #tpu.dot_dimension_numbers<[1], [0], [0], [1], [0, 0, 1, 1], [], []>} : vector<64x512xbf16>, vector<512x128xbf16>, vector<64x128xf32> -> vector<64x128xf32>
    %7 = arith.addf %0, %6 : vector<64x128xf32>
    %c0_8 = arith.constant 0 : index
    %c0_9 = arith.constant 0 : index
    %c1 = arith.constant 1 : index
    %c0_10 = arith.constant 0 : index
    %8 = vector.load %arg1[%c0_8, %c0_9, %c1, %c0_10] : memref<1x9x9x512xbf16, #tpu.memory_space<vmem>>, vector<1x8x8x512xbf16>
    %9 = vector.shape_cast %8 : vector<1x8x8x512xbf16> to vector<8x8x512xbf16>
    %10 = vector.shape_cast %9 : vector<8x8x512xbf16> to vector<64x512xbf16>
    %c0_11 = arith.constant 0 : index
    %c1_12 = arith.constant 1 : index
    %c0_13 = arith.constant 0 : index
    %c0_14 = arith.constant 0 : index
    %11 = vector.load %arg2[%c0_11, %c1_12, %c0_13, %c0_14] : memref<2x2x512x128xbf16, #tpu.memory_space<vmem>>, vector<1x1x512x128xbf16>
    %12 = vector.shape_cast %11 : vector<1x1x512x128xbf16> to vector<512x128xbf16>
    %cst_15 = arith.constant dense<0.000000e+00> : vector<64x128xf32>
    %13 = tpu.matmul %10, %12, %cst_15 {dimension_numbers = #tpu.dot_dimension_numbers<[1], [0], [0], [1], [0, 0, 1, 1], [], []>} : vector<64x512xbf16>, vector<512x128xbf16>, vector<64x128xf32> -> vector<64x128xf32>
    %14 = arith.addf %7, %13 : vector<64x128xf32>
    %c0_16 = arith.constant 0 : index
    %c1_17 = arith.constant 1 : index
    %c0_18 = arith.constant 0 : index
    %c0_19 = arith.constant 0 : index
    %15 = vector.load %arg1[%c0_16, %c1_17, %c0_18, %c0_19] : memref<1x9x9x512xbf16, #tpu.memory_space<vmem>>, vector<1x8x8x512xbf16>
    %16 = vector.shape_cast %15 : vector<1x8x8x512xbf16> to vector<8x8x512xbf16>
    %17 = vector.shape_cast %16 : vector<8x8x512xbf16> to vector<64x512xbf16>
    %c1_20 = arith.constant 1 : index
    %c0_21 = arith.constant 0 : index
    %c0_22 = arith.constant 0 : index
    %c0_23 = arith.constant 0 : index
    %18 = vector.load %arg2[%c1_20, %c0_21, %c0_22, %c0_23] : memref<2x2x512x128xbf16, #tpu.memory_space<vmem>>, vector<1x1x512x128xbf16>
    %19 = vector.shape_cast %18 : vector<1x1x512x128xbf16> to vector<512x128xbf16>
    %cst_24 = arith.constant dense<0.000000e+00> : vector<64x128xf32>
    %20 = tpu.matmul %17, %19, %cst_24 {dimension_numbers = #tpu.dot_dimension_numbers<[1], [0], [0], [1], [0, 0, 1, 1], [], []>} : vector<64x512xbf16>, vector<512x128xbf16>, vector<64x128xf32> -> vector<64x128xf32>
    %21 = arith.addf %14, %20 : vector<64x128xf32>
    %c0_25 = arith.constant 0 : index
    %c1_26 = arith.constant 1 : index
    %c1_27 = arith.constant 1 : index
    %c0_28 = arith.constant 0 : index
    %22 = vector.load %arg1[%c0_25, %c1_26, %c1_27, %c0_28] : memref<1x9x9x512xbf16, #tpu.memory_space<vmem>>, vector<1x8x8x512xbf16>
    %23 = vector.shape_cast %22 : vector<1x8x8x512xbf16> to vector<8x8x512xbf16>
    %24 = vector.shape_cast %23 : vector<8x8x512xbf16> to vector<64x512xbf16>
    %c1_29 = arith.constant 1 : index
    %c1_30 = arith.constant 1 : index
    %c0_31 = arith.constant 0 : index
    %c0_32 = arith.constant 0 : index
    %25 = vector.load %arg2[%c1_29, %c1_30, %c0_31, %c0_32] : memref<2x2x512x128xbf16, #tpu.memory_space<vmem>>, vector<1x1x512x128xbf16>
    %26 = vector.shape_cast %25 : vector<1x1x512x128xbf16> to vector<512x128xbf16>
    %cst_33 = arith.constant dense<0.000000e+00> : vector<64x128xf32>
    %27 = tpu.matmul %24, %26, %cst_33 {dimension_numbers = #tpu.dot_dimension_numbers<[1], [0], [0], [1], [0, 0, 1, 1], [], []>} : vector<64x512xbf16>, vector<512x128xbf16>, vector<64x128xf32> -> vector<64x128xf32>
    %28 = arith.addf %21, %27 : vector<64x128xf32>
    %29 = arith.truncf %28 : vector<64x128xf32> to vector<64x128xbf16>
    %c0_34 = arith.constant 0 : index
    %c0_35 = arith.constant 0 : index
    %c0_36 = arith.constant 0 : index
    %30 = vector.load %arg3[%c0_34, %c0_35, %c0_36] : memref<1x64x128xbf16, #tpu.memory_space<vmem>>, vector<1x64x128xbf16>
    %31 = vector.shape_cast %30 : vector<1x64x128xbf16> to vector<64x128xbf16>
    %32 = vector.shape_cast %29 : vector<64x128xbf16> to vector<1x64x128xbf16>
    tpu.vector_store %arg3[%c0_34, %c0_35, %c0_36], %32 {strides = array<i32>} : memref<1x64x128xbf16, #tpu.memory_space<vmem>>, vector<1x64x128xbf16>,
    %cst_37 = arith.constant dense<0.000000e+00> : vector<128xf32>
    %33 = vector.multi_reduction <add>, %28, %cst_37 [0] : vector<64x128xf32> to vector<128xf32>
    %34 = vector.shape_cast %33 : vector<128xf32> to vector<1x128xf32>
    %35 = arith.mulf %28, %28 : vector<64x128xf32>
    %cst_38 = arith.constant dense<0.000000e+00> : vector<128xf32>
    %36 = vector.multi_reduction <add>, %35, %cst_38 [0] : vector<64x128xf32> to vector<128xf32>
    %37 = vector.shape_cast %36 : vector<128xf32> to vector<1x128xf32>
    %cst_39 = arith.constant 0.000000e+00 : f32
    %38 = vector.broadcast %cst_39 : f32 to vector<6x128xf32>
    %39 = tpu.concatenate %34, %37, %38 in 0 : vector<1x128xf32>, vector<1x128xf32>, vector<6x128xf32> -> vector<8x128xf32>
    %c0_40 = arith.constant 0 : index
    %c0_41 = arith.constant 0 : index
    %c0_42 = arith.constant 0 : index
    %40 = vector.load %arg4[%c0_40, %c0_41, %c0_42] : memref<1x8x128xf32, #tpu.memory_space<vmem>>, vector<1x8x128xf32>
    %41 = vector.shape_cast %40 : vector<1x8x128xf32> to vector<8x128xf32>
    %42 = vector.shape_cast %39 : vector<8x128xf32> to vector<1x8x128xf32>
    tpu.vector_store %arg4[%c0_40, %c0_41, %c0_42], %42 {strides = array<i32>} : memref<1x8x128xf32, #tpu.memory_space<vmem>>, vector<1x8x128xf32>,
    return
  }
  func.func @transform_0(%arg0: i32) -> (i32, i32, i32, i32) {
    %c0_i32 = arith.constant 0 : i32
    %c0_i32_0 = arith.constant 0 : i32
    %c0_i32_1 = arith.constant 0 : i32
    %c0_i32_2 = arith.constant 0 : i32
    return %arg0, %c0_i32, %c0_i32_0, %c0_i32_1 : i32, i32, i32, i32
  }
  func.func @transform_1(%arg0: i32) -> (i32, i32, i32, i32) {
    %c0_i32 = arith.constant 0 : i32
    %c0_i32_0 = arith.constant 0 : i32
    %c0_i32_1 = arith.constant 0 : i32
    %c0_i32_2 = arith.constant 0 : i32
    %c0_i32_3 = arith.constant 0 : i32
    return %c0_i32, %c0_i32_0, %c0_i32_1, %c0_i32_2 : i32, i32, i32, i32
  }
  func.func @transform_2(%arg0: i32) -> (i32, i32, i32) {
    %c0_i32 = arith.constant 0 : i32
    %c0_i32_0 = arith.constant 0 : i32
    %c0_i32_1 = arith.constant 0 : i32
    return %arg0, %c0_i32, %c0_i32_0 : i32, i32, i32
  }
  func.func @transform_3(%arg0: i32) -> (i32, i32, i32) {
    %c0_i32 = arith.constant 0 : i32
    %c0_i32_0 = arith.constant 0 : i32
    %c0_i32_1 = arith.constant 0 : i32
    return %arg0, %c0_i32, %c0_i32_0 : i32, i32, i32
  }
}

module attributes {stable_mosaic.version = 11 : i64} {
  func.func @_bn_act_kernel(%arg0: i32, %arg1: memref<128x128xbf16, #tpu.memory_space<vmem>>, %arg2: memref<1x128xf32, #tpu.memory_space<vmem>>, %arg3: memref<1x128xf32, #tpu.memory_space<vmem>>, %arg4: memref<128x128xbf16, #tpu.memory_space<vmem>>) attributes {dimension_semantics = [#tpu.dimension_semantics<parallel>], iteration_bounds = array<i64: 1>, scalar_prefetch = 0 : i64, scratch_operands = 0 : i64, tpu.core_type = #tpu.core_type<tc>, window_params = [{transform_indices = @transform_0, window_bounds = array<i64: 128, 128>}, {pipeline_mode = #tpu.pipeline_mode<synchronous>, transform_indices = @transform_1, window_bounds = array<i64: 1, 128>}, {pipeline_mode = #tpu.pipeline_mode<synchronous>, transform_indices = @transform_2, window_bounds = array<i64: 1, 128>}, {transform_indices = @transform_3, window_bounds = array<i64: 128, 128>}]} {
    %c0 = arith.constant 0 : index
    %c0_0 = arith.constant 0 : index
    %0 = vector.load %arg1[%c0, %c0_0] : memref<128x128xbf16, #tpu.memory_space<vmem>>, vector<128x128xbf16>
    %1 = arith.extf %0 : vector<128x128xbf16> to vector<128x128xf32>
    %c0_1 = arith.constant 0 : index
    %c0_2 = arith.constant 0 : index
    %2 = vector.load %arg2[%c0_1, %c0_2] : memref<1x128xf32, #tpu.memory_space<vmem>>, vector<1x128xf32>
    %3 = vector.broadcast %2 : vector<1x128xf32> to vector<128x128xf32>
    %4 = arith.mulf %1, %3 : vector<128x128xf32>
    %c0_3 = arith.constant 0 : index
    %c0_4 = arith.constant 0 : index
    %5 = vector.load %arg3[%c0_3, %c0_4] : memref<1x128xf32, #tpu.memory_space<vmem>>, vector<1x128xf32>
    %6 = vector.broadcast %5 : vector<1x128xf32> to vector<128x128xf32>
    %7 = arith.addf %4, %6 : vector<128x128xf32>
    %cst = arith.constant 0.000000e+00 : f32
    %8 = vector.broadcast %cst : f32 to vector<128x128xf32>
    %9 = arith.maximumf %7, %8 : vector<128x128xf32>
    %10 = arith.truncf %9 : vector<128x128xf32> to vector<128x128xbf16>
    %c0_5 = arith.constant 0 : index
    %c0_6 = arith.constant 0 : index
    %11 = vector.load %arg4[%c0_5, %c0_6] : memref<128x128xbf16, #tpu.memory_space<vmem>>, vector<128x128xbf16>
    tpu.vector_store %arg4[%c0_5, %c0_6], %10 {strides = array<i32>} : memref<128x128xbf16, #tpu.memory_space<vmem>>, vector<128x128xbf16>,
    return
  }
  func.func @transform_0(%arg0: i32) -> (i32, i32) {
    %c0_i32 = arith.constant 0 : i32
    %c0_i32_0 = arith.constant 0 : i32
    return %arg0, %c0_i32 : i32, i32
  }
  func.func @transform_1(%arg0: i32) -> (i32, i32) {
    %c0_i32 = arith.constant 0 : i32
    %c0_i32_0 = arith.constant 0 : i32
    %c0_i32_1 = arith.constant 0 : i32
    return %c0_i32, %c0_i32_0 : i32, i32
  }
  func.func @transform_2(%arg0: i32) -> (i32, i32) {
    %c0_i32 = arith.constant 0 : i32
    %c0_i32_0 = arith.constant 0 : i32
    %c0_i32_1 = arith.constant 0 : i32
    return %c0_i32, %c0_i32_0 : i32, i32
  }
  func.func @transform_3(%arg0: i32) -> (i32, i32) {
    %c0_i32 = arith.constant 0 : i32
    %c0_i32_0 = arith.constant 0 : i32
    return %arg0, %c0_i32 : i32, i32
  }
}

module attributes {stable_mosaic.version = 11 : i64} {
  func.func @_matmul_stats_kernel(%arg0: i32, %arg1: i32, %arg2: i32, %arg3: memref<128x128xbf16, #tpu.memory_space<vmem>>, %arg4: memref<128x128xbf16, #tpu.memory_space<vmem>>, %arg5: memref<128x128xbf16, #tpu.memory_space<vmem>>, %arg6: memref<8x128xf32, #tpu.memory_space<vmem>>, %arg7: memref<128x128xf32, #tpu.memory_space<vmem>>) attributes {dimension_semantics = [#tpu.dimension_semantics<parallel>, #tpu.dimension_semantics<parallel>, #tpu.dimension_semantics<arbitrary>], iteration_bounds = array<i64: 1, 1, 1>, scalar_prefetch = 0 : i64, scratch_operands = 1 : i64, tpu.core_type = #tpu.core_type<tc>, window_params = [{transform_indices = @transform_0, window_bounds = array<i64: 128, 128>}, {transform_indices = @transform_1, window_bounds = array<i64: 128, 128>}, {transform_indices = @transform_2, window_bounds = array<i64: 128, 128>}, {transform_indices = @transform_3, window_bounds = array<i64: 8, 128>}]} {
    %c0_i32 = arith.constant 0 : i32
    %0 = arith.cmpi eq, %arg2, %c0_i32 : i32
    %1 = arith.extui %0 : i1 to i32
    %c0_i32_0 = arith.constant 0 : i32
    %2 = arith.cmpi ne, %1, %c0_i32_0 : i32
    scf.if %2 {
      %cst_10 = arith.constant 0.000000e+00 : f32
      %12 = vector.broadcast %cst_10 : f32 to vector<128x128xf32>
      %c0_11 = arith.constant 0 : index
      %c0_12 = arith.constant 0 : index
      %13 = vector.load %arg7[%c0_11, %c0_12] : memref<128x128xf32, #tpu.memory_space<vmem>>, vector<128x128xf32>
      tpu.vector_store %arg7[%c0_11, %c0_12], %12 {strides = array<i32>} : memref<128x128xf32, #tpu.memory_space<vmem>>, vector<128x128xf32>,
    } else {
    }
    %c0 = arith.constant 0 : index
    %c0_1 = arith.constant 0 : index
    %3 = vector.load %arg7[%c0, %c0_1] : memref<128x128xf32, #tpu.memory_space<vmem>>, vector<128x128xf32>
    %c0_2 = arith.constant 0 : index
    %c0_3 = arith.constant 0 : index
    %4 = vector.load %arg3[%c0_2, %c0_3] : memref<128x128xbf16, #tpu.memory_space<vmem>>, vector<128x128xbf16>
    %c0_4 = arith.constant 0 : index
    %c0_5 = arith.constant 0 : index
    %5 = vector.load %arg4[%c0_4, %c0_5] : memref<128x128xbf16, #tpu.memory_space<vmem>>, vector<128x128xbf16>
    %cst = arith.constant dense<0.000000e+00> : vector<128x128xf32>
    %6 = tpu.matmul %4, %5, %cst {dimension_numbers = #tpu.dot_dimension_numbers<[1], [0], [0], [1], [0, 0, 1, 1], [], []>} : vector<128x128xbf16>, vector<128x128xbf16>, vector<128x128xf32> -> vector<128x128xf32>
    %7 = arith.addf %3, %6 : vector<128x128xf32>
    %c0_6 = arith.constant 0 : index
    %c0_7 = arith.constant 0 : index
    %8 = vector.load %arg7[%c0_6, %c0_7] : memref<128x128xf32, #tpu.memory_space<vmem>>, vector<128x128xf32>
    tpu.vector_store %arg7[%c0_6, %c0_7], %7 {strides = array<i32>} : memref<128x128xf32, #tpu.memory_space<vmem>>, vector<128x128xf32>,
    %c0_i32_8 = arith.constant 0 : i32
    %9 = arith.cmpi eq, %arg2, %c0_i32_8 : i32
    %10 = arith.extui %9 : i1 to i32
    %c0_i32_9 = arith.constant 0 : i32
    %11 = arith.cmpi ne, %10, %c0_i32_9 : i32
    scf.if %11 {
      %c0_10 = arith.constant 0 : index
      %c0_11 = arith.constant 0 : index
      %12 = vector.load %arg7[%c0_10, %c0_11] : memref<128x128xf32, #tpu.memory_space<vmem>>, vector<128x128xf32>
      %13 = arith.truncf %12 : vector<128x128xf32> to vector<128x128xbf16>
      %c0_12 = arith.constant 0 : index
      %c0_13 = arith.constant 0 : index
      %14 = vector.load %arg5[%c0_12, %c0_13] : memref<128x128xbf16, #tpu.memory_space<vmem>>, vector<128x128xbf16>
      tpu.vector_store %arg5[%c0_12, %c0_13], %13 {strides = array<i32>} : memref<128x128xbf16, #tpu.memory_space<vmem>>, vector<128x128xbf16>,
      %cst_14 = arith.constant dense<0.000000e+00> : vector<128xf32>
      %15 = vector.multi_reduction <add>, %12, %cst_14 [0] : vector<128x128xf32> to vector<128xf32>
      %16 = vector.shape_cast %15 : vector<128xf32> to vector<1x128xf32>
      %17 = arith.mulf %12, %12 : vector<128x128xf32>
      %cst_15 = arith.constant dense<0.000000e+00> : vector<128xf32>
      %18 = vector.multi_reduction <add>, %17, %cst_15 [0] : vector<128x128xf32> to vector<128xf32>
      %19 = vector.shape_cast %18 : vector<128xf32> to vector<1x128xf32>
      %cst_16 = arith.constant 0.000000e+00 : f32
      %20 = vector.broadcast %cst_16 : f32 to vector<6x128xf32>
      %21 = tpu.concatenate %16, %19, %20 in 0 : vector<1x128xf32>, vector<1x128xf32>, vector<6x128xf32> -> vector<8x128xf32>
      %c0_17 = arith.constant 0 : index
      %c0_18 = arith.constant 0 : index
      %22 = vector.load %arg6[%c0_17, %c0_18] : memref<8x128xf32, #tpu.memory_space<vmem>>, vector<8x128xf32>
      tpu.vector_store %arg6[%c0_17, %c0_18], %21 {strides = array<i32>} : memref<8x128xf32, #tpu.memory_space<vmem>>, vector<8x128xf32>,
    } else {
    }
    return
  }
  func.func @transform_0(%arg0: i32, %arg1: i32, %arg2: i32) -> (i32, i32) {
    %c0_i32 = arith.constant 0 : i32
    return %arg0, %arg2 : i32, i32
  }
  func.func @transform_1(%arg0: i32, %arg1: i32, %arg2: i32) -> (i32, i32) {
    %c0_i32 = arith.constant 0 : i32
    return %arg2, %arg1 : i32, i32
  }
  func.func @transform_2(%arg0: i32, %arg1: i32, %arg2: i32) -> (i32, i32) {
    %c0_i32 = arith.constant 0 : i32
    return %arg0, %arg1 : i32, i32
  }
  func.func @transform_3(%arg0: i32, %arg1: i32, %arg2: i32) -> (i32, i32) {
    %c0_i32 = arith.constant 0 : i32
    return %arg0, %arg1 : i32, i32
  }
}

module attributes {stable_mosaic.version = 11 : i64} {
  func.func @_bn_act_kernel(%arg0: i32, %arg1: memref<128x128xbf16, #tpu.memory_space<vmem>>, %arg2: memref<1x128xf32, #tpu.memory_space<vmem>>, %arg3: memref<1x128xf32, #tpu.memory_space<vmem>>, %arg4: memref<128x128xbf16, #tpu.memory_space<vmem>>, %arg5: memref<1x128xf32, #tpu.memory_space<vmem>>, %arg6: memref<1x128xf32, #tpu.memory_space<vmem>>, %arg7: memref<128x128xf32, #tpu.memory_space<vmem>>) attributes {dimension_semantics = [#tpu.dimension_semantics<parallel>], iteration_bounds = array<i64: 1>, scalar_prefetch = 0 : i64, scratch_operands = 0 : i64, tpu.core_type = #tpu.core_type<tc>, window_params = [{transform_indices = @transform_0, window_bounds = array<i64: 128, 128>}, {pipeline_mode = #tpu.pipeline_mode<synchronous>, transform_indices = @transform_1, window_bounds = array<i64: 1, 128>}, {pipeline_mode = #tpu.pipeline_mode<synchronous>, transform_indices = @transform_2, window_bounds = array<i64: 1, 128>}, {transform_indices = @transform_3, window_bounds = array<i64: 128, 128>}, {pipeline_mode = #tpu.pipeline_mode<synchronous>, transform_indices = @transform_4, window_bounds = array<i64: 1, 128>}, {pipeline_mode = #tpu.pipeline_mode<synchronous>, transform_indices = @transform_5, window_bounds = array<i64: 1, 128>}, {transform_indices = @transform_6, window_bounds = array<i64: 128, 128>}]} {
    %c0 = arith.constant 0 : index
    %c0_0 = arith.constant 0 : index
    %0 = vector.load %arg1[%c0, %c0_0] : memref<128x128xbf16, #tpu.memory_space<vmem>>, vector<128x128xbf16>
    %1 = arith.extf %0 : vector<128x128xbf16> to vector<128x128xf32>
    %c0_1 = arith.constant 0 : index
    %c0_2 = arith.constant 0 : index
    %2 = vector.load %arg2[%c0_1, %c0_2] : memref<1x128xf32, #tpu.memory_space<vmem>>, vector<1x128xf32>
    %3 = vector.broadcast %2 : vector<1x128xf32> to vector<128x128xf32>
    %4 = arith.mulf %1, %3 : vector<128x128xf32>
    %c0_3 = arith.constant 0 : index
    %c0_4 = arith.constant 0 : index
    %5 = vector.load %arg3[%c0_3, %c0_4] : memref<1x128xf32, #tpu.memory_space<vmem>>, vector<1x128xf32>
    %6 = vector.broadcast %5 : vector<1x128xf32> to vector<128x128xf32>
    %7 = arith.addf %4, %6 : vector<128x128xf32>
    %c0_5 = arith.constant 0 : index
    %c0_6 = arith.constant 0 : index
    %8 = vector.load %arg4[%c0_5, %c0_6] : memref<128x128xbf16, #tpu.memory_space<vmem>>, vector<128x128xbf16>
    %9 = arith.extf %8 : vector<128x128xbf16> to vector<128x128xf32>
    %c0_7 = arith.constant 0 : index
    %c0_8 = arith.constant 0 : index
    %10 = vector.load %arg5[%c0_7, %c0_8] : memref<1x128xf32, #tpu.memory_space<vmem>>, vector<1x128xf32>
    %11 = vector.broadcast %10 : vector<1x128xf32> to vector<128x128xf32>
    %12 = arith.mulf %9, %11 : vector<128x128xf32>
    %13 = arith.addf %7, %12 : vector<128x128xf32>
    %c0_9 = arith.constant 0 : index
    %c0_10 = arith.constant 0 : index
    %14 = vector.load %arg6[%c0_9, %c0_10] : memref<1x128xf32, #tpu.memory_space<vmem>>, vector<1x128xf32>
    %15 = vector.broadcast %14 : vector<1x128xf32> to vector<128x128xf32>
    %16 = arith.addf %13, %15 : vector<128x128xf32>
    %cst = arith.constant 0.000000e+00 : f32
    %17 = vector.broadcast %cst : f32 to vector<128x128xf32>
    %18 = arith.maximumf %16, %17 : vector<128x128xf32>
    %c0_11 = arith.constant 0 : index
    %c0_12 = arith.constant 0 : index
    %19 = vector.load %arg7[%c0_11, %c0_12] : memref<128x128xf32, #tpu.memory_space<vmem>>, vector<128x128xf32>
    tpu.vector_store %arg7[%c0_11, %c0_12], %18 {strides = array<i32>} : memref<128x128xf32, #tpu.memory_space<vmem>>, vector<128x128xf32>,
    return
  }
  func.func @transform_0(%arg0: i32) -> (i32, i32) {
    %c0_i32 = arith.constant 0 : i32
    %c0_i32_0 = arith.constant 0 : i32
    return %arg0, %c0_i32 : i32, i32
  }
  func.func @transform_1(%arg0: i32) -> (i32, i32) {
    %c0_i32 = arith.constant 0 : i32
    %c0_i32_0 = arith.constant 0 : i32
    %c0_i32_1 = arith.constant 0 : i32
    return %c0_i32, %c0_i32_0 : i32, i32
  }
  func.func @transform_2(%arg0: i32) -> (i32, i32) {
    %c0_i32 = arith.constant 0 : i32
    %c0_i32_0 = arith.constant 0 : i32
    %c0_i32_1 = arith.constant 0 : i32
    return %c0_i32, %c0_i32_0 : i32, i32
  }
  func.func @transform_3(%arg0: i32) -> (i32, i32) {
    %c0_i32 = arith.constant 0 : i32
    %c0_i32_0 = arith.constant 0 : i32
    return %arg0, %c0_i32 : i32, i32
  }
  func.func @transform_4(%arg0: i32) -> (i32, i32) {
    %c0_i32 = arith.constant 0 : i32
    %c0_i32_0 = arith.constant 0 : i32
    %c0_i32_1 = arith.constant 0 : i32
    return %c0_i32, %c0_i32_0 : i32, i32
  }
  func.func @transform_5(%arg0: i32) -> (i32, i32) {
    %c0_i32 = arith.constant 0 : i32
    %c0_i32_0 = arith.constant 0 : i32
    %c0_i32_1 = arith.constant 0 : i32
    return %c0_i32, %c0_i32_0 : i32, i32
  }
  func.func @transform_6(%arg0: i32) -> (i32, i32) {
    %c0_i32 = arith.constant 0 : i32
    %c0_i32_0 = arith.constant 0 : i32
    return %arg0, %c0_i32 : i32, i32
  }
}

</mosaic_0001>

<llo_original>
// kernel: bottleneck_forward.8
$region0: #{bottleneck_forward.8}
  #allocation0 [shape = 'u32[]', space=smem, size = 0x4, offset = 0x4, fixed_abs, tag = 'smem constant byte address 0x4 - core index']
  #allocation1 [shape = 'u32[144,128]{1,0:T(1,128)}', space=vmem, size = 0x12000, scoped, tag = 'internal scratch']
  %s0 = inlined_call_operand.vmem [shape: bf16[512,128], index: 0, kind: input, shape index: {}]
  %s1 = inlined_call_operand.vmem [shape: f32[1,128], index: 1, kind: input, shape index: {}]
  %s2 = inlined_call_operand.vmem [shape: f32[1,128], index: 2, kind: input, shape index: {}]
  %s3 = inlined_call_operand.vmem [shape: bf16[512,128], index: 3, kind: output, shape index: {}]
  %s4 = sld [smem:[#allocation0]]
  $region22: #{bottleneck_forward.8} parent=0
    _
  %s6 = ssub.s32 1, %s4
  %s7 = scalar_select 0, %s6, %s4
  // Predicated region
  $region2: #{bottleneck_forward.8} parent=0 // pred_check
    _
  $region3: #{bottleneck_forward.8} parent=0 // pred_check_branch
    %9 = sbr.rel (0) target = $region5
  $region4: #{bottleneck_forward.8} parent=0 // pred_region
    _
  $region5: #{bottleneck_forward.8} parent=0 // pred_fallthru
    _
  // Predicated region
  $region6: #{bottleneck_forward.8} parent=0 // pred_check
    _
  $region7: #{bottleneck_forward.8} parent=0 // pred_check_branch
    %11 = sbr.rel (0) target = $region9
  $region8: #{bottleneck_forward.8} parent=0 // pred_region
    _
  $region9: #{bottleneck_forward.8} parent=0 // pred_fallthru
    _
  // Predicated region
  $region10: #{bottleneck_forward.8} parent=0 // pred_check
    _
  $region11: #{bottleneck_forward.8} parent=0 // pred_check_branch
    %13 = sbr.rel (0) target = $region13
  $region12: #{bottleneck_forward.8} parent=0 // pred_region
    _
  $region13: #{bottleneck_forward.8} parent=0 // pred_fallthru
    _
  %v14 = vld [vmem:[%s0] sm:$0xf]
  %v15 = vld [vmem:[%s0 + $0x4] sm:$0xf]
  %v16 = vld [vmem:[%s0 + $0x8] sm:$0xf]
  %v17 = vld [vmem:[%s0 + $0xc] sm:$0xf]
  %v18 = vld [vmem:[%s0 + $0x10] sm:$0xf]
  %v19 = vld [vmem:[%s0 + $0x14] sm:$0xf]
  %v20 = vld [vmem:[%s0 + $0x18] sm:$0xf]
  %v21 = vld [vmem:[%s0 + $0x1c] sm:$0xf]
  %v22 = vld [vmem:[%s0 + $0x20] sm:$0xf]
  %v23 = vld [vmem:[%s0 + $0x24] sm:$0xf]
  %v24 = vld [vmem:[%s0 + $0x28] sm:$0xf]
  %v25 = vld [vmem:[%s0 + $0x2c] sm:$0xf]
  %v26 = vld [vmem:[%s0 + $0x30] sm:$0xf]
  %v27 = vld [vmem:[%s0 + $0x34] sm:$0xf]
  %v28 = vld [vmem:[%s0 + $0x38] sm:$0xf]
  %v29 = vld [vmem:[%s0 + $0x3c] sm:$0xf]
  %v30 = vld [vmem:[%s0 + $0x40] sm:$0xf]
  %v31 = vld [vmem:[%s0 + $0x44] sm:$0xf]
  %v32 = vld [vmem:[%s0 + $0x48] sm:$0xf]
  %v33 = vld [vmem:[%s0 + $0x4c] sm:$0xf]
  %v34 = vld [vmem:[%s0 + $0x50] sm:$0xf]
  %v35 = vld [vmem:[%s0 + $0x54] sm:$0xf]
  %v36 = vld [vmem:[%s0 + $0x58] sm:$0xf]
  %v37 = vld [vmem:[%s0 + $0x5c] sm:$0xf]
  %v38 = vld [vmem:[%s0 + $0x60] sm:$0xf]
  %v39 = vld [vmem:[%s0 + $0x64] sm:$0xf]
  %v40 = vld [vmem:[%s0 + $0x68] sm:$0xf]
  %v41 = vld [vmem:[%s0 + $0x6c] sm:$0xf]
  %v42 = vld [vmem:[%s0 + $0x70] sm:$0xf]
  %v43 = vld [vmem:[%s0 + $0x74] sm:$0xf]
  %v44 = vld [vmem:[%s0 + $0x78] sm:$0xf]
  %v45 = vld [vmem:[%s0 + $0x7c] sm:$0xf]
  %v46 = vld [vmem:[%s0 + $0x80] sm:$0xf]
  %v47 = vld [vmem:[%s0 + $0x84] sm:$0xf]
  %v48 = vld [vmem:[%s0 + $0x88] sm:$0xf]
  %v49 = vld [vmem:[%s0 + $0x8c] sm:$0xf]
  %v50 = vld [vmem:[%s0 + $0x90] sm:$0xf]
  %v51 = vld [vmem:[%s0 + $0x94] sm:$0xf]
  %v52 = vld [vmem:[%s0 + $0x98] sm:$0xf]
  %v53 = vld [vmem:[%s0 + $0x9c] sm:$0xf]
  %v54 = vld [vmem:[%s0 + $0xa0] sm:$0xf]
  %v55 = vld [vmem:[%s0 + $0xa4] sm:$0xf]
  %v56 = vld [vmem:[%s0 + $0xa8] sm:$0xf]
  %v57 = vld [vmem:[%s0 + $0xac] sm:$0xf]
  %v58 = vld [vmem:[%s0 + $0xb0] sm:$0xf]
  %v59 = vld [vmem:[%s0 + $0xb4] sm:$0xf]
  %v60 = vld [vmem:[%s0 + $0xb8] sm:$0xf]
  %v61 = vld [vmem:[%s0 + $0xbc] sm:$0xf]
  %v62 = vld [vmem:[%s0 + $0xc0] sm:$0xf]
  %v63 = vld [vmem:[%s0 + $0xc4] sm:$0xf]
  %v64 = vld [vmem:[%s0 + $0xc8] sm:$0xf]
  %v65 = vld [vmem:[%s0 + $0xcc] sm:$0xf]
  %v66 = vld [vmem:[%s0 + $0xd0] sm:$0xf]
  %v67 = vld [vmem:[%s0 + $0xd4] sm:$0xf]
  %v68 = vld [vmem:[%s0 + $0xd8] sm:$0xf]
  %v69 = vld [vmem:[%s0 + $0xdc] sm:$0xf]
  %v70 = vld [vmem:[%s0 + $0xe0] sm:$0xf]
  %v71 = vld [vmem:[%s0 + $0xe4] sm:$0xf]
  %v72 = vld [vmem:[%s0 + $0xe8] sm:$0xf]
  %v73 = vld [vmem:[%s0 + $0xec] sm:$0xf]
  %v74 = vld [vmem:[%s0 + $0xf0] sm:$0xf]
  %v75 = vld [vmem:[%s0 + $0xf4] sm:$0xf]
  %v76 = vld [vmem:[%s0 + $0xf8] sm:$0xf]
  %v77 = vld [vmem:[%s0 + $0xfc] sm:$0xf]
  %v78 = vunpack.c.l.bf16 %v14
  %v79 = vunpack.c.l.bf16 %v15
  %v80 = vunpack.c.l.bf16 %v16
  %v81 = vunpack.c.l.bf16 %v17
  %v82 = vunpack.c.l.bf16 %v18
  %v83 = vunpack.c.l.bf16 %v19
  %v84 = vunpack.c.l.bf16 %v20
  %v85 = vunpack.c.l.bf16 %v21
  %v86 = vunpack.c.l.bf16 %v22
  %v87 = vunpack.c.l.bf16 %v23
  %v88 = vunpack.c.l.bf16 %v24
  %v89 = vunpack.c.l.bf16 %v25
  %v90 = vunpack.c.l.bf16 %v26
  %v91 = vunpack.c.l.bf16 %v27
  %v92 = vunpack.c.l.bf16 %v28
  %v93 = vunpack.c.l.bf16 %v29
  %v94 = vunpack.c.l.bf16 %v30
  %v95 = vunpack.c.l.bf16 %v31
  %v96 = vunpack.c.l.bf16 %v32
  %v97 = vunpack.c.l.bf16 %v33
  %v98 = vunpack.c.l.bf16 %v34
  %v99 = vunpack.c.l.bf16 %v35
  %v100 = vunpack.c.l.bf16 %v36
  %v101 = vunpack.c.l.bf16 %v37
  %v102 = vunpack.c.l.bf16 %v38
  %v103 = vunpack.c.l.bf16 %v39
  %v104 = vunpack.c.l.bf16 %v40
  %v105 = vunpack.c.l.bf16 %v41
  %v106 = vunpack.c.l.bf16 %v42
  %v107 = vunpack.c.l.bf16 %v43
  %v108 = vunpack.c.l.bf16 %v44
  %v109 = vunpack.c.l.bf16 %v45
  %v110 = vunpack.c.l.bf16 %v46
  %v111 = vunpack.c.l.bf16 %v47
  %v112 = vunpack.c.l.bf16 %v48
  %v113 = vunpack.c.l.bf16 %v49
  %v114 = vunpack.c.l.bf16 %v50
  %v115 = vunpack.c.l.bf16 %v51
  %v116 = vunpack.c.l.bf16 %v52
  %v117 = vunpack.c.l.bf16 %v53
  %v118 = vunpack.c.l.bf16 %v54
  %v119 = vunpack.c.l.bf16 %v55
  %v120 = vunpack.c.l.bf16 %v56
  %v121 = vunpack.c.l.bf16 %v57
  %v122 = vunpack.c.l.bf16 %v58
  %v123 = vunpack.c.l.bf16 %v59
  %v124 = vunpack.c.l.bf16 %v60
  %v125 = vunpack.c.l.bf16 %v61
  %v126 = vunpack.c.l.bf16 %v62
  %v127 = vunpack.c.l.bf16 %v63
  %v128 = vunpack.c.l.bf16 %v64
  %v129 = vunpack.c.l.bf16 %v65
  %v130 = vunpack.c.l.bf16 %v66
  %v131 = vunpack.c.l.bf16 %v67
  %v132 = vunpack.c.l.bf16 %v68
  %v133 = vunpack.c.l.bf16 %v69
  %v134 = vunpack.c.l.bf16 %v70
  %v135 = vunpack.c.l.bf16 %v71
  %v136 = vunpack.c.l.bf16 %v72
  %v137 = vunpack.c.l.bf16 %v73
  %v138 = vunpack.c.l.bf16 %v74
  %v139 = vunpack.c.l.bf16 %v75
  %v140 = vunpack.c.l.bf16 %v76
  %v141 = vunpack.c.l.bf16 %v77
  %v142 = vld [vmem:[%s1] sm:$0x1]
  %v144 = vlaneseq
  %v145 = vshrl.u32 %v144, 7
  %v146 = vsub.s32 0, %v145
  %v147 = vrot.slane %v142, %v146
  %v149 = vmul.f32 %v78, %v147
  %v150 = vmul.f32 %v79, %v147
  %v151 = vmul.f32 %v80, %v147
  %v152 = vmul.f32 %v81, %v147
  %v153 = vmul.f32 %v82, %v147
  %v154 = vmul.f32 %v83, %v147
  %v155 = vmul.f32 %v84, %v147
  %v156 = vmul.f32 %v85, %v147
  %v157 = vmul.f32 %v86, %v147
  %v158 = vmul.f32 %v87, %v147
  %v159 = vmul.f32 %v88, %v147
  %v160 = vmul.f32 %v89, %v147
  %v161 = vmul.f32 %v90, %v147
  %v162 = vmul.f32 %v91, %v147
  %v163 = vmul.f32 %v92, %v147
  %v164 = vmul.f32 %v93, %v147
  %v165 = vmul.f32 %v94, %v147
  %v166 = vmul.f32 %v95, %v147
  %v167 = vmul.f32 %v96, %v147
  %v168 = vmul.f32 %v97, %v147
  %v169 = vmul.f32 %v98, %v147
  %v170 = vmul.f32 %v99, %v147
  %v171 = vmul.f32 %v100, %v147
  %v172 = vmul.f32 %v101, %v147
  %v173 = vmul.f32 %v102, %v147
  %v174 = vmul.f32 %v103, %v147
  %v175 = vmul.f32 %v104, %v147
  %v176 = vmul.f32 %v105, %v147
  %v177 = vmul.f32 %v106, %v147
  %v178 = vmul.f32 %v107, %v147
  %v179 = vmul.f32 %v108, %v147
  %v180 = vmul.f32 %v109, %v147
  %v181 = vmul.f32 %v110, %v147
  %v182 = vmul.f32 %v111, %v147
  %v183 = vmul.f32 %v112, %v147
  %v184 = vmul.f32 %v113, %v147
  %v185 = vmul.f32 %v114, %v147
  %v186 = vmul.f32 %v115, %v147
  %v187 = vmul.f32 %v116, %v147
  %v188 = vmul.f32 %v117, %v147
  %v189 = vmul.f32 %v118, %v147
  %v190 = vmul.f32 %v119, %v147
  %v191 = vmul.f32 %v120, %v147
  %v192 = vmul.f32 %v121, %v147
  %v193 = vmul.f32 %v122, %v147
  %v194 = vmul.f32 %v123, %v147
  %v195 = vmul.f32 %v124, %v147
  %v196 = vmul.f32 %v125, %v147
  %v197 = vmul.f32 %v126, %v147
  %v198 = vmul.f32 %v127, %v147
  %v199 = vmul.f32 %v128, %v147
  %v200 = vmul.f32 %v129, %v147
  %v201 = vmul.f32 %v130, %v147
  %v202 = vmul.f32 %v131, %v147
  %v203 = vmul.f32 %v132, %v147
  %v204 = vmul.f32 %v133, %v147
  %v205 = vmul.f32 %v134, %v147
  %v206 = vmul.f32 %v135, %v147
  %v207 = vmul.f32 %v136, %v147
  %v208 = vmul.f32 %v137, %v147
  %v209 = vmul.f32 %v138, %v147
  %v210 = vmul.f32 %v139, %v147
  %v211 = vmul.f32 %v140, %v147
  %v212 = vmul.f32 %v141, %v147
  %v213 = vld [vmem:[%s2] sm:$0x1]
  %v215 = vlaneseq
  %v216 = vshrl.u32 %v215, 7
  %v217 = vsub.s32 0, %v216
  %v218 = vrot.slane %v213, %v217
  %v220 = vadd.f32 %v149, %v218
  %v221 = vadd.f32 %v150, %v218
  %v222 = vadd.f32 %v151, %v218
  %v223 = vadd.f32 %v152, %v218
  %v224 = vadd.f32 %v153, %v218
  %v225 = vadd.f32 %v154, %v218
  %v226 = vadd.f32 %v155, %v218
  %v227 = vadd.f32 %v156, %v218
  %v228 = vadd.f32 %v157, %v218
  %v229 = vadd.f32 %v158, %v218
  %v230 = vadd.f32 %v159, %v218
  %v231 = vadd.f32 %v160, %v218
  %v232 = vadd.f32 %v161, %v218
  %v233 = vadd.f32 %v162, %v218
  %v234 = vadd.f32 %v163, %v218
  %v235 = vadd.f32 %v164, %v218
  %v236 = vadd.f32 %v165, %v218
  %v237 = vadd.f32 %v166, %v218
  %v238 = vadd.f32 %v167, %v218
  %v239 = vadd.f32 %v168, %v218
  %v240 = vadd.f32 %v169, %v218
  %v241 = vadd.f32 %v170, %v218
  %v242 = vadd.f32 %v171, %v218
  %v243 = vadd.f32 %v172, %v218
  %v244 = vadd.f32 %v173, %v218
  %v245 = vadd.f32 %v174, %v218
  %v246 = vadd.f32 %v175, %v218
  %v247 = vadd.f32 %v176, %v218
  %v248 = vadd.f32 %v177, %v218
  %v249 = vadd.f32 %v178, %v218
  %v250 = vadd.f32 %v179, %v218
  %v251 = vadd.f32 %v180, %v218
  %v252 = vadd.f32 %v181, %v218
  %v253 = vadd.f32 %v182, %v218
  %v254 = vadd.f32 %v183, %v218
  %v255 = vadd.f32 %v184, %v218
  %v256 = vadd.f32 %v185, %v218
  %v257 = vadd.f32 %v186, %v218
  %v258 = vadd.f32 %v187, %v218
  %v259 = vadd.f32 %v188, %v218
  %v260 = vadd.f32 %v189, %v218
  %v261 = vadd.f32 %v190, %v218
  %v262 = vadd.f32 %v191, %v218
  %v263 = vadd.f32 %v192, %v218
  %v264 = vadd.f32 %v193, %v218
  %v265 = vadd.f32 %v194, %v218
  %v266 = vadd.f32 %v195, %v218
  %v267 = vadd.f32 %v196, %v218
  %v268 = vadd.f32 %v197, %v218
  %v269 = vadd.f32 %v198, %v218
  %v270 = vadd.f32 %v199, %v218
  %v271 = vadd.f32 %v200, %v218
  %v272 = vadd.f32 %v201, %v218
  %v273 = vadd.f32 %v202, %v218
  %v274 = vadd.f32 %v203, %v218
  %v275 = vadd.f32 %v204, %v218
  %v276 = vadd.f32 %v205, %v218
  %v277 = vadd.f32 %v206, %v218
  %v278 = vadd.f32 %v207, %v218
  %v279 = vadd.f32 %v208, %v218
  %v280 = vadd.f32 %v209, %v218
  %v281 = vadd.f32 %v210, %v218
  %v282 = vadd.f32 %v211, %v218
  %v283 = vadd.f32 %v212, %v218
  %v284 = vmax.f32 %v220, 0.0
  %v285 = vmax.f32 %v221, 0.0
  %v286 = vmax.f32 %v222, 0.0
  %v287 = vmax.f32 %v223, 0.0
  %v288 = vmax.f32 %v224, 0.0
  %v289 = vmax.f32 %v225, 0.0
  %v290 = vmax.f32 %v226, 0.0
  %v291 = vmax.f32 %v227, 0.0
  %v292 = vmax.f32 %v228, 0.0
  %v293 = vmax.f32 %v229, 0.0
  %v294 = vmax.f32 %v230, 0.0
  %v295 = vmax.f32 %v231, 0.0
  %v296 = vmax.f32 %v232, 0.0
  %v297 = vmax.f32 %v233, 0.0
  %v298 = vmax.f32 %v234, 0.0
  %v299 = vmax.f32 %v235, 0.0
  %v300 = vmax.f32 %v236, 0.0
  %v301 = vmax.f32 %v237, 0.0
  %v302 = vmax.f32 %v238, 0.0
  %v303 = vmax.f32 %v239, 0.0
  %v304 = vmax.f32 %v240, 0.0
  %v305 = vmax.f32 %v241, 0.0
  %v306 = vmax.f32 %v242, 0.0
  %v307 = vmax.f32 %v243, 0.0
  %v308 = vmax.f32 %v244, 0.0
  %v309 = vmax.f32 %v245, 0.0
  %v310 = vmax.f32 %v246, 0.0
  %v311 = vmax.f32 %v247, 0.0
  %v312 = vmax.f32 %v248, 0.0
  %v313 = vmax.f32 %v249, 0.0
  %v314 = vmax.f32 %v250, 0.0
  %v315 = vmax.f32 %v251, 0.0
  %v316 = vmax.f32 %v252, 0.0
  %v317 = vmax.f32 %v253, 0.0
  %v318 = vmax.f32 %v254, 0.0
  %v319 = vmax.f32 %v255, 0.0
  %v320 = vmax.f32 %v256, 0.0
  %v321 = vmax.f32 %v257, 0.0
  %v322 = vmax.f32 %v258, 0.0
  %v323 = vmax.f32 %v259, 0.0
  %v324 = vmax.f32 %v260, 0.0
  %v325 = vmax.f32 %v261, 0.0
  %v326 = vmax.f32 %v262, 0.0
  %v327 = vmax.f32 %v263, 0.0
  %v328 = vmax.f32 %v264, 0.0
  %v329 = vmax.f32 %v265, 0.0
  %v330 = vmax.f32 %v266, 0.0
  %v331 = vmax.f32 %v267, 0.0
  %v332 = vmax.f32 %v268, 0.0
  %v333 = vmax.f32 %v269, 0.0
  %v334 = vmax.f32 %v270, 0.0
  %v335 = vmax.f32 %v271, 0.0
  %v336 = vmax.f32 %v272, 0.0
  %v337 = vmax.f32 %v273, 0.0
  %v338 = vmax.f32 %v274, 0.0
  %v339 = vmax.f32 %v275, 0.0
  %v340 = vmax.f32 %v276, 0.0
  %v341 = vmax.f32 %v277, 0.0
  %v342 = vmax.f32 %v278, 0.0
  %v343 = vmax.f32 %v279, 0.0
  %v344 = vmax.f32 %v280, 0.0
  %v345 = vmax.f32 %v281, 0.0
  %v346 = vmax.f32 %v282, 0.0
  %v347 = vmax.f32 %v283, 0.0
  %v348 = vpack.c.bf16 %v285, %v284
  %v349 = vpack.c.bf16 %v287, %v286
  %v350 = vpack.c.bf16 %v289, %v288
  %v351 = vpack.c.bf16 %v291, %v290
  %v352 = vpack.c.bf16 %v293, %v292
  %v353 = vpack.c.bf16 %v295, %v294
  %v354 = vpack.c.bf16 %v297, %v296
  %v355 = vpack.c.bf16 %v299, %v298
  %v356 = vpack.c.bf16 %v301, %v300
  %v357 = vpack.c.bf16 %v303, %v302
  %v358 = vpack.c.bf16 %v305, %v304
  %v359 = vpack.c.bf16 %v307, %v306
  %v360 = vpack.c.bf16 %v309, %v308
  %v361 = vpack.c.bf16 %v311, %v310
  %v362 = vpack.c.bf16 %v313, %v312
  %v363 = vpack.c.bf16 %v315, %v314
  %v364 = vpack.c.bf16 %v317, %v316
  %v365 = vpack.c.bf16 %v319, %v318
  %v366 = vpack.c.bf16 %v321, %v320
  %v367 = vpack.c.bf16 %v323, %v322
  %v368 = vpack.c.bf16 %v325, %v324
  %v369 = vpack.c.bf16 %v327, %v326
  %v370 = vpack.c.bf16 %v329, %v328
  %v371 = vpack.c.bf16 %v331, %v330
  %v372 = vpack.c.bf16 %v333, %v332
  %v373 = vpack.c.bf16 %v335, %v334
  %v374 = vpack.c.bf16 %v337, %v336
  %v375 = vpack.c.bf16 %v339, %v338
  %v376 = vpack.c.bf16 %v341, %v340
  %v377 = vpack.c.bf16 %v343, %v342
  %v378 = vpack.c.bf16 %v345, %v344
  %v379 = vpack.c.bf16 %v347, %v346
  %v412 = vunpack.c.l.b16 %v348
  %v413 = vunpack.c.h.b16 %v348
  %v414 = vunpack.c.l.b16 %v349
  %v415 = vunpack.c.h.b16 %v349
  %v416 = vunpack.c.l.b16 %v350
  %v417 = vunpack.c.h.b16 %v350
  %v418 = vunpack.c.l.b16 %v351
  %v419 = vunpack.c.h.b16 %v351
  %v420 = vunpack.c.l.b16 %v352
  %v421 = vunpack.c.h.b16 %v352
  %v422 = vunpack.c.l.b16 %v353
  %v423 = vunpack.c.h.b16 %v353
  %v424 = vunpack.c.l.b16 %v354
  %v425 = vunpack.c.h.b16 %v354
  %v426 = vunpack.c.l.b16 %v355
  %v427 = vunpack.c.h.b16 %v355
  %v428 = vunpack.c.l.b16 %v356
  %v429 = vunpack.c.h.b16 %v356
  %v430 = vunpack.c.l.b16 %v357
  %v431 = vunpack.c.h.b16 %v357
  %v432 = vunpack.c.l.b16 %v358
  %v433 = vunpack.c.h.b16 %v358
  %v434 = vunpack.c.l.b16 %v359
  %v435 = vunpack.c.h.b16 %v359
  %v436 = vunpack.c.l.b16 %v360
  %v437 = vunpack.c.h.b16 %v360
  %v438 = vunpack.c.l.b16 %v361
  %v439 = vunpack.c.h.b16 %v361
  %v440 = vunpack.c.l.b16 %v362
  %v441 = vunpack.c.h.b16 %v362
  %v442 = vunpack.c.l.b16 %v363
  %v443 = vunpack.c.h.b16 %v363
  %v444 = vunpack.c.l.b16 %v364
  %v445 = vunpack.c.h.b16 %v364
  %v446 = vunpack.c.l.b16 %v365
  %v447 = vunpack.c.h.b16 %v365
  %v448 = vunpack.c.l.b16 %v366
  %v449 = vunpack.c.h.b16 %v366
  %v450 = vunpack.c.l.b16 %v367
  %v451 = vunpack.c.h.b16 %v367
  %v452 = vunpack.c.l.b16 %v368
  %v453 = vunpack.c.h.b16 %v368
  %v454 = vunpack.c.l.b16 %v369
  %v455 = vunpack.c.h.b16 %v369
  %v456 = vunpack.c.l.b16 %v370
  %v457 = vunpack.c.h.b16 %v370
  %v458 = vunpack.c.l.b16 %v371
  %v459 = vunpack.c.h.b16 %v371
  %v460 = vunpack.c.l.b16 %v372
  %v461 = vunpack.c.h.b16 %v372
  %v462 = vunpack.c.l.b16 %v373
  %v463 = vunpack.c.h.b16 %v373
  %v464 = vunpack.c.l.b16 %v374
  %v465 = vunpack.c.h.b16 %v374
  %v466 = vunpack.c.l.b16 %v375
  %v467 = vunpack.c.h.b16 %v375
  %v468 = vunpack.c.l.b16 %v376
  %v469 = vunpack.c.h.b16 %v376
  %v470 = vunpack.c.l.b16 %v377
  %v471 = vunpack.c.h.b16 %v377
  %v472 = vunpack.c.l.b16 %v378
  %v473 = vunpack.c.h.b16 %v378
  %v474 = vunpack.c.l.b16 %v379
  %v475 = vunpack.c.h.b16 %v379
  %v476 = vpack.c.b16 %v412, %v412
  %v477 = vpack.c.b16 %v413, %v413
  %v478 = vpack.c.b16 %v414, %v414
  %v479 = vpack.c.b16 %v415, %v415
  %v480 = vpack.c.b16 %v416, %v416
  %v481 = vpack.c.b16 %v417, %v417
  %v482 = vpack.c.b16 %v418, %v418
  %v483 = vpack.c.b16 %v419, %v419
  %v484 = vpack.c.b16 %v420, %v420
  %v485 = vpack.c.b16 %v421, %v421
  %v486 = vpack.c.b16 %v422, %v422
  %v487 = vpack.c.b16 %v423, %v423
  %v488 = vpack.c.b16 %v424, %v424
  %v489 = vpack.c.b16 %v425, %v425
  %v490 = vpack.c.b16 %v426, %v426
  %v491 = vpack.c.b16 %v427, %v427
  %v492 = vpack.c.b16 %v428, %v428
  %v493 = vpack.c.b16 %v429, %v429
  %v494 = vpack.c.b16 %v430, %v430
  %v495 = vpack.c.b16 %v431, %v431
  %v496 = vpack.c.b16 %v432, %v432
  %v497 = vpack.c.b16 %v433, %v433
  %v498 = vpack.c.b16 %v434, %v434
  %v499 = vpack.c.b16 %v435, %v435
  %v500 = vpack.c.b16 %v436, %v436
  %v501 = vpack.c.b16 %v437, %v437
  %v502 = vpack.c.b16 %v438, %v438
  %v503 = vpack.c.b16 %v439, %v439
  %v504 = vpack.c.b16 %v440, %v440
  %v505 = vpack.c.b16 %v441, %v441
  %v506 = vpack.c.b16 %v442, %v442
  %v507 = vpack.c.b16 %v443, %v443
  %v508 = vpack.c.b16 %v444, %v444
  %v509 = vpack.c.b16 %v445, %v445
  %v510 = vpack.c.b16 %v446, %v446
  %v511 = vpack.c.b16 %v447, %v447
  %v512 = vpack.c.b16 %v448, %v448
  %v513 = vpack.c.b16 %v449, %v449
  %v514 = vpack.c.b16 %v450, %v450
  %v515 = vpack.c.b16 %v451, %v451
  %v516 = vpack.c.b16 %v452, %v452
  %v517 = vpack.c.b16 %v453, %v453
  %v518 = vpack.c.b16 %v454, %v454
  %v519 = vpack.c.b16 %v455, %v455
  %v520 = vpack.c.b16 %v456, %v456
  %v521 = vpack.c.b16 %v457, %v457
  %v522 = vpack.c.b16 %v458, %v458
  %v523 = vpack.c.b16 %v459, %v459
  %v524 = vpack.c.b16 %v460, %v460
  %v525 = vpack.c.b16 %v461, %v461
  %v526 = vpack.c.b16 %v462, %v462
  %v527 = vpack.c.b16 %v463, %v463
  %v528 = vpack.c.b16 %v464, %v464
  %v529 = vpack.c.b16 %v465, %v465
  %v530 = vpack.c.b16 %v466, %v466
  %v531 = vpack.c.b16 %v467, %v467
  %v532 = vpack.c.b16 %v468, %v468
  %v533 = vpack.c.b16 %v469, %v469
  %v534 = vpack.c.b16 %v470, %v470
  %v535 = vpack.c.b16 %v471, %v471
  %v536 = vpack.c.b16 %v472, %v472
  %v537 = vpack.c.b16 %v473, %v473
  %v538 = vpack.c.b16 %v474, %v474
  %v539 = vpack.c.b16 %v475, %v475
  %604 = vst [vmem:[%s3] sm:$0xf] %v476
  %605 = vst [vmem:[%s3 + $0x4] sm:$0xf] %v477
  %606 = vst [vmem:[%s3 + $0x8] sm:$0xf] %v478
  %607 = vst [vmem:[%s3 + $0xc] sm:$0xf] %v479
  %608 = vst [vmem:[%s3 + $0x10] sm:$0xf] %v480
  %609 = vst [vmem:[%s3 + $0x14] sm:$0xf] %v481
  %610 = vst [vmem:[%s3 + $0x18] sm:$0xf] %v482
  %611 = vst [vmem:[%s3 + $0x1c] sm:$0xf] %v483
  %612 = vst [vmem:[%s3 + $0x20] sm:$0xf] %v484
  %613 = vst [vmem:[%s3 + $0x24] sm:$0xf] %v485
  %614 = vst [vmem:[%s3 + $0x28] sm:$0xf] %v486
  %615 = vst [vmem:[%s3 + $0x2c] sm:$0xf] %v487
  %616 = vst [vmem:[%s3 + $0x30] sm:$0xf] %v488
  %617 = vst [vmem:[%s3 + $0x34] sm:$0xf] %v489
  %618 = vst [vmem:[%s3 + $0x38] sm:$0xf] %v490
  %619 = vst [vmem:[%s3 + $0x3c] sm:$0xf] %v491
  %620 = vst [vmem:[%s3 + $0x40] sm:$0xf] %v492
  %621 = vst [vmem:[%s3 + $0x44] sm:$0xf] %v493
  %622 = vst [vmem:[%s3 + $0x48] sm:$0xf] %v494
  %623 = vst [vmem:[%s3 + $0x4c] sm:$0xf] %v495
  %624 = vst [vmem:[%s3 + $0x50] sm:$0xf] %v496
  %625 = vst [vmem:[%s3 + $0x54] sm:$0xf] %v497
  %626 = vst [vmem:[%s3 + $0x58] sm:$0xf] %v498
  %627 = vst [vmem:[%s3 + $0x5c] sm:$0xf] %v499
  %628 = vst [vmem:[%s3 + $0x60] sm:$0xf] %v500
  %629 = vst [vmem:[%s3 + $0x64] sm:$0xf] %v501
  %630 = vst [vmem:[%s3 + $0x68] sm:$0xf] %v502
  %631 = vst [vmem:[%s3 + $0x6c] sm:$0xf] %v503
  %632 = vst [vmem:[%s3 + $0x70] sm:$0xf] %v504
  %633 = vst [vmem:[%s3 + $0x74] sm:$0xf] %v505
  %634 = vst [vmem:[%s3 + $0x78] sm:$0xf] %v506
  %635 = vst [vmem:[%s3 + $0x7c] sm:$0xf] %v507
  %636 = vst [vmem:[%s3 + $0x80] sm:$0xf] %v508
  %637 = vst [vmem:[%s3 + $0x84] sm:$0xf] %v509
  %638 = vst [vmem:[%s3 + $0x88] sm:$0xf] %v510
  %639 = vst [vmem:[%s3 + $0x8c] sm:$0xf] %v511
  %640 = vst [vmem:[%s3 + $0x90] sm:$0xf] %v512
  %641 = vst [vmem:[%s3 + $0x94] sm:$0xf] %v513
  %642 = vst [vmem:[%s3 + $0x98] sm:$0xf] %v514
  %643 = vst [vmem:[%s3 + $0x9c] sm:$0xf] %v515
  %644 = vst [vmem:[%s3 + $0xa0] sm:$0xf] %v516
  %645 = vst [vmem:[%s3 + $0xa4] sm:$0xf] %v517
  %646 = vst [vmem:[%s3 + $0xa8] sm:$0xf] %v518
  %647 = vst [vmem:[%s3 + $0xac] sm:$0xf] %v519
  %648 = vst [vmem:[%s3 + $0xb0] sm:$0xf] %v520
  %649 = vst [vmem:[%s3 + $0xb4] sm:$0xf] %v521
  %650 = vst [vmem:[%s3 + $0xb8] sm:$0xf] %v522
  %651 = vst [vmem:[%s3 + $0xbc] sm:$0xf] %v523
  %652 = vst [vmem:[%s3 + $0xc0] sm:$0xf] %v524
  %653 = vst [vmem:[%s3 + $0xc4] sm:$0xf] %v525
  %654 = vst [vmem:[%s3 + $0xc8] sm:$0xf] %v526
  %655 = vst [vmem:[%s3 + $0xcc] sm:$0xf] %v527
  %656 = vst [vmem:[%s3 + $0xd0] sm:$0xf] %v528
  %657 = vst [vmem:[%s3 + $0xd4] sm:$0xf] %v529
  %658 = vst [vmem:[%s3 + $0xd8] sm:$0xf] %v530
  %659 = vst [vmem:[%s3 + $0xdc] sm:$0xf] %v531
  %660 = vst [vmem:[%s3 + $0xe0] sm:$0xf] %v532
  %661 = vst [vmem:[%s3 + $0xe4] sm:$0xf] %v533
  %662 = vst [vmem:[%s3 + $0xe8] sm:$0xf] %v534
  %663 = vst [vmem:[%s3 + $0xec] sm:$0xf] %v535
  %664 = vst [vmem:[%s3 + $0xf0] sm:$0xf] %v536
  %665 = vst [vmem:[%s3 + $0xf4] sm:$0xf] %v537
  %666 = vst [vmem:[%s3 + $0xf8] sm:$0xf] %v538
  %667 = vst [vmem:[%s3 + $0xfc] sm:$0xf] %v539
  // Predicated region
  $region14: #{bottleneck_forward.8} parent=0 // pred_check
    _
  $region15: #{bottleneck_forward.8} parent=0 // pred_check_branch
    %669 = sbr.rel (0) target = $region17
  $region16: #{bottleneck_forward.8} parent=0 // pred_region
    _
  $region17: #{bottleneck_forward.8} parent=0 // pred_fallthru
    _
  // Predicated region
  $region18: #{bottleneck_forward.8} parent=0 // pred_check
    _
  $region19: #{bottleneck_forward.8} parent=0 // pred_check_branch
    %671 = sbr.rel (0) target = $region21
  $region20: #{bottleneck_forward.8} parent=0 // pred_region
    _
  $region21: #{bottleneck_forward.8} parent=0 // pred_fallthru
    _

// kernel: bottleneck_forward.7
$region0: #{bottleneck_forward.7}
  #allocation0 [shape = 'u32[]', space=smem, size = 0x4, offset = 0x4, fixed_abs, tag = 'smem constant byte address 0x4 - core index']
  #allocation1 [shape = 'u32[144,128]{1,0:T(1,128)}', space=vmem, size = 0x12000, scoped, tag = 'internal scratch']
  #allocation2 [shape = 'f32[512,128]{1,0:T(8,128)}', space=vmem, size = 0x40000, scoped, tag = 'scratch operand']
  %s0 = inlined_call_operand.vmem [shape: bf16[512,128], index: 0, kind: input, shape index: {}]
  %s1 = inlined_call_operand.vmem [shape: bf16[128,128], index: 1, kind: input, shape index: {}]
  %s2 = inlined_call_operand.vmem [shape: bf16[512,128], index: 2, kind: output, shape index: {0}]
  %s3 = inlined_call_operand.vmem [shape: f32[8,128], index: 3, kind: output, shape index: {1}]
  %4 = xla_tuple %s2, %s3
  %s5 = sld [smem:[#allocation0]]
  $region34: #{bottleneck_forward.7} parent=0
    _
  %s7 = ssub.s32 1, %s5
  %s8 = scalar_select 0, %s7, %s5
  // Predicated region
  $region2: #{bottleneck_forward.7} parent=0 // pred_check
    _
  $region3: #{bottleneck_forward.7} parent=0 // pred_check_branch
    %10 = sbr.rel (0) target = $region5
  $region4: #{bottleneck_forward.7} parent=0 // pred_region
    _
  $region5: #{bottleneck_forward.7} parent=0 // pred_fallthru
    _
  // Predicated region
  $region6: #{bottleneck_forward.7} parent=0 // pred_check
    _
  $region7: #{bottleneck_forward.7} parent=0 // pred_check_branch
    %12 = sbr.rel (0) target = $region9
  $region8: #{bottleneck_forward.7} parent=0 // pred_region
    _
  $region9: #{bottleneck_forward.7} parent=0 // pred_fallthru
    _
  %p14 = scmp.eq.s32.totalorder 0, 0
  // Predicated region
  $region10: #{bottleneck_forward.7} parent=0 // pred_check
    %p15 = pneg %p14
  $region11: #{bottleneck_forward.7} parent=0 // pred_check_branch
    %17 = sbr.rel (%p15) target = $region13
  $region12: #{bottleneck_forward.7} parent=0 // pred_region
    %18 = vst [vmem:[#allocation2] sm:$0xff] 0.0
    %19 = vst [vmem:[#allocation2 + $0x8] sm:$0xff] 0.0
    %20 = vst [vmem:[#allocation2 + $0x10] sm:$0xff] 0.0
    %21 = vst [vmem:[#allocation2 + $0x18] sm:$0xff] 0.0
    %22 = vst [vmem:[#allocation2 + $0x20] sm:$0xff] 0.0
    %23 = vst [vmem:[#allocation2 + $0x28] sm:$0xff] 0.0
    %24 = vst [vmem:[#allocation2 + $0x30] sm:$0xff] 0.0
    %25 = vst [vmem:[#allocation2 + $0x38] sm:$0xff] 0.0
    %26 = vst [vmem:[#allocation2 + $0x40] sm:$0xff] 0.0
    %27 = vst [vmem:[#allocation2 + $0x48] sm:$0xff] 0.0
    %28 = vst [vmem:[#allocation2 + $0x50] sm:$0xff] 0.0
    %29 = vst [vmem:[#allocation2 + $0x58] sm:$0xff] 0.0
    %30 = vst [vmem:[#allocation2 + $0x60] sm:$0xff] 0.0
    %31 = vst [vmem:[#allocation2 + $0x68] sm:$0xff] 0.0
    %32 = vst [vmem:[#allocation2 + $0x70] sm:$0xff] 0.0
    %33 = vst [vmem:[#allocation2 + $0x78] sm:$0xff] 0.0
    %34 = vst [vmem:[#allocation2 + $0x80] sm:$0xff] 0.0
    %35 = vst [vmem:[#allocation2 + $0x88] sm:$0xff] 0.0
    %36 = vst [vmem:[#allocation2 + $0x90] sm:$0xff] 0.0
    %37 = vst [vmem:[#allocation2 + $0x98] sm:$0xff] 0.0
    %38 = vst [vmem:[#allocation2 + $0xa0] sm:$0xff] 0.0
    %39 = vst [vmem:[#allocation2 + $0xa8] sm:$0xff] 0.0
    %40 = vst [vmem:[#allocation2 + $0xb0] sm:$0xff] 0.0
    %41 = vst [vmem:[#allocation2 + $0xb8] sm:$0xff] 0.0
    %42 = vst [vmem:[#allocation2 + $0xc0] sm:$0xff] 0.0
    %43 = vst [vmem:[#allocation2 + $0xc8] sm:$0xff] 0.0
    %44 = vst [vmem:[#allocation2 + $0xd0] sm:$0xff] 0.0
    %45 = vst [vmem:[#allocation2 + $0xd8] sm:$0xff] 0.0
    %46 = vst [vmem:[#allocation2 + $0xe0] sm:$0xff] 0.0
    %47 = vst [vmem:[#allocation2 + $0xe8] sm:$0xff] 0.0
    %48 = vst [vmem:[#allocation2 + $0xf0] sm:$0xff] 0.0
    %49 = vst [vmem:[#allocation2 + $0xf8] sm:$0xff] 0.0
    %50 = vst [vmem:[#allocation2 + $0x100] sm:$0xff] 0.0
    %51 = vst [vmem:[#allocation2 + $0x108] sm:$0xff] 0.0
    %52 = vst [vmem:[#allocation2 + $0x110] sm:$0xff] 0.0
    %53 = vst [vmem:[#allocation2 + $0x118] sm:$0xff] 0.0
    %54 = vst [vmem:[#allocation2 + $0x120] sm:$0xff] 0.0
    %55 = vst [vmem:[#allocation2 + $0x128] sm:$0xff] 0.0
    %56 = vst [vmem:[#allocation2 + $0x130] sm:$0xff] 0.0
    %57 = vst [vmem:[#allocation2 + $0x138] sm:$0xff] 0.0
    %58 = vst [vmem:[#allocation2 + $0x140] sm:$0xff] 0.0
    %59 = vst [vmem:[#allocation2 + $0x148] sm:$0xff] 0.0
    %60 = vst [vmem:[#allocation2 + $0x150] sm:$0xff] 0.0
    %61 = vst [vmem:[#allocation2 + $0x158] sm:$0xff] 0.0
    %62 = vst [vmem:[#allocation2 + $0x160] sm:$0xff] 0.0
    %63 = vst [vmem:[#allocation2 + $0x168] sm:$0xff] 0.0
    %64 = vst [vmem:[#allocation2 + $0x170] sm:$0xff] 0.0
    %65 = vst [vmem:[#allocation2 + $0x178] sm:$0xff] 0.0
    %66 = vst [vmem:[#allocation2 + $0x180] sm:$0xff] 0.0
    %67 = vst [vmem:[#allocation2 + $0x188] sm:$0xff] 0.0
    %68 = vst [vmem:[#allocation2 + $0x190] sm:$0xff] 0.0
    %69 = vst [vmem:[#allocation2 + $0x198] sm:$0xff] 0.0
    %70 = vst [vmem:[#allocation2 + $0x1a0] sm:$0xff] 0.0
    %71 = vst [vmem:[#allocation2 + $0x1a8] sm:$0xff] 0.0
    %72 = vst [vmem:[#allocation2 + $0x1b0] sm:$0xff] 0.0
    %73 = vst [vmem:[#allocation2 + $0x1b8] sm:$0xff] 0.0
    %74 = vst [vmem:[#allocation2 + $0x1c0] sm:$0xff] 0.0
    %75 = vst [vmem:[#allocation2 + $0x1c8] sm:$0xff] 0.0
    %76 = vst [vmem:[#allocation2 + $0x1d0] sm:$0xff] 0.0
    %77 = vst [vmem:[#allocation2 + $0x1d8] sm:$0xff] 0.0
    %78 = vst [vmem:[#allocation2 + $0x1e0] sm:$0xff] 0.0
    %79 = vst [vmem:[#allocation2 + $0x1e8] sm:$0xff] 0.0
    %80 = vst [vmem:[#allocation2 + $0x1f0] sm:$0xff] 0.0
    %81 = vst [vmem:[#allocation2 + $0x1f8] sm:$0xff] 0.0
  $region13: #{bottleneck_forward.7} parent=0 // pred_fallthru
    _
  %v82 = vld [vmem:[#allocation2] sm:$0xff]
  %v83 = vld [vmem:[#allocation2 + $0x8] sm:$0xff]
  %v84 = vld [vmem:[#allocation2 + $0x10] sm:$0xff]
  %v85 = vld [vmem:[#allocation2 + $0x18] sm:$0xff]
  %v86 = vld [vmem:[#allocation2 + $0x20] sm:$0xff]
  %v87 = vld [vmem:[#allocation2 + $0x28] sm:$0xff]
  %v88 = vld [vmem:[#allocation2 + $0x30] sm:$0xff]
  %v89 = vld [vmem:[#allocation2 + $0x38] sm:$0xff]
  %v90 = vld [vmem:[#allocation2 + $0x40] sm:$0xff]
  %v91 = vld [vmem:[#allocation2 + $0x48] sm:$0xff]
  %v92 = vld [vmem:[#allocation2 + $0x50] sm:$0xff]
  %v93 = vld [vmem:[#allocation2 + $0x58] sm:$0xff]
  %v94 = vld [vmem:[#allocation2 + $0x60] sm:$0xff]
  %v95 = vld [vmem:[#allocation2 + $0x68] sm:$0xff]
  %v96 = vld [vmem:[#allocation2 + $0x70] sm:$0xff]
  %v97 = vld [vmem:[#allocation2 + $0x78] sm:$0xff]
  %v98 = vld [vmem:[#allocation2 + $0x80] sm:$0xff]
  %v99 = vld [vmem:[#allocation2 + $0x88] sm:$0xff]
  %v100 = vld [vmem:[#allocation2 + $0x90] sm:$0xff]
  %v101 = vld [vmem:[#allocation2 + $0x98] sm:$0xff]
  %v102 = vld [vmem:[#allocation2 + $0xa0] sm:$0xff]
  %v103 = vld [vmem:[#allocation2 + $0xa8] sm:$0xff]
  %v104 = vld [vmem:[#allocation2 + $0xb0] sm:$0xff]
  %v105 = vld [vmem:[#allocation2 + $0xb8] sm:$0xff]
  %v106 = vld [vmem:[#allocation2 + $0xc0] sm:$0xff]
  %v107 = vld [vmem:[#allocation2 + $0xc8] sm:$0xff]
  %v108 = vld [vmem:[#allocation2 + $0xd0] sm:$0xff]
  %v109 = vld [vmem:[#allocation2 + $0xd8] sm:$0xff]
  %v110 = vld [vmem:[#allocation2 + $0xe0] sm:$0xff]
  %v111 = vld [vmem:[#allocation2 + $0xe8] sm:$0xff]
  %v112 = vld [vmem:[#allocation2 + $0xf0] sm:$0xff]
  %v113 = vld [vmem:[#allocation2 + $0xf8] sm:$0xff]
  %v114 = vld [vmem:[#allocation2 + $0x100] sm:$0xff]
  %v115 = vld [vmem:[#allocation2 + $0x108] sm:$0xff]
  %v116 = vld [vmem:[#allocation2 + $0x110] sm:$0xff]
  %v117 = vld [vmem:[#allocation2 + $0x118] sm:$0xff]
  %v118 = vld [vmem:[#allocation2 + $0x120] sm:$0xff]
  %v119 = vld [vmem:[#allocation2 + $0x128] sm:$0xff]
  %v120 = vld [vmem:[#allocation2 + $0x130] sm:$0xff]
  %v121 = vld [vmem:[#allocation2 + $0x138] sm:$0xff]
  %v122 = vld [vmem:[#allocation2 + $0x140] sm:$0xff]
  %v123 = vld [vmem:[#allocation2 + $0x148] sm:$0xff]
  %v124 = vld [vmem:[#allocation2 + $0x150] sm:$0xff]
  %v125 = vld [vmem:[#allocation2 + $0x158] sm:$0xff]
  %v126 = vld [vmem:[#allocation2 + $0x160] sm:$0xff]
  %v127 = vld [vmem:[#allocation2 + $0x168] sm:$0xff]
  %v128 = vld [vmem:[#allocation2 + $0x170] sm:$0xff]
  %v129 = vld [vmem:[#allocation2 + $0x178] sm:$0xff]
  %v130 = vld [vmem:[#allocation2 + $0x180] sm:$0xff]
  %v131 = vld [vmem:[#allocation2 + $0x188] sm:$0xff]
  %v132 = vld [vmem:[#allocation2 + $0x190] sm:$0xff]
  %v133 = vld [vmem:[#allocation2 + $0x198] sm:$0xff]
  %v134 = vld [vmem:[#allocation2 + $0x1a0] sm:$0xff]
  %v135 = vld [vmem:[#allocation2 + $0x1a8] sm:$0xff]
  %v136 = vld [vmem:[#allocation2 + $0x1b0] sm:$0xff]
  %v137 = vld [vmem:[#allocation2 + $0x1b8] sm:$0xff]
  %v138 = vld [vmem:[#allocation2 + $0x1c0] sm:$0xff]
  %v139 = vld [vmem:[#allocation2 + $0x1c8] sm:$0xff]
  %v140 = vld [vmem:[#allocation2 + $0x1d0] sm:$0xff]
  %v141 = vld [vmem:[#allocation2 + $0x1d8] sm:$0xff]
  %v142 = vld [vmem:[#allocation2 + $0x1e0] sm:$0xff]
  %v143 = vld [vmem:[#allocation2 + $0x1e8] sm:$0xff]
  %v144 = vld [vmem:[#allocation2 + $0x1f0] sm:$0xff]
  %v145 = vld [vmem:[#allocation2 + $0x1f8] sm:$0xff]
  %v146 = vld [vmem:[%s0] sm:$0xf]
  %v147 = vld [vmem:[%s0 + $0x4] sm:$0xf]
  %v148 = vld [vmem:[%s0 + $0x8] sm:$0xf]
  %v149 = vld [vmem:[%s0 + $0xc] sm:$0xf]
  %v150 = vld [vmem:[%s0 + $0x10] sm:$0xf]
  %v151 = vld [vmem:[%s0 + $0x14] sm:$0xf]
  %v152 = vld [vmem:[%s0 + $0x18] sm:$0xf]
  %v153 = vld [vmem:[%s0 + $0x1c] sm:$0xf]
  %v154 = vld [vmem:[%s0 + $0x20] sm:$0xf]
  %v155 = vld [vmem:[%s0 + $0x24] sm:$0xf]
  %v156 = vld [vmem:[%s0 + $0x28] sm:$0xf]
  %v157 = vld [vmem:[%s0 + $0x2c] sm:$0xf]
  %v158 = vld [vmem:[%s0 + $0x30] sm:$0xf]
  %v159 = vld [vmem:[%s0 + $0x34] sm:$0xf]
  %v160 = vld [vmem:[%s0 + $0x38] sm:$0xf]
  %v161 = vld [vmem:[%s0 + $0x3c] sm:$0xf]
  %v162 = vld [vmem:[%s0 + $0x40] sm:$0xf]
  %v163 = vld [vmem:[%s0 + $0x44] sm:$0xf]
  %v164 = vld [vmem:[%s0 + $0x48] sm:$0xf]
  %v165 = vld [vmem:[%s0 + $0x4c] sm:$0xf]
  %v166 = vld [vmem:[%s0 + $0x50] sm:$0xf]
  %v167 = vld [vmem:[%s0 + $0x54] sm:$0xf]
  %v168 = vld [vmem:[%s0 + $0x58] sm:$0xf]
  %v169 = vld [vmem:[%s0 + $0x5c] sm:$0xf]
  %v170 = vld [vmem:[%s0 + $0x60] sm:$0xf]
  %v171 = vld [vmem:[%s0 + $0x64] sm:$0xf]
  %v172 = vld [vmem:[%s0 + $0x68] sm:$0xf]
  %v173 = vld [vmem:[%s0 + $0x6c] sm:$0xf]
  %v174 = vld [vmem:[%s0 + $0x70] sm:$0xf]
  %v175 = vld [vmem:[%s0 + $0x74] sm:$0xf]
  %v176 = vld [vmem:[%s0 + $0x78] sm:$0xf]
  %v177 = vld [vmem:[%s0 + $0x7c] sm:$0xf]
  %v178 = vld [vmem:[%s0 + $0x80] sm:$0xf]
  %v179 = vld [vmem:[%s0 + $0x84] sm:$0xf]
  %v180 = vld [vmem:[%s0 + $0x88] sm:$0xf]
  %v181 = vld [vmem:[%s0 + $0x8c] sm:$0xf]
  %v182 = vld [vmem:[%s0 + $0x90] sm:$0xf]
  %v183 = vld [vmem:[%s0 + $0x94] sm:$0xf]
  %v184 = vld [vmem:[%s0 + $0x98] sm:$0xf]
  %v185 = vld [vmem:[%s0 + $0x9c] sm:$0xf]
  %v186 = vld [vmem:[%s0 + $0xa0] sm:$0xf]
  %v187 = vld [vmem:[%s0 + $0xa4] sm:$0xf]
  %v188 = vld [vmem:[%s0 + $0xa8] sm:$0xf]
  %v189 = vld [vmem:[%s0 + $0xac] sm:$0xf]
  %v190 = vld [vmem:[%s0 + $0xb0] sm:$0xf]
  %v191 = vld [vmem:[%s0 + $0xb4] sm:$0xf]
  %v192 = vld [vmem:[%s0 + $0xb8] sm:$0xf]
  %v193 = vld [vmem:[%s0 + $0xbc] sm:$0xf]
  %v194 = vld [vmem:[%s0 + $0xc0] sm:$0xf]
  %v195 = vld [vmem:[%s0 + $0xc4] sm:$0xf]
  %v196 = vld [vmem:[%s0 + $0xc8] sm:$0xf]
  %v197 = vld [vmem:[%s0 + $0xcc] sm:$0xf]
  %v198 = vld [vmem:[%s0 + $0xd0] sm:$0xf]
  %v199 = vld [vmem:[%s0 + $0xd4] sm:$0xf]
  %v200 = vld [vmem:[%s0 + $0xd8] sm:$0xf]
  %v201 = vld [vmem:[%s0 + $0xdc] sm:$0xf]
  %v202 = vld [vmem:[%s0 + $0xe0] sm:$0xf]
  %v203 = vld [vmem:[%s0 + $0xe4] sm:$0xf]
  %v204 = vld [vmem:[%s0 + $0xe8] sm:$0xf]
  %v205 = vld [vmem:[%s0 + $0xec] sm:$0xf]
  %v206 = vld [vmem:[%s0 + $0xf0] sm:$0xf]
  %v207 = vld [vmem:[%s0 + $0xf4] sm:$0xf]
  %v208 = vld [vmem:[%s0 + $0xf8] sm:$0xf]
  %v209 = vld [vmem:[%s0 + $0xfc] sm:$0xf]
  %v210 = vld [vmem:[%s1] sm:$0xf]
  %v211 = vld [vmem:[%s1 + $0x4] sm:$0xf]
  %v212 = vld [vmem:[%s1 + $0x8] sm:$0xf]
  %v213 = vld [vmem:[%s1 + $0xc] sm:$0xf]
  %v214 = vld [vmem:[%s1 + $0x10] sm:$0xf]
  %v215 = vld [vmem:[%s1 + $0x14] sm:$0xf]
  %v216 = vld [vmem:[%s1 + $0x18] sm:$0xf]
  %v217 = vld [vmem:[%s1 + $0x1c] sm:$0xf]
  %v218 = vld [vmem:[%s1 + $0x20] sm:$0xf]
  %v219 = vld [vmem:[%s1 + $0x24] sm:$0xf]
  %v220 = vld [vmem:[%s1 + $0x28] sm:$0xf]
  %v221 = vld [vmem:[%s1 + $0x2c] sm:$0xf]
  %v222 = vld [vmem:[%s1 + $0x30] sm:$0xf]
  %v223 = vld [vmem:[%s1 + $0x34] sm:$0xf]
  %v224 = vld [vmem:[%s1 + $0x38] sm:$0xf]
  %v225 = vld [vmem:[%s1 + $0x3c] sm:$0xf]
  %v290 = vunpack.c.l.b16 %v146
  %v291 = vunpack.c.l.b16 %v147
  %v292 = vunpack.c.l.b16 %v148
  %v293 = vunpack.c.l.b16 %v149
  %v294 = vunpack.c.l.b16 %v150
  %v295 = vunpack.c.l.b16 %v151
  %v296 = vunpack.c.l.b16 %v152
  %v297 = vunpack.c.l.b16 %v153
  %v298 = vunpack.c.l.b16 %v154
  %v299 = vunpack.c.l.b16 %v155
  %v300 = vunpack.c.l.b16 %v156
  %v301 = vunpack.c.l.b16 %v157
  %v302 = vunpack.c.l.b16 %v158
  %v303 = vunpack.c.l.b16 %v159
  %v304 = vunpack.c.l.b16 %v160
  %v305 = vunpack.c.l.b16 %v161
  %v306 = vunpack.c.l.b16 %v162
  %v307 = vunpack.c.l.b16 %v163
  %v308 = vunpack.c.l.b16 %v164
  %v309 = vunpack.c.l.b16 %v165
  %v310 = vunpack.c.l.b16 %v166
  %v311 = vunpack.c.l.b16 %v167
  %v312 = vunpack.c.l.b16 %v168
  %v313 = vunpack.c.l.b16 %v169
  %v314 = vunpack.c.l.b16 %v170
  %v315 = vunpack.c.l.b16 %v171
  %v316 = vunpack.c.l.b16 %v172
  %v317 = vunpack.c.l.b16 %v173
  %v318 = vunpack.c.l.b16 %v174
  %v319 = vunpack.c.l.b16 %v175
  %v320 = vunpack.c.l.b16 %v176
  %v321 = vunpack.c.l.b16 %v177
  %v322 = vunpack.c.l.b16 %v178
  %v323 = vunpack.c.l.b16 %v179
  %v324 = vunpack.c.l.b16 %v180
  %v325 = vunpack.c.l.b16 %v181
  %v326 = vunpack.c.l.b16 %v182
  %v327 = vunpack.c.l.b16 %v183
  %v328 = vunpack.c.l.b16 %v184
  %v329 = vunpack.c.l.b16 %v185
  %v330 = vunpack.c.l.b16 %v186
  %v331 = vunpack.c.l.b16 %v187
  %v332 = vunpack.c.l.b16 %v188
  %v333 = vunpack.c.l.b16 %v189
  %v334 = vunpack.c.l.b16 %v190
  %v335 = vunpack.c.l.b16 %v191
  %v336 = vunpack.c.l.b16 %v192
  %v337 = vunpack.c.l.b16 %v193
  %v338 = vunpack.c.l.b16 %v194
  %v339 = vunpack.c.l.b16 %v195
  %v340 = vunpack.c.l.b16 %v196
  %v341 = vunpack.c.l.b16 %v197
  %v342 = vunpack.c.l.b16 %v198
  %v343 = vunpack.c.l.b16 %v199
  %v344 = vunpack.c.l.b16 %v200
  %v345 = vunpack.c.l.b16 %v201
  %v346 = vunpack.c.l.b16 %v202
  %v347 = vunpack.c.l.b16 %v203
  %v348 = vunpack.c.l.b16 %v204
  %v349 = vunpack.c.l.b16 %v205
  %v350 = vunpack.c.l.b16 %v206
  %v351 = vunpack.c.l.b16 %v207
  %v352 = vunpack.c.l.b16 %v208
  %v353 = vunpack.c.l.b16 %v209
  %v354 = vpack.c.b16 %v291, %v290
  %v355 = vpack.c.b16 %v293, %v292
  %v356 = vpack.c.b16 %v295, %v294
  %v357 = vpack.c.b16 %v297, %v296
  %v358 = vpack.c.b16 %v299, %v298
  %v359 = vpack.c.b16 %v301, %v300
  %v360 = vpack.c.b16 %v303, %v302
  %v361 = vpack.c.b16 %v305, %v304
  %v362 = vpack.c.b16 %v307, %v306
  %v363 = vpack.c.b16 %v309, %v308
  %v364 = vpack.c.b16 %v311, %v310
  %v365 = vpack.c.b16 %v313, %v312
  %v366 = vpack.c.b16 %v315, %v314
  %v367 = vpack.c.b16 %v317, %v316
  %v368 = vpack.c.b16 %v319, %v318
  %v369 = vpack.c.b16 %v321, %v320
  %v370 = vpack.c.b16 %v323, %v322
  %v371 = vpack.c.b16 %v325, %v324
  %v372 = vpack.c.b16 %v327, %v326
  %v373 = vpack.c.b16 %v329, %v328
  %v374 = vpack.c.b16 %v331, %v330
  %v375 = vpack.c.b16 %v333, %v332
  %v376 = vpack.c.b16 %v335, %v334
  %v377 = vpack.c.b16 %v337, %v336
  %v378 = vpack.c.b16 %v339, %v338
  %v379 = vpack.c.b16 %v341, %v340
  %v380 = vpack.c.b16 %v343, %v342
  %v381 = vpack.c.b16 %v345, %v344
  %v382 = vpack.c.b16 %v347, %v346
  %v383 = vpack.c.b16 %v349, %v348
  %v384 = vpack.c.b16 %v351, %v350
  %v385 = vpack.c.b16 %v353, %v352
  %v434 = vunpack.c.l.b16 %v210
  %v435 = vunpack.c.l.b16 %v211
  %v436 = vunpack.c.l.b16 %v212
  %v437 = vunpack.c.l.b16 %v213
  %v438 = vunpack.c.l.b16 %v214
  %v439 = vunpack.c.l.b16 %v215
  %v440 = vunpack.c.l.b16 %v216
  %v441 = vunpack.c.l.b16 %v217
  %v442 = vunpack.c.l.b16 %v218
  %v443 = vunpack.c.l.b16 %v219
  %v444 = vunpack.c.l.b16 %v220
  %v445 = vunpack.c.l.b16 %v221
  %v446 = vunpack.c.l.b16 %v222
  %v447 = vunpack.c.l.b16 %v223
  %v448 = vunpack.c.l.b16 %v224
  %v449 = vunpack.c.l.b16 %v225
  %v450 = vpack.c.b16 %v435, %v434
  %v451 = vpack.c.b16 %v437, %v436
  %v452 = vpack.c.b16 %v439, %v438
  %v453 = vpack.c.b16 %v441, %v440
  %v454 = vpack.c.b16 %v443, %v442
  %v455 = vpack.c.b16 %v445, %v444
  %v456 = vpack.c.b16 %v447, %v446
  %v457 = vpack.c.b16 %v449, %v448
  %466 = vmatprep.subr.bf16.mxu0 0
  %467 = vmatpush1.bf16.msra.mxu0 %v457
  %468 = vmatprep.subr.bf16.mxu0 0
  %469 = vmatpush1.bf16.msra.mxu0 %v456
  %470 = vmatprep.subr.bf16.mxu0 0
  %471 = vmatpush1.bf16.msra.mxu0 %v455
  %472 = vmatprep.subr.bf16.mxu0 0
  %473 = vmatpush1.bf16.msra.mxu0 %v454
  %474 = vmatprep.subr.bf16.mxu0 0
  %475 = vmatpush1.bf16.msra.mxu0 %v453
  %476 = vmatprep.subr.bf16.mxu0 0
  %477 = vmatpush1.bf16.msra.mxu0 %v452
  %478 = vmatprep.subr.bf16.mxu0 0
  %479 = vmatpush1.bf16.msra.mxu0 %v451
  %480 = vmatprep.subr.bf16.mxu0 0
  %481 = vmatpush1.bf16.msra.mxu0 %v450
  %482 = vmatprep.subr.bf16.mxu0 0
  %483 = vmatpush2.bf16.msra.mxu0 0
  %484 = vmatprep.subr.bf16.mxu0 0
  %485 = vmatpush2.bf16.msra.mxu0 0
  %486 = vmatprep.subr.bf16.mxu0 0
  %487 = vmatpush2.bf16.msra.mxu0 0
  %488 = vmatprep.subr.bf16.mxu0 0
  %489 = vmatpush2.bf16.msra.mxu0 0
  %490 = vmatprep.subr.bf16.mxu0 0
  %491 = vmatpush2.bf16.msra.mxu0 0
  %492 = vmatprep.subr.bf16.mxu0 0
  %493 = vmatpush2.bf16.msra.mxu0 0
  %494 = vmatprep.subr.bf16.mxu0 0
  %495 = vmatpush2.bf16.msra.mxu0 0
  %496 = vmatprep.subr.bf16.mxu0 0
  %497 = vmatpush2.bf16.msra.mxu0 0
  %498 = vmatprep.mubr.bf16.mxu0 0
  %499 = vmatmul.mubr.bf16.gmra.mxu0 %v354
  %v500 = vpop.f32.mrf.mxu0
  %v501 = vadd.f32 0.0, %v500
  %v502 = vpop.f32.mrf.mxu0
  %v503 = vpop.f32.mrf.mxu0
  %v504 = vadd.f32 0.0, %v503
  %v505 = vpop.f32.mrf.mxu0
  %506 = vmatprep.mubr.bf16.mxu0 0
  %507 = vmatmul.mubr.bf16.gmra.mxu0 %v355
  %v508 = vpop.f32.mrf.mxu0
  %v509 = vadd.f32 0.0, %v508
  %v510 = vpop.f32.mrf.mxu0
  %v511 = vpop.f32.mrf.mxu0
  %v512 = vadd.f32 0.0, %v511
  %v513 = vpop.f32.mrf.mxu0
  %514 = vmatprep.mubr.bf16.mxu0 0
  %515 = vmatmul.mubr.bf16.gmra.mxu0 %v356
  %v516 = vpop.f32.mrf.mxu0
  %v517 = vadd.f32 0.0, %v516
  %v518 = vpop.f32.mrf.mxu0
  %v519 = vpop.f32.mrf.mxu0
  %v520 = vadd.f32 0.0, %v519
  %v521 = vpop.f32.mrf.mxu0
  %522 = vmatprep.mubr.bf16.mxu0 0
  %523 = vmatmul.mubr.bf16.gmra.mxu0 %v357
  %v524 = vpop.f32.mrf.mxu0
  %v525 = vadd.f32 0.0, %v524
  %v526 = vpop.f32.mrf.mxu0
  %v527 = vpop.f32.mrf.mxu0
  %v528 = vadd.f32 0.0, %v527
  %v529 = vpop.f32.mrf.mxu0
  %530 = vmatprep.mubr.bf16.mxu0 0
  %531 = vmatmul.mubr.bf16.gmra.mxu0 %v358
  %v532 = vpop.f32.mrf.mxu0
  %v533 = vadd.f32 0.0, %v532
  %v534 = vpop.f32.mrf.mxu0
  %v535 = vpop.f32.mrf.mxu0
  %v536 = vadd.f32 0.0, %v535
  %v537 = vpop.f32.mrf.mxu0
  %538 = vmatprep.mubr.bf16.mxu0 0
  %539 = vmatmul.mubr.bf16.gmra.mxu0 %v359
  %v540 = vpop.f32.mrf.mxu0
  %v541 = vadd.f32 0.0, %v540
  %v542 = vpop.f32.mrf.mxu0
  %v543 = vpop.f32.mrf.mxu0
  %v544 = vadd.f32 0.0, %v543
  %v545 = vpop.f32.mrf.mxu0
  %546 = vmatprep.mubr.bf16.mxu0 0
  %547 = vmatmul.mubr.bf16.gmra.mxu0 %v360
  %v548 = vpop.f32.mrf.mxu0
  %v549 = vadd.f32 0.0, %v548
  %v550 = vpop.f32.mrf.mxu0
  %v551 = vpop.f32.mrf.mxu0
  %v552 = vadd.f32 0.0, %v551
  %v553 = vpop.f32.mrf.mxu0
  %554 = vmatprep.mubr.bf16.mxu0 0
  %555 = vmatmul.mubr.bf16.gmra.mxu0 %v361
  %v556 = vpop.f32.mrf.mxu0
  %v557 = vadd.f32 0.0, %v556
  %v558 = vpop.f32.mrf.mxu0
  %v559 = vpop.f32.mrf.mxu0
  %v560 = vadd.f32 0.0, %v559
  %v561 = vpop.f32.mrf.mxu0
  %562 = vmatprep.mubr.bf16.mxu0 0
  %563 = vmatmul.mubr.bf16.gmra.mxu0 %v362
  %v564 = vpop.f32.mrf.mxu0
  %v565 = vadd.f32 0.0, %v564
  %v566 = vpop.f32.mrf.mxu0
  %v567 = vpop.f32.mrf.mxu0
  %v568 = vadd.f32 0.0, %v567
  %v569 = vpop.f32.mrf.mxu0
  %570 = vmatprep.mubr.bf16.mxu0 0
  %571 = vmatmul.mubr.bf16.gmra.mxu0 %v363
  %v572 = vpop.f32.mrf.mxu0
  %v573 = vadd.f32 0.0, %v572
  %v574 = vpop.f32.mrf.mxu0
  %v575 = vpop.f32.mrf.mxu0
  %v576 = vadd.f32 0.0, %v575
  %v577 = vpop.f32.mrf.mxu0
  %578 = vmatprep.mubr.bf16.mxu0 0
  %579 = vmatmul.mubr.bf16.gmra.mxu0 %v364
  %v580 = vpop.f32.mrf.mxu0
  %v581 = vadd.f32 0.0, %v580
  %v582 = vpop.f32.mrf.mxu0
  %v583 = vpop.f32.mrf.mxu0
  %v584 = vadd.f32 0.0, %v583
  %v585 = vpop.f32.mrf.mxu0
  %586 = vmatprep.mubr.bf16.mxu0 0
  %587 = vmatmul.mubr.bf16.gmra.mxu0 %v365
  %v588 = vpop.f32.mrf.mxu0
  %v589 = vadd.f32 0.0, %v588
  %v590 = vpop.f32.mrf.mxu0
  %v591 = vpop.f32.mrf.mxu0
  %v592 = vadd.f32 0.0, %v591
  %v593 = vpop.f32.mrf.mxu0
  %594 = vmatprep.mubr.bf16.mxu0 0
  %595 = vmatmul.mubr.bf16.gmra.mxu0 %v366
  %v596 = vpop.f32.mrf.mxu0
  %v597 = vadd.f32 0.0, %v596
  %v598 = vpop.f32.mrf.mxu0
  %v599 = vpop.f32.mrf.mxu0
  %v600 = vadd.f32 0.0, %v599
  %v601 = vpop.f32.mrf.mxu0
  %602 = vmatprep.mubr.bf16.mxu0 0
  %603 = vmatmul.mubr.bf16.gmra.mxu0 %v367
  %v604 = vpop.f32.mrf.mxu0
  %v605 = vadd.f32 0.0, %v604
  %v606 = vpop.f32.mrf.mxu0
  %v607 = vpop.f32.mrf.mxu0
  %v608 = vadd.f32 0.0, %v607
  %v609 = vpop.f32.mrf.mxu0
  %610 = vmatprep.mubr.bf16.mxu0 0
  %611 = vmatmul.mubr.bf16.gmra.mxu0 %v368
  %v612 = vpop.f32.mrf.mxu0
  %v613 = vadd.f32 0.0, %v612
  %v614 = vpop.f32.mrf.mxu0
  %v615 = vpop.f32.mrf.mxu0
  %v616 = vadd.f32 0.0, %v615
  %v617 = vpop.f32.mrf.mxu0
  %618 = vmatprep.mubr.bf16.mxu0 0
  %619 = vmatmul.mubr.bf16.gmra.mxu0 %v369
  %v620 = vpop.f32.mrf.mxu0
  %v621 = vadd.f32 0.0, %v620
  %v622 = vpop.f32.mrf.mxu0
  %v623 = vpop.f32.mrf.mxu0
  %v624 = vadd.f32 0.0, %v623
  %v625 = vpop.f32.mrf.mxu0
  %626 = vmatprep.mubr.bf16.mxu0 0
  %627 = vmatmul.mubr.bf16.gmra.mxu0 %v370
  %v628 = vpop.f32.mrf.mxu0
  %v629 = vadd.f32 0.0, %v628
  %v630 = vpop.f32.mrf.mxu0
  %v631 = vpop.f32.mrf.mxu0
  %v632 = vadd.f32 0.0, %v631
  %v633 = vpop.f32.mrf.mxu0
  %634 = vmatprep.mubr.bf16.mxu0 0
  %635 = vmatmul.mubr.bf16.gmra.mxu0 %v371
  %v636 = vpop.f32.mrf.mxu0
  %v637 = vadd.f32 0.0, %v636
  %v638 = vpop.f32.mrf.mxu0
  %v639 = vpop.f32.mrf.mxu0
  %v640 = vadd.f32 0.0, %v639
  %v641 = vpop.f32.mrf.mxu0
  %642 = vmatprep.mubr.bf16.mxu0 0
  %643 = vmatmul.mubr.bf16.gmra.mxu0 %v372
  %v644 = vpop.f32.mrf.mxu0
  %v645 = vadd.f32 0.0, %v644
  %v646 = vpop.f32.mrf.mxu0
  %v647 = vpop.f32.mrf.mxu0
  %v648 = vadd.f32 0.0, %v647
  %v649 = vpop.f32.mrf.mxu0
  %650 = vmatprep.mubr.bf16.mxu0 0
  %651 = vmatmul.mubr.bf16.gmra.mxu0 %v373
  %v652 = vpop.f32.mrf.mxu0
  %v653 = vadd.f32 0.0, %v652
  %v654 = vpop.f32.mrf.mxu0
  %v655 = vpop.f32.mrf.mxu0
  %v656 = vadd.f32 0.0, %v655
  %v657 = vpop.f32.mrf.mxu0
  %658 = vmatprep.mubr.bf16.mxu0 0
  %659 = vmatmul.mubr.bf16.gmra.mxu0 %v374
  %v660 = vpop.f32.mrf.mxu0
  %v661 = vadd.f32 0.0, %v660
  %v662 = vpop.f32.mrf.mxu0
  %v663 = vpop.f32.mrf.mxu0
  %v664 = vadd.f32 0.0, %v663
  %v665 = vpop.f32.mrf.mxu0
  %666 = vmatprep.mubr.bf16.mxu0 0
  %667 = vmatmul.mubr.bf16.gmra.mxu0 %v375
  %v668 = vpop.f32.mrf.mxu0
  %v669 = vadd.f32 0.0, %v668
  %v670 = vpop.f32.mrf.mxu0
  %v671 = vpop.f32.mrf.mxu0
  %v672 = vadd.f32 0.0, %v671
  %v673 = vpop.f32.mrf.mxu0
  %674 = vmatprep.mubr.bf16.mxu0 0
  %675 = vmatmul.mubr.bf16.gmra.mxu0 %v376
  %v676 = vpop.f32.mrf.mxu0
  %v677 = vadd.f32 0.0, %v676
  %v678 = vpop.f32.mrf.mxu0
  %v679 = vpop.f32.mrf.mxu0
  %v680 = vadd.f32 0.0, %v679
  %v681 = vpop.f32.mrf.mxu0
  %682 = vmatprep.mubr.bf16.mxu0 0
  %683 = vmatmul.mubr.bf16.gmra.mxu0 %v377
  %v684 = vpop.f32.mrf.mxu0
  %v685 = vadd.f32 0.0, %v684
  %v686 = vpop.f32.mrf.mxu0
  %v687 = vpop.f32.mrf.mxu0
  %v688 = vadd.f32 0.0, %v687
  %v689 = vpop.f32.mrf.mxu0
  %690 = vmatprep.mubr.bf16.mxu0 0
  %691 = vmatmul.mubr.bf16.gmra.mxu0 %v378
  %v692 = vpop.f32.mrf.mxu0
  %v693 = vadd.f32 0.0, %v692
  %v694 = vpop.f32.mrf.mxu0
  %v695 = vpop.f32.mrf.mxu0
  %v696 = vadd.f32 0.0, %v695
  %v697 = vpop.f32.mrf.mxu0
  %698 = vmatprep.mubr.bf16.mxu0 0
  %699 = vmatmul.mubr.bf16.gmra.mxu0 %v379
  %v700 = vpop.f32.mrf.mxu0
  %v701 = vadd.f32 0.0, %v700
  %v702 = vpop.f32.mrf.mxu0
  %v703 = vpop.f32.mrf.mxu0
  %v704 = vadd.f32 0.0, %v703
  %v705 = vpop.f32.mrf.mxu0
  %706 = vmatprep.mubr.bf16.mxu0 0
  %707 = vmatmul.mubr.bf16.gmra.mxu0 %v380
  %v708 = vpop.f32.mrf.mxu0
  %v709 = vadd.f32 0.0, %v708
  %v710 = vpop.f32.mrf.mxu0
  %v711 = vpop.f32.mrf.mxu0
  %v712 = vadd.f32 0.0, %v711
  %v713 = vpop.f32.mrf.mxu0
  %714 = vmatprep.mubr.bf16.mxu0 0
  %715 = vmatmul.mubr.bf16.gmra.mxu0 %v381
  %v716 = vpop.f32.mrf.mxu0
  %v717 = vadd.f32 0.0, %v716
  %v718 = vpop.f32.mrf.mxu0
  %v719 = vpop.f32.mrf.mxu0
  %v720 = vadd.f32 0.0, %v719
  %v721 = vpop.f32.mrf.mxu0
  %722 = vmatprep.mubr.bf16.mxu0 0
  %723 = vmatmul.mubr.bf16.gmra.mxu0 %v382
  %v724 = vpop.f32.mrf.mxu0
  %v725 = vadd.f32 0.0, %v724
  %v726 = vpop.f32.mrf.mxu0
  %v727 = vpop.f32.mrf.mxu0
  %v728 = vadd.f32 0.0, %v727
  %v729 = vpop.f32.mrf.mxu0
  %730 = vmatprep.mubr.bf16.mxu0 0
  %731 = vmatmul.mubr.bf16.gmra.mxu0 %v383
  %v732 = vpop.f32.mrf.mxu0
  %v733 = vadd.f32 0.0, %v732
  %v734 = vpop.f32.mrf.mxu0
  %v735 = vpop.f32.mrf.mxu0
  %v736 = vadd.f32 0.0, %v735
  %v737 = vpop.f32.mrf.mxu0
  %738 = vmatprep.mubr.bf16.mxu0 0
  %739 = vmatmul.mubr.bf16.gmra.mxu0 %v384
  %v740 = vpop.f32.mrf.mxu0
  %v741 = vadd.f32 0.0, %v740
  %v742 = vpop.f32.mrf.mxu0
  %v743 = vpop.f32.mrf.mxu0
  %v744 = vadd.f32 0.0, %v743
  %v745 = vpop.f32.mrf.mxu0
  %746 = vmatprep.mubr.bf16.mxu0 0
  %747 = vmatmul.mubr.bf16.gmra.mxu0 %v385
  %v748 = vpop.f32.mrf.mxu0
  %v749 = vadd.f32 0.0, %v748
  %v750 = vpop.f32.mrf.mxu0
  %v751 = vpop.f32.mrf.mxu0
  %v752 = vadd.f32 0.0, %v751
  %v753 = vpop.f32.mrf.mxu0
  %754 = vdwg.mxu0
  %v755 = vadd.f32 %v82, %v501
  %v756 = vadd.f32 %v83, %v504
  %v757 = vadd.f32 %v84, %v509
  %v758 = vadd.f32 %v85, %v512
  %v759 = vadd.f32 %v86, %v517
  %v760 = vadd.f32 %v87, %v520
  %v761 = vadd.f32 %v88, %v525
  %v762 = vadd.f32 %v89, %v528
  %v763 = vadd.f32 %v90, %v533
  %v764 = vadd.f32 %v91, %v536
  %v765 = vadd.f32 %v92, %v541
  %v766 = vadd.f32 %v93, %v544
  %v767 = vadd.f32 %v94, %v549
  %v768 = vadd.f32 %v95, %v552
  %v769 = vadd.f32 %v96, %v557
  %v770 = vadd.f32 %v97, %v560
  %v771 = vadd.f32 %v98, %v565
  %v772 = vadd.f32 %v99, %v568
  %v773 = vadd.f32 %v100, %v573
  %v774 = vadd.f32 %v101, %v576
  %v775 = vadd.f32 %v102, %v581
  %v776 = vadd.f32 %v103, %v584
  %v777 = vadd.f32 %v104, %v589
  %v778 = vadd.f32 %v105, %v592
  %v779 = vadd.f32 %v106, %v597
  %v780 = vadd.f32 %v107, %v600
  %v781 = vadd.f32 %v108, %v605
  %v782 = vadd.f32 %v109, %v608
  %v783 = vadd.f32 %v110, %v613
  %v784 = vadd.f32 %v111, %v616
  %v785 = vadd.f32 %v112, %v621
  %v786 = vadd.f32 %v113, %v624
  %v787 = vadd.f32 %v114, %v629
  %v788 = vadd.f32 %v115, %v632
  %v789 = vadd.f32 %v116, %v637
  %v790 = vadd.f32 %v117, %v640
  %v791 = vadd.f32 %v118, %v645
  %v792 = vadd.f32 %v119, %v648
  %v793 = vadd.f32 %v120, %v653
  %v794 = vadd.f32 %v121, %v656
  %v795 = vadd.f32 %v122, %v661
  %v796 = vadd.f32 %v123, %v664
  %v797 = vadd.f32 %v124, %v669
  %v798 = vadd.f32 %v125, %v672
  %v799 = vadd.f32 %v126, %v677
  %v800 = vadd.f32 %v127, %v680
  %v801 = vadd.f32 %v128, %v685
  %v802 = vadd.f32 %v129, %v688
  %v803 = vadd.f32 %v130, %v693
  %v804 = vadd.f32 %v131, %v696
  %v805 = vadd.f32 %v132, %v701
  %v806 = vadd.f32 %v133, %v704
  %v807 = vadd.f32 %v134, %v709
  %v808 = vadd.f32 %v135, %v712
  %v809 = vadd.f32 %v136, %v717
  %v810 = vadd.f32 %v137, %v720
  %v811 = vadd.f32 %v138, %v725
  %v812 = vadd.f32 %v139, %v728
  %v813 = vadd.f32 %v140, %v733
  %v814 = vadd.f32 %v141, %v736
  %v815 = vadd.f32 %v142, %v741
  %v816 = vadd.f32 %v143, %v744
  %v817 = vadd.f32 %v144, %v749
  %v818 = vadd.f32 %v145, %v752
  %819 = vst [vmem:[#allocation2] sm:$0xff] %v755
  %820 = vst [vmem:[#allocation2 + $0x8] sm:$0xff] %v756
  %821 = vst [vmem:[#allocation2 + $0x10] sm:$0xff] %v757
  %822 = vst [vmem:[#allocation2 + $0x18] sm:$0xff] %v758
  %823 = vst [vmem:[#allocation2 + $0x20] sm:$0xff] %v759
  %824 = vst [vmem:[#allocation2 + $0x28] sm:$0xff] %v760
  %825 = vst [vmem:[#allocation2 + $0x30] sm:$0xff] %v761
  %826 = vst [vmem:[#allocation2 + $0x38] sm:$0xff] %v762
  %827 = vst [vmem:[#allocation2 + $0x40] sm:$0xff] %v763
  %828 = vst [vmem:[#allocation2 + $0x48] sm:$0xff] %v764
  %829 = vst [vmem:[#allocation2 + $0x50] sm:$0xff] %v765
  %830 = vst [vmem:[#allocation2 + $0x58] sm:$0xff] %v766
  %831 = vst [vmem:[#allocation2 + $0x60] sm:$0xff] %v767
  %832 = vst [vmem:[#allocation2 + $0x68] sm:$0xff] %v768
  %833 = vst [vmem:[#allocation2 + $0x70] sm:$0xff] %v769
  %834 = vst [vmem:[#allocation2 + $0x78] sm:$0xff] %v770
  %835 = vst [vmem:[#allocation2 + $0x80] sm:$0xff] %v771
  %836 = vst [vmem:[#allocation2 + $0x88] sm:$0xff] %v772
  %837 = vst [vmem:[#allocation2 + $0x90] sm:$0xff] %v773
  %838 = vst [vmem:[#allocation2 + $0x98] sm:$0xff] %v774
  %839 = vst [vmem:[#allocation2 + $0xa0] sm:$0xff] %v775
  %840 = vst [vmem:[#allocation2 + $0xa8] sm:$0xff] %v776
  %841 = vst [vmem:[#allocation2 + $0xb0] sm:$0xff] %v777
  %842 = vst [vmem:[#allocation2 + $0xb8] sm:$0xff] %v778
  %843 = vst [vmem:[#allocation2 + $0xc0] sm:$0xff] %v779
  %844 = vst [vmem:[#allocation2 + $0xc8] sm:$0xff] %v780
  %845 = vst [vmem:[#allocation2 + $0xd0] sm:$0xff] %v781
  %846 = vst [vmem:[#allocation2 + $0xd8] sm:$0xff] %v782
  %847 = vst [vmem:[#allocation2 + $0xe0] sm:$0xff] %v783
  %848 = vst [vmem:[#allocation2 + $0xe8] sm:$0xff] %v784
  %849 = vst [vmem:[#allocation2 + $0xf0] sm:$0xff] %v785
  %850 = vst [vmem:[#allocation2 + $0xf8] sm:$0xff] %v786
  %851 = vst [vmem:[#allocation2 + $0x100] sm:$0xff] %v787
  %852 = vst [vmem:[#allocation2 + $0x108] sm:$0xff] %v788
  %853 = vst [vmem:[#allocation2 + $0x110] sm:$0xff] %v789
  %854 = vst [vmem:[#allocation2 + $0x118] sm:$0xff] %v790
  %855 = vst [vmem:[#allocation2 + $0x120] sm:$0xff] %v791
  %856 = vst [vmem:[#allocation2 + $0x128] sm:$0xff] %v792
  %857 = vst [vmem:[#allocation2 + $0x130] sm:$0xff] %v793
  %858 = vst [vmem:[#allocation2 + $0x138] sm:$0xff] %v794
  %859 = vst [vmem:[#allocation2 + $0x140] sm:$0xff] %v795
  %860 = vst [vmem:[#allocation2 + $0x148] sm:$0xff] %v796
  %861 = vst [vmem:[#allocation2 + $0x150] sm:$0xff] %v797
  %862 = vst [vmem:[#allocation2 + $0x158] sm:$0xff] %v798
  %863 = vst [vmem:[#allocation2 + $0x160] sm:$0xff] %v799
  %864 = vst [vmem:[#allocation2 + $0x168] sm:$0xff] %v800
  %865 = vst [vmem:[#allocation2 + $0x170] sm:$0xff] %v801
  %866 = vst [vmem:[#allocation2 + $0x178] sm:$0xff] %v802
  %867 = vst [vmem:[#allocation2 + $0x180] sm:$0xff] %v803
  %868 = vst [vmem:[#allocation2 + $0x188] sm:$0xff] %v804
  %869 = vst [vmem:[#allocation2 + $0x190] sm:$0xff] %v805
  %870 = vst [vmem:[#allocation2 + $0x198] sm:$0xff] %v806
  %871 = vst [vmem:[#allocation2 + $0x1a0] sm:$0xff] %v807
  %872 = vst [vmem:[#allocation2 + $0x1a8] sm:$0xff] %v808
  %873 = vst [vmem:[#allocation2 + $0x1b0] sm:$0xff] %v809
  %874 = vst [vmem:[#allocation2 + $0x1b8] sm:$0xff] %v810
  %875 = vst [vmem:[#allocation2 + $0x1c0] sm:$0xff] %v811
  %876 = vst [vmem:[#allocation2 + $0x1c8] sm:$0xff] %v812
  %877 = vst [vmem:[#allocation2 + $0x1d0] sm:$0xff] %v813
  %878 = vst [vmem:[#allocation2 + $0x1d8] sm:$0xff] %v814
  %879 = vst [vmem:[#allocation2 + $0x1e0] sm:$0xff] %v815
  %880 = vst [vmem:[#allocation2 + $0x1e8] sm:$0xff] %v816
  %881 = vst [vmem:[#allocation2 + $0x1f0] sm:$0xff] %v817
  %882 = vst [vmem:[#allocation2 + $0x1f8] sm:$0xff] %v818
  // Predicated region
  $region14: #{bottleneck_forward.7} parent=0 // pred_check
    %p883 = pneg %p14
  $region15: #{bottleneck_forward.7} parent=0 // pred_check_branch
    %885 = sbr.rel (%p883) target = $region17
  $region16: #{bottleneck_forward.7} parent=0 // pred_region
    %v886 = vld [vmem:[#allocation2] sm:$0xff]
    %v887 = vld [vmem:[#allocation2 + $0x8] sm:$0xff]
    %v888 = vld [vmem:[#allocation2 + $0x10] sm:$0xff]
    %v889 = vld [vmem:[#allocation2 + $0x18] sm:$0xff]
    %v890 = vld [vmem:[#allocation2 + $0x20] sm:$0xff]
    %v891 = vld [vmem:[#allocation2 + $0x28] sm:$0xff]
    %v892 = vld [vmem:[#allocation2 + $0x30] sm:$0xff]
    %v893 = vld [vmem:[#allocation2 + $0x38] sm:$0xff]
    %v894 = vld [vmem:[#allocation2 + $0x40] sm:$0xff]
    %v895 = vld [vmem:[#allocation2 + $0x48] sm:$0xff]
    %v896 = vld [vmem:[#allocation2 + $0x50] sm:$0xff]
    %v897 = vld [vmem:[#allocation2 + $0x58] sm:$0xff]
    %v898 = vld [vmem:[#allocation2 + $0x60] sm:$0xff]
    %v899 = vld [vmem:[#allocation2 + $0x68] sm:$0xff]
    %v900 = vld [vmem:[#allocation2 + $0x70] sm:$0xff]
    %v901 = vld [vmem:[#allocation2 + $0x78] sm:$0xff]
    %v902 = vld [vmem:[#allocation2 + $0x80] sm:$0xff]
    %v903 = vld [vmem:[#allocation2 + $0x88] sm:$0xff]
    %v904 = vld [vmem:[#allocation2 + $0x90] sm:$0xff]
    %v905 = vld [vmem:[#allocation2 + $0x98] sm:$0xff]
    %v906 = vld [vmem:[#allocation2 + $0xa0] sm:$0xff]
    %v907 = vld [vmem:[#allocation2 + $0xa8] sm:$0xff]
    %v908 = vld [vmem:[#allocation2 + $0xb0] sm:$0xff]
    %v909 = vld [vmem:[#allocation2 + $0xb8] sm:$0xff]
    %v910 = vld [vmem:[#allocation2 + $0xc0] sm:$0xff]
    %v911 = vld [vmem:[#allocation2 + $0xc8] sm:$0xff]
    %v912 = vld [vmem:[#allocation2 + $0xd0] sm:$0xff]
    %v913 = vld [vmem:[#allocation2 + $0xd8] sm:$0xff]
    %v914 = vld [vmem:[#allocation2 + $0xe0] sm:$0xff]
    %v915 = vld [vmem:[#allocation2 + $0xe8] sm:$0xff]
    %v916 = vld [vmem:[#allocation2 + $0xf0] sm:$0xff]
    %v917 = vld [vmem:[#allocation2 + $0xf8] sm:$0xff]
    %v918 = vld [vmem:[#allocation2 + $0x100] sm:$0xff]
    %v919 = vld [vmem:[#allocation2 + $0x108] sm:$0xff]
    %v920 = vld [vmem:[#allocation2 + $0x110] sm:$0xff]
    %v921 = vld [vmem:[#allocation2 + $0x118] sm:$0xff]
    %v922 = vld [vmem:[#allocation2 + $0x120] sm:$0xff]
    %v923 = vld [vmem:[#allocation2 + $0x128] sm:$0xff]
    %v924 = vld [vmem:[#allocation2 + $0x130] sm:$0xff]
    %v925 = vld [vmem:[#allocation2 + $0x138] sm:$0xff]
    %v926 = vld [vmem:[#allocation2 + $0x140] sm:$0xff]
    %v927 = vld [vmem:[#allocation2 + $0x148] sm:$0xff]
    %v928 = vld [vmem:[#allocation2 + $0x150] sm:$0xff]
    %v929 = vld [vmem:[#allocation2 + $0x158] sm:$0xff]
    %v930 = vld [vmem:[#allocation2 + $0x160] sm:$0xff]
    %v931 = vld [vmem:[#allocation2 + $0x168] sm:$0xff]
    %v932 = vld [vmem:[#allocation2 + $0x170] sm:$0xff]
    %v933 = vld [vmem:[#allocation2 + $0x178] sm:$0xff]
    %v934 = vld [vmem:[#allocation2 + $0x180] sm:$0xff]
    %v935 = vld [vmem:[#allocation2 + $0x188] sm:$0xff]
    %v936 = vld [vmem:[#allocation2 + $0x190] sm:$0xff]
    %v937 = vld [vmem:[#allocation2 + $0x198] sm:$0xff]
    %v938 = vld [vmem:[#allocation2 + $0x1a0] sm:$0xff]
    %v939 = vld [vmem:[#allocation2 + $0x1a8] sm:$0xff]
    %v940 = vld [vmem:[#allocation2 + $0x1b0] sm:$0xff]
    %v941 = vld [vmem:[#allocation2 + $0x1b8] sm:$0xff]
    %v942 = vld [vmem:[#allocation2 + $0x1c0] sm:$0xff]
    %v943 = vld [vmem:[#allocation2 + $0x1c8] sm:$0xff]
    %v944 = vld [vmem:[#allocation2 + $0x1d0] sm:$0xff]
    %v945 = vld [vmem:[#allocation2 + $0x1d8] sm:$0xff]
    %v946 = vld [vmem:[#allocation2 + $0x1e0] sm:$0xff]
    %v947 = vld [vmem:[#allocation2 + $0x1e8] sm:$0xff]
    %v948 = vld [vmem:[#allocation2 + $0x1f0] sm:$0xff]
    %v949 = vld [vmem:[#allocation2 + $0x1f8] sm:$0xff]
    %v950 = vpack.c.bf16 %v887, %v886
    %v951 = vpack.c.bf16 %v889, %v888
    %v952 = vpack.c.bf16 %v891, %v890
    %v953 = vpack.c.bf16 %v893, %v892
    %v954 = vpack.c.bf16 %v895, %v894
    %v955 = vpack.c.bf16 %v897, %v896
    %v956 = vpack.c.bf16 %v899, %v898
    %v957 = vpack.c.bf16 %v901, %v900
    %v958 = vpack.c.bf16 %v903, %v902
    %v959 = vpack.c.bf16 %v905, %v904
    %v960 = vpack.c.bf16 %v907, %v906
    %v961 = vpack.c.bf16 %v909, %v908
    %v962 = vpack.c.bf16 %v911, %v910
    %v963 = vpack.c.bf16 %v913, %v912
    %v964 = vpack.c.bf16 %v915, %v914
    %v965 = vpack.c.bf16 %v917, %v916
    %v966 = vpack.c.bf16 %v919, %v918
    %v967 = vpack.c.bf16 %v921, %v920
    %v968 = vpack.c.bf16 %v923, %v922
    %v969 = vpack.c.bf16 %v925, %v924
    %v970 = vpack.c.bf16 %v927, %v926
    %v971 = vpack.c.bf16 %v929, %v928
    %v972 = vpack.c.bf16 %v931, %v930
    %v973 = vpack.c.bf16 %v933, %v932
    %v974 = vpack.c.bf16 %v935, %v934
    %v975 = vpack.c.bf16 %v937, %v936
    %v976 = vpack.c.bf16 %v939, %v938
    %v977 = vpack.c.bf16 %v941, %v940
    %v978 = vpack.c.bf16 %v943, %v942
    %v979 = vpack.c.bf16 %v945, %v944
    %v980 = vpack.c.bf16 %v947, %v946
    %v981 = vpack.c.bf16 %v949, %v948
    %v1014 = vunpack.c.l.b16 %v950
    %v1015 = vunpack.c.h.b16 %v950
    %v1016 = vunpack.c.l.b16 %v951
    %v1017 = vunpack.c.h.b16 %v951
    %v1018 = vunpack.c.l.b16 %v952
    %v1019 = vunpack.c.h.b16 %v952
    %v1020 = vunpack.c.l.b16 %v953
    %v1021 = vunpack.c.h.b16 %v953
    %v1022 = vunpack.c.l.b16 %v954
    %v1023 = vunpack.c.h.b16 %v954
    %v1024 = vunpack.c.l.b16 %v955
    %v1025 = vunpack.c.h.b16 %v955
    %v1026 = vunpack.c.l.b16 %v956
    %v1027 = vunpack.c.h.b16 %v956
    %v1028 = vunpack.c.l.b16 %v957
    %v1029 = vunpack.c.h.b16 %v957
    %v1030 = vunpack.c.l.b16 %v958
    %v1031 = vunpack.c.h.b16 %v958
    %v1032 = vunpack.c.l.b16 %v959
    %v1033 = vunpack.c.h.b16 %v959
    %v1034 = vunpack.c.l.b16 %v960
    %v1035 = vunpack.c.h.b16 %v960
    %v1036 = vunpack.c.l.b16 %v961
    %v1037 = vunpack.c.h.b16 %v961
    %v1038 = vunpack.c.l.b16 %v962
    %v1039 = vunpack.c.h.b16 %v962
    %v1040 = vunpack.c.l.b16 %v963
    %v1041 = vunpack.c.h.b16 %v963
    %v1042 = vunpack.c.l.b16 %v964
    %v1043 = vunpack.c.h.b16 %v964
    %v1044 = vunpack.c.l.b16 %v965
    %v1045 = vunpack.c.h.b16 %v965
    %v1046 = vunpack.c.l.b16 %v966
    %v1047 = vunpack.c.h.b16 %v966
    %v1048 = vunpack.c.l.b16 %v967
    %v1049 = vunpack.c.h.b16 %v967
    %v1050 = vunpack.c.l.b16 %v968
    %v1051 = vunpack.c.h.b16 %v968
    %v1052 = vunpack.c.l.b16 %v969
    %v1053 = vunpack.c.h.b16 %v969
    %v1054 = vunpack.c.l.b16 %v970
    %v1055 = vunpack.c.h.b16 %v970
    %v1056 = vunpack.c.l.b16 %v971
    %v1057 = vunpack.c.h.b16 %v971
    %v1058 = vunpack.c.l.b16 %v972
    %v1059 = vunpack.c.h.b16 %v972
    %v1060 = vunpack.c.l.b16 %v973
    %v1061 = vunpack.c.h.b16 %v973
    %v1062 = vunpack.c.l.b16 %v974
    %v1063 = vunpack.c.h.b16 %v974
    %v1064 = vunpack.c.l.b16 %v975
    %v1065 = vunpack.c.h.b16 %v975
    %v1066 = vunpack.c.l.b16 %v976
    %v1067 = vunpack.c.h.b16 %v976
    %v1068 = vunpack.c.l.b16 %v977
    %v1069 = vunpack.c.h.b16 %v977
    %v1070 = vunpack.c.l.b16 %v978
    %v1071 = vunpack.c.h.b16 %v978
    %v1072 = vunpack.c.l.b16 %v979
    %v1073 = vunpack.c.h.b16 %v979
    %v1074 = vunpack.c.l.b16 %v980
    %v1075 = vunpack.c.h.b16 %v980
    %v1076 = vunpack.c.l.b16 %v981
    %v1077 = vunpack.c.h.b16 %v981
    %v1078 = vpack.c.b16 %v1014, %v1014
    %v1079 = vpack.c.b16 %v1015, %v1015
    %v1080 = vpack.c.b16 %v1016, %v1016
    %v1081 = vpack.c.b16 %v1017, %v1017
    %v1082 = vpack.c.b16 %v1018, %v1018
    %v1083 = vpack.c.b16 %v1019, %v1019
    %v1084 = vpack.c.b16 %v1020, %v1020
    %v1085 = vpack.c.b16 %v1021, %v1021
    %v1086 = vpack.c.b16 %v1022, %v1022
    %v1087 = vpack.c.b16 %v1023, %v1023
    %v1088 = vpack.c.b16 %v1024, %v1024
    %v1089 = vpack.c.b16 %v1025, %v1025
    %v1090 = vpack.c.b16 %v1026, %v1026
    %v1091 = vpack.c.b16 %v1027, %v1027
    %v1092 = vpack.c.b16 %v1028, %v1028
    %v1093 = vpack.c.b16 %v1029, %v1029
    %v1094 = vpack.c.b16 %v1030, %v1030
    %v1095 = vpack.c.b16 %v1031, %v1031
    %v1096 = vpack.c.b16 %v1032, %v1032
    %v1097 = vpack.c.b16 %v1033, %v1033
    %v1098 = vpack.c.b16 %v1034, %v1034
    %v1099 = vpack.c.b16 %v1035, %v1035
    %v1100 = vpack.c.b16 %v1036, %v1036
    %v1101 = vpack.c.b16 %v1037, %v1037
    %v1102 = vpack.c.b16 %v1038, %v1038
    %v1103 = vpack.c.b16 %v1039, %v1039
    %v1104 = vpack.c.b16 %v1040, %v1040
    %v1105 = vpack.c.b16 %v1041, %v1041
    %v1106 = vpack.c.b16 %v1042, %v1042
    %v1107 = vpack.c.b16 %v1043, %v1043
    %v1108 = vpack.c.b16 %v1044, %v1044
    %v1109 = vpack.c.b16 %v1045, %v1045
    %v1110 = vpack.c.b16 %v1046, %v1046
    %v1111 = vpack.c.b16 %v1047, %v1047
    %v1112 = vpack.c.b16 %v1048, %v1048
    %v1113 = vpack.c.b16 %v1049, %v1049
    %v1114 = vpack.c.b16 %v1050, %v1050
    %v1115 = vpack.c.b16 %v1051, %v1051
    %v1116 = vpack.c.b16 %v1052, %v1052
    %v1117 = vpack.c.b16 %v1053, %v1053
    %v1118 = vpack.c.b16 %v1054, %v1054
    %v1119 = vpack.c.b16 %v1055, %v1055
    %v1120 = vpack.c.b16 %v1056, %v1056
    %v1121 = vpack.c.b16 %v1057, %v1057
    %v1122 = vpack.c.b16 %v1058, %v1058
    %v1123 = vpack.c.b16 %v1059, %v1059
    %v1124 = vpack.c.b16 %v1060, %v1060
    %v1125 = vpack.c.b16 %v1061, %v1061
    %v1126 = vpack.c.b16 %v1062, %v1062
    %v1127 = vpack.c.b16 %v1063, %v1063
    %v1128 = vpack.c.b16 %v1064, %v1064
    %v1129 = vpack.c.b16 %v1065, %v1065
    %v1130 = vpack.c.b16 %v1066, %v1066
    %v1131 = vpack.c.b16 %v1067, %v1067
    %v1132 = vpack.c.b16 %v1068, %v1068
    %v1133 = vpack.c.b16 %v1069, %v1069
    %v1134 = vpack.c.b16 %v1070, %v1070
    %v1135 = vpack.c.b16 %v1071, %v1071
    %v1136 = vpack.c.b16 %v1072, %v1072
    %v1137 = vpack.c.b16 %v1073, %v1073
    %v1138 = vpack.c.b16 %v1074, %v1074
    %v1139 = vpack.c.b16 %v1075, %v1075
    %v1140 = vpack.c.b16 %v1076, %v1076
    %v1141 = vpack.c.b16 %v1077, %v1077
    %1206 = vst [vmem:[%s2] sm:$0xf] %v1078
    %1207 = vst [vmem:[%s2 + $0x4] sm:$0xf] %v1079
    %1208 = vst [vmem:[%s2 + $0x8] sm:$0xf] %v1080
    %1209 = vst [vmem:[%s2 + $0xc] sm:$0xf] %v1081
    %1210 = vst [vmem:[%s2 + $0x10] sm:$0xf] %v1082
    %1211 = vst [vmem:[%s2 + $0x14] sm:$0xf] %v1083
    %1212 = vst [vmem:[%s2 + $0x18] sm:$0xf] %v1084
    %1213 = vst [vmem:[%s2 + $0x1c] sm:$0xf] %v1085
    %1214 = vst [vmem:[%s2 + $0x20] sm:$0xf] %v1086
    %1215 = vst [vmem:[%s2 + $0x24] sm:$0xf] %v1087
    %1216 = vst [vmem:[%s2 + $0x28] sm:$0xf] %v1088
    %1217 = vst [vmem:[%s2 + $0x2c] sm:$0xf] %v1089
    %1218 = vst [vmem:[%s2 + $0x30] sm:$0xf] %v1090
    %1219 = vst [vmem:[%s2 + $0x34] sm:$0xf] %v1091
    %1220 = vst [vmem:[%s2 + $0x38] sm:$0xf] %v1092
    %1221 = vst [vmem:[%s2 + $0x3c] sm:$0xf] %v1093
    %1222 = vst [vmem:[%s2 + $0x40] sm:$0xf] %v1094
    %1223 = vst [vmem:[%s2 + $0x44] sm:$0xf] %v1095
    %1224 = vst [vmem:[%s2 + $0x48] sm:$0xf] %v1096
    %1225 = vst [vmem:[%s2 + $0x4c] sm:$0xf] %v1097
    %1226 = vst [vmem:[%s2 + $0x50] sm:$0xf] %v1098
    %1227 = vst [vmem:[%s2 + $0x54] sm:$0xf] %v1099
    %1228 = vst [vmem:[%s2 + $0x58] sm:$0xf] %v1100
    %1229 = vst [vmem:[%s2 + $0x5c] sm:$0xf] %v1101
    %1230 = vst [vmem:[%s2 + $0x60] sm:$0xf] %v1102
    %1231 = vst [vmem:[%s2 + $0x64] sm:$0xf] %v1103
    %1232 = vst [vmem:[%s2 + $0x68] sm:$0xf] %v1104
    %1233 = vst [vmem:[%s2 + $0x6c] sm:$0xf] %v1105
    %1234 = vst [vmem:[%s2 + $0x70] sm:$0xf] %v1106
    %1235 = vst [vmem:[%s2 + $0x74] sm:$0xf] %v1107
    %1236 = vst [vmem:[%s2 + $0x78] sm:$0xf] %v1108
    %1237 = vst [vmem:[%s2 + $0x7c] sm:$0xf] %v1109
    %1238 = vst [vmem:[%s2 + $0x80] sm:$0xf] %v1110
    %1239 = vst [vmem:[%s2 + $0x84] sm:$0xf] %v1111
    %1240 = vst [vmem:[%s2 + $0x88] sm:$0xf] %v1112
    %1241 = vst [vmem:[%s2 + $0x8c] sm:$0xf] %v1113
    %1242 = vst [vmem:[%s2 + $0x90] sm:$0xf] %v1114
    %1243 = vst [vmem:[%s2 + $0x94] sm:$0xf] %v1115
    %1244 = vst [vmem:[%s2 + $0x98] sm:$0xf] %v1116
    %1245 = vst [vmem:[%s2 + $0x9c] sm:$0xf] %v1117
    %1246 = vst [vmem:[%s2 + $0xa0] sm:$0xf] %v1118
    %1247 = vst [vmem:[%s2 + $0xa4] sm:$0xf] %v1119
    %1248 = vst [vmem:[%s2 + $0xa8] sm:$0xf] %v1120
    %1249 = vst [vmem:[%s2 + $0xac] sm:$0xf] %v1121
    %1250 = vst [vmem:[%s2 + $0xb0] sm:$0xf] %v1122
    %1251 = vst [vmem:[%s2 + $0xb4] sm:$0xf] %v1123
    %1252 = vst [vmem:[%s2 + $0xb8] sm:$0xf] %v1124
    %1253 = vst [vmem:[%s2 + $0xbc] sm:$0xf] %v1125
    %1254 = vst [vmem:[%s2 + $0xc0] sm:$0xf] %v1126
    %1255 = vst [vmem:[%s2 + $0xc4] sm:$0xf] %v1127
    %1256 = vst [vmem:[%s2 + $0xc8] sm:$0xf] %v1128
    %1257 = vst [vmem:[%s2 + $0xcc] sm:$0xf] %v1129
    %1258 = vst [vmem:[%s2 + $0xd0] sm:$0xf] %v1130
    %1259 = vst [vmem:[%s2 + $0xd4] sm:$0xf] %v1131
    %1260 = vst [vmem:[%s2 + $0xd8] sm:$0xf] %v1132
    %1261 = vst [vmem:[%s2 + $0xdc] sm:$0xf] %v1133
    %1262 = vst [vmem:[%s2 + $0xe0] sm:$0xf] %v1134
    %1263 = vst [vmem:[%s2 + $0xe4] sm:$0xf] %v1135
    %1264 = vst [vmem:[%s2 + $0xe8] sm:$0xf] %v1136
    %1265 = vst [vmem:[%s2 + $0xec] sm:$0xf] %v1137
    %1266 = vst [vmem:[%s2 + $0xf0] sm:$0xf] %v1138
    %1267 = vst [vmem:[%s2 + $0xf4] sm:$0xf] %v1139
    %1268 = vst [vmem:[%s2 + $0xf8] sm:$0xf] %v1140
    %1269 = vst [vmem:[%s2 + $0xfc] sm:$0xf] %v1141
    %v1270 = vadd.f32 %v886, %v887
    %v1271 = vadd.f32 %v1270, %v888
    %v1272 = vadd.f32 %v1271, %v889
    %v1273 = vadd.f32 %v1272, %v890
    %v1274 = vadd.f32 %v1273, %v891
    %v1275 = vadd.f32 %v1274, %v892
    %v1276 = vadd.f32 %v1275, %v893
    %v1277 = vadd.f32 %v1276, %v894
    %v1278 = vadd.f32 %v1277, %v895
    %v1279 = vadd.f32 %v1278, %v896
    %v1280 = vadd.f32 %v1279, %v897
    %v1281 = vadd.f32 %v1280, %v898
    %v1282 = vadd.f32 %v1281, %v899
    %v1283 = vadd.f32 %v1282, %v900
    %v1284 = vadd.f32 %v1283, %v901
    %v1285 = vadd.f32 %v1284, %v902
    %v1286 = vadd.f32 %v1285, %v903
    %v1287 = vadd.f32 %v1286, %v904
    %v1288 = vadd.f32 %v1287, %v905
    %v1289 = vadd.f32 %v1288, %v906
    %v1290 = vadd.f32 %v1289, %v907
    %v1291 = vadd.f32 %v1290, %v908
    %v1292 = vadd.f32 %v1291, %v909
    %v1293 = vadd.f32 %v1292, %v910
    %v1294 = vadd.f32 %v1293, %v911
    %v1295 = vadd.f32 %v1294, %v912
    %v1296 = vadd.f32 %v1295, %v913
    %v1297 = vadd.f32 %v1296, %v914
    %v1298 = vadd.f32 %v1297, %v915
    %v1299 = vadd.f32 %v1298, %v916
    %v1300 = vadd.f32 %v1299, %v917
    %v1301 = vadd.f32 %v1300, %v918
    %v1302 = vadd.f32 %v1301, %v919
    %v1303 = vadd.f32 %v1302, %v920
    %v1304 = vadd.f32 %v1303, %v921
    %v1305 = vadd.f32 %v1304, %v922
    %v1306 = vadd.f32 %v1305, %v923
    %v1307 = vadd.f32 %v1306, %v924
    %v1308 = vadd.f32 %v1307, %v925
    %v1309 = vadd.f32 %v1308, %v926
    %v1310 = vadd.f32 %v1309, %v927
    %v1311 = vadd.f32 %v1310, %v928
    %v1312 = vadd.f32 %v1311, %v929
    %v1313 = vadd.f32 %v1312, %v930
    %v1314 = vadd.f32 %v1313, %v931
    %v1315 = vadd.f32 %v1314, %v932
    %v1316 = vadd.f32 %v1315, %v933
    %v1317 = vadd.f32 %v1316, %v934
    %v1318 = vadd.f32 %v1317, %v935
    %v1319 = vadd.f32 %v1318, %v936
    %v1320 = vadd.f32 %v1319, %v937
    %v1321 = vadd.f32 %v1320, %v938
    %v1322 = vadd.f32 %v1321, %v939
    %v1323 = vadd.f32 %v1322, %v940
    %v1324 = vadd.f32 %v1323, %v941
    %v1325 = vadd.f32 %v1324, %v942
    %v1326 = vadd.f32 %v1325, %v943
    %v1327 = vadd.f32 %v1326, %v944
    %v1328 = vadd.f32 %v1327, %v945
    %v1329 = vadd.f32 %v1328, %v946
    %v1330 = vadd.f32 %v1329, %v947
    %v1331 = vadd.f32 %v1330, %v948
    %v1332 = vadd.f32 %v1331, %v949
    %v1333 = vrot.slane %v1332, 4
    %v1334 = vadd.f32 %v1332, %v1333
    %v1335 = vrot.slane %v1334, 2
    %v1336 = vadd.f32 %v1334, %v1335
    %v1337 = vrot.slane %v1336, 1
    %v1338 = vadd.f32 %v1336, %v1337
    %v1339 = vmul.f32 %v886, %v886
    %v1340 = vmul.f32 %v887, %v887
    %v1341 = vmul.f32 %v888, %v888
    %v1342 = vmul.f32 %v889, %v889
    %v1343 = vmul.f32 %v890, %v890
    %v1344 = vmul.f32 %v891, %v891
    %v1345 = vmul.f32 %v892, %v892
    %v1346 = vmul.f32 %v893, %v893
    %v1347 = vmul.f32 %v894, %v894
    %v1348 = vmul.f32 %v895, %v895
    %v1349 = vmul.f32 %v896, %v896
    %v1350 = vmul.f32 %v897, %v897
    %v1351 = vmul.f32 %v898, %v898
    %v1352 = vmul.f32 %v899, %v899
    %v1353 = vmul.f32 %v900, %v900
    %v1354 = vmul.f32 %v901, %v901
    %v1355 = vmul.f32 %v902, %v902
    %v1356 = vmul.f32 %v903, %v903
    %v1357 = vmul.f32 %v904, %v904
    %v1358 = vmul.f32 %v905, %v905
    %v1359 = vmul.f32 %v906, %v906
    %v1360 = vmul.f32 %v907, %v907
    %v1361 = vmul.f32 %v908, %v908
    %v1362 = vmul.f32 %v909, %v909
    %v1363 = vmul.f32 %v910, %v910
    %v1364 = vmul.f32 %v911, %v911
    %v1365 = vmul.f32 %v912, %v912
    %v1366 = vmul.f32 %v913, %v913
    %v1367 = vmul.f32 %v914, %v914
    %v1368 = vmul.f32 %v915, %v915
    %v1369 = vmul.f32 %v916, %v916
    %v1370 = vmul.f32 %v917, %v917
    %v1371 = vmul.f32 %v918, %v918
    %v1372 = vmul.f32 %v919, %v919
    %v1373 = vmul.f32 %v920, %v920
    %v1374 = vmul.f32 %v921, %v921
    %v1375 = vmul.f32 %v922, %v922
    %v1376 = vmul.f32 %v923, %v923
    %v1377 = vmul.f32 %v924, %v924
    %v1378 = vmul.f32 %v925, %v925
    %v1379 = vmul.f32 %v926, %v926
    %v1380 = vmul.f32 %v927, %v927
    %v1381 = vmul.f32 %v928, %v928
    %v1382 = vmul.f32 %v929, %v929
    %v1383 = vmul.f32 %v930, %v930
    %v1384 = vmul.f32 %v931, %v931
    %v1385 = vmul.f32 %v932, %v932
    %v1386 = vmul.f32 %v933, %v933
    %v1387 = vmul.f32 %v934, %v934
    %v1388 = vmul.f32 %v935, %v935
    %v1389 = vmul.f32 %v936, %v936
    %v1390 = vmul.f32 %v937, %v937
    %v1391 = vmul.f32 %v938, %v938
    %v1392 = vmul.f32 %v939, %v939
    %v1393 = vmul.f32 %v940, %v940
    %v1394 = vmul.f32 %v941, %v941
    %v1395 = vmul.f32 %v942, %v942
    %v1396 = vmul.f32 %v943, %v943
    %v1397 = vmul.f32 %v944, %v944
    %v1398 = vmul.f32 %v945, %v945
    %v1399 = vmul.f32 %v946, %v946
    %v1400 = vmul.f32 %v947, %v947
    %v1401 = vmul.f32 %v948, %v948
    %v1402 = vmul.f32 %v949, %v949
    %v1403 = vadd.f32 %v1339, %v1340
    %v1404 = vadd.f32 %v1403, %v1341
    %v1405 = vadd.f32 %v1404, %v1342
    %v1406 = vadd.f32 %v1405, %v1343
    %v1407 = vadd.f32 %v1406, %v1344
    %v1408 = vadd.f32 %v1407, %v1345
    %v1409 = vadd.f32 %v1408, %v1346
    %v1410 = vadd.f32 %v1409, %v1347
    %v1411 = vadd.f32 %v1410, %v1348
    %v1412 = vadd.f32 %v1411, %v1349
    %v1413 = vadd.f32 %v1412, %v1350
    %v1414 = vadd.f32 %v1413, %v1351
    %v1415 = vadd.f32 %v1414, %v1352
    %v1416 = vadd.f32 %v1415, %v1353
    %v1417 = vadd.f32 %v1416, %v1354
    %v1418 = vadd.f32 %v1417, %v1355
    %v1419 = vadd.f32 %v1418, %v1356
    %v1420 = vadd.f32 %v1419, %v1357
    %v1421 = vadd.f32 %v1420, %v1358
    %v1422 = vadd.f32 %v1421, %v1359
    %v1423 = vadd.f32 %v1422, %v1360
    %v1424 = vadd.f32 %v1423, %v1361
    %v1425 = vadd.f32 %v1424, %v1362
    %v1426 = vadd.f32 %v1425, %v1363
    %v1427 = vadd.f32 %v1426, %v1364
    %v1428 = vadd.f32 %v1427, %v1365
    %v1429 = vadd.f32 %v1428, %v1366
    %v1430 = vadd.f32 %v1429, %v1367
    %v1431 = vadd.f32 %v1430, %v1368
    %v1432 = vadd.f32 %v1431, %v1369
    %v1433 = vadd.f32 %v1432, %v1370
    %v1434 = vadd.f32 %v1433, %v1371
    %v1435 = vadd.f32 %v1434, %v1372
    %v1436 = vadd.f32 %v1435, %v1373
    %v1437 = vadd.f32 %v1436, %v1374
    %v1438 = vadd.f32 %v1437, %v1375
    %v1439 = vadd.f32 %v1438, %v1376
    %v1440 = vadd.f32 %v1439, %v1377
    %v1441 = vadd.f32 %v1440, %v1378
    %v1442 = vadd.f32 %v1441, %v1379
    %v1443 = vadd.f32 %v1442, %v1380
    %v1444 = vadd.f32 %v1443, %v1381
    %v1445 = vadd.f32 %v1444, %v1382
    %v1446 = vadd.f32 %v1445, %v1383
    %v1447 = vadd.f32 %v1446, %v1384
    %v1448 = vadd.f32 %v1447, %v1385
    %v1449 = vadd.f32 %v1448, %v1386
    %v1450 = vadd.f32 %v1449, %v1387
    %v1451 = vadd.f32 %v1450, %v1388
    %v1452 = vadd.f32 %v1451, %v1389
    %v1453 = vadd.f32 %v1452, %v1390
    %v1454 = vadd.f32 %v1453, %v1391
    %v1455 = vadd.f32 %v1454, %v1392
    %v1456 = vadd.f32 %v1455, %v1393
    %v1457 = vadd.f32 %v1456, %v1394
    %v1458 = vadd.f32 %v1457, %v1395
    %v1459 = vadd.f32 %v1458, %v1396
    %v1460 = vadd.f32 %v1459, %v1397
    %v1461 = vadd.f32 %v1460, %v1398
    %v1462 = vadd.f32 %v1461, %v1399
    %v1463 = vadd.f32 %v1462, %v1400
    %v1464 = vadd.f32 %v1463, %v1401
    %v1465 = vadd.f32 %v1464, %v1402
    %v1466 = vrot.slane %v1465, 4
    %v1467 = vadd.f32 %v1465, %v1466
    %v1468 = vrot.slane %v1467, 2
    %v1469 = vadd.f32 %v1467, %v1468
    %v1470 = vrot.slane %v1469, 1
    %v1471 = vadd.f32 %v1469, %v1470
    %vm1472 = vcmask 1040384
    %v1473 = vsel %vm1472, %v1338, %v1471
    %vm1474 = vcmask 1041408
    %v1475 = vsel %vm1474, %v1473, 0.0
    %1476 = vst [vmem:[%s3] sm:$0xff] %v1475
  $region17: #{bottleneck_forward.7} parent=0 // pred_fallthru
    _
  // Predicated region
  $region18: #{bottleneck_forward.7} parent=0 // pred_check
    _
  $region19: #{bottleneck_forward.7} parent=0 // pred_check_branch
    %1478 = sbr.rel (0) target = $region21
  $region20: #{bottleneck_forward.7} parent=0 // pred_region
    _
  $region21: #{bottleneck_forward.7} parent=0 // pred_fallthru
    _
  // Predicated region
  $region22: #{bottleneck_forward.7} parent=0 // pred_check
    _
  $region23: #{bottleneck_forward.7} parent=0 // pred_check_branch
    %1480 = sbr.rel (0) target = $region25
  $region24: #{bottleneck_forward.7} parent=0 // pred_region
    _
  $region25: #{bottleneck_forward.7} parent=0 // pred_fallthru
    _
  // Predicated region
  $region26: #{bottleneck_forward.7} parent=0 // pred_check
    _
  $region27: #{bottleneck_forward.7} parent=0 // pred_check_branch
    %1482 = sbr.rel (0) target = $region29
  $region28: #{bottleneck_forward.7} parent=0 // pred_region
    _
  $region29: #{bottleneck_forward.7} parent=0 // pred_fallthru
    _
  // Predicated region
  $region30: #{bottleneck_forward.7} parent=0 // pred_check
    _
  $region31: #{bottleneck_forward.7} parent=0 // pred_check_branch
    %1484 = sbr.rel (0) target = $region33
  $region32: #{bottleneck_forward.7} parent=0 // pred_region
    _
  $region33: #{bottleneck_forward.7} parent=0 // pred_fallthru
    _

// kernel: bottleneck_forward.10
$region0: #{bottleneck_forward.10}
  #allocation0 [shape = 'u32[]', space=smem, size = 0x4, offset = 0x4, fixed_abs, tag = 'smem constant byte address 0x4 - core index']
  #allocation1 [shape = 'u32[144,128]{1,0:T(1,128)}', space=vmem, size = 0x12000, scoped, tag = 'internal scratch']
  %s0 = inlined_call_operand.vmem [shape: bf16[128,128], index: 0, kind: input, shape index: {}]
  %s1 = inlined_call_operand.vmem [shape: f32[1,128], index: 1, kind: input, shape index: {}]
  %s2 = inlined_call_operand.vmem [shape: f32[1,128], index: 2, kind: input, shape index: {}]
  %s3 = inlined_call_operand.vmem [shape: bf16[128,128], index: 3, kind: output, shape index: {}]
  %s4 = sld [smem:[#allocation0]]
  $region22: #{bottleneck_forward.10} parent=0
    _
  %s6 = ssub.s32 1, %s4
  %s7 = scalar_select 0, %s6, %s4
  // Predicated region
  $region2: #{bottleneck_forward.10} parent=0 // pred_check
    _
  $region3: #{bottleneck_forward.10} parent=0 // pred_check_branch
    %9 = sbr.rel (0) target = $region5
  $region4: #{bottleneck_forward.10} parent=0 // pred_region
    _
  $region5: #{bottleneck_forward.10} parent=0 // pred_fallthru
    _
  // Predicated region
  $region6: #{bottleneck_forward.10} parent=0 // pred_check
    _
  $region7: #{bottleneck_forward.10} parent=0 // pred_check_branch
    %11 = sbr.rel (0) target = $region9
  $region8: #{bottleneck_forward.10} parent=0 // pred_region
    _
  $region9: #{bottleneck_forward.10} parent=0 // pred_fallthru
    _
  // Predicated region
  $region10: #{bottleneck_forward.10} parent=0 // pred_check
    _
  $region11: #{bottleneck_forward.10} parent=0 // pred_check_branch
    %13 = sbr.rel (0) target = $region13
  $region12: #{bottleneck_forward.10} parent=0 // pred_region
    _
  $region13: #{bottleneck_forward.10} parent=0 // pred_fallthru
    _
  %v14 = vld [vmem:[%s0] sm:$0xf]
  %v15 = vld [vmem:[%s0 + $0x4] sm:$0xf]
  %v16 = vld [vmem:[%s0 + $0x8] sm:$0xf]
  %v17 = vld [vmem:[%s0 + $0xc] sm:$0xf]
  %v18 = vld [vmem:[%s0 + $0x10] sm:$0xf]
  %v19 = vld [vmem:[%s0 + $0x14] sm:$0xf]
  %v20 = vld [vmem:[%s0 + $0x18] sm:$0xf]
  %v21 = vld [vmem:[%s0 + $0x1c] sm:$0xf]
  %v22 = vld [vmem:[%s0 + $0x20] sm:$0xf]
  %v23 = vld [vmem:[%s0 + $0x24] sm:$0xf]
  %v24 = vld [vmem:[%s0 + $0x28] sm:$0xf]
  %v25 = vld [vmem:[%s0 + $0x2c] sm:$0xf]
  %v26 = vld [vmem:[%s0 + $0x30] sm:$0xf]
  %v27 = vld [vmem:[%s0 + $0x34] sm:$0xf]
  %v28 = vld [vmem:[%s0 + $0x38] sm:$0xf]
  %v29 = vld [vmem:[%s0 + $0x3c] sm:$0xf]
  %v30 = vunpack.c.l.bf16 %v14
  %v31 = vunpack.c.l.bf16 %v15
  %v32 = vunpack.c.l.bf16 %v16
  %v33 = vunpack.c.l.bf16 %v17
  %v34 = vunpack.c.l.bf16 %v18
  %v35 = vunpack.c.l.bf16 %v19
  %v36 = vunpack.c.l.bf16 %v20
  %v37 = vunpack.c.l.bf16 %v21
  %v38 = vunpack.c.l.bf16 %v22
  %v39 = vunpack.c.l.bf16 %v23
  %v40 = vunpack.c.l.bf16 %v24
  %v41 = vunpack.c.l.bf16 %v25
  %v42 = vunpack.c.l.bf16 %v26
  %v43 = vunpack.c.l.bf16 %v27
  %v44 = vunpack.c.l.bf16 %v28
  %v45 = vunpack.c.l.bf16 %v29
  %v46 = vld [vmem:[%s1] sm:$0x1]
  %v48 = vlaneseq
  %v49 = vshrl.u32 %v48, 7
  %v50 = vsub.s32 0, %v49
  %v51 = vrot.slane %v46, %v50
  %v53 = vmul.f32 %v30, %v51
  %v54 = vmul.f32 %v31, %v51
  %v55 = vmul.f32 %v32, %v51
  %v56 = vmul.f32 %v33, %v51
  %v57 = vmul.f32 %v34, %v51
  %v58 = vmul.f32 %v35, %v51
  %v59 = vmul.f32 %v36, %v51
  %v60 = vmul.f32 %v37, %v51
  %v61 = vmul.f32 %v38, %v51
  %v62 = vmul.f32 %v39, %v51
  %v63 = vmul.f32 %v40, %v51
  %v64 = vmul.f32 %v41, %v51
  %v65 = vmul.f32 %v42, %v51
  %v66 = vmul.f32 %v43, %v51
  %v67 = vmul.f32 %v44, %v51
  %v68 = vmul.f32 %v45, %v51
  %v69 = vld [vmem:[%s2] sm:$0x1]
  %v71 = vlaneseq
  %v72 = vshrl.u32 %v71, 7
  %v73 = vsub.s32 0, %v72
  %v74 = vrot.slane %v69, %v73
  %v76 = vadd.f32 %v53, %v74
  %v77 = vadd.f32 %v54, %v74
  %v78 = vadd.f32 %v55, %v74
  %v79 = vadd.f32 %v56, %v74
  %v80 = vadd.f32 %v57, %v74
  %v81 = vadd.f32 %v58, %v74
  %v82 = vadd.f32 %v59, %v74
  %v83 = vadd.f32 %v60, %v74
  %v84 = vadd.f32 %v61, %v74
  %v85 = vadd.f32 %v62, %v74
  %v86 = vadd.f32 %v63, %v74
  %v87 = vadd.f32 %v64, %v74
  %v88 = vadd.f32 %v65, %v74
  %v89 = vadd.f32 %v66, %v74
  %v90 = vadd.f32 %v67, %v74
  %v91 = vadd.f32 %v68, %v74
  %v92 = vmax.f32 %v76, 0.0
  %v93 = vmax.f32 %v77, 0.0
  %v94 = vmax.f32 %v78, 0.0
  %v95 = vmax.f32 %v79, 0.0
  %v96 = vmax.f32 %v80, 0.0
  %v97 = vmax.f32 %v81, 0.0
  %v98 = vmax.f32 %v82, 0.0
  %v99 = vmax.f32 %v83, 0.0
  %v100 = vmax.f32 %v84, 0.0
  %v101 = vmax.f32 %v85, 0.0
  %v102 = vmax.f32 %v86, 0.0
  %v103 = vmax.f32 %v87, 0.0
  %v104 = vmax.f32 %v88, 0.0
  %v105 = vmax.f32 %v89, 0.0
  %v106 = vmax.f32 %v90, 0.0
  %v107 = vmax.f32 %v91, 0.0
  %v108 = vpack.c.bf16 %v93, %v92
  %v109 = vpack.c.bf16 %v95, %v94
  %v110 = vpack.c.bf16 %v97, %v96
  %v111 = vpack.c.bf16 %v99, %v98
  %v112 = vpack.c.bf16 %v101, %v100
  %v113 = vpack.c.bf16 %v103, %v102
  %v114 = vpack.c.bf16 %v105, %v104
  %v115 = vpack.c.bf16 %v107, %v106
  %v124 = vunpack.c.l.b16 %v108
  %v125 = vunpack.c.h.b16 %v108
  %v126 = vunpack.c.l.b16 %v109
  %v127 = vunpack.c.h.b16 %v109
  %v128 = vunpack.c.l.b16 %v110
  %v129 = vunpack.c.h.b16 %v110
  %v130 = vunpack.c.l.b16 %v111
  %v131 = vunpack.c.h.b16 %v111
  %v132 = vunpack.c.l.b16 %v112
  %v133 = vunpack.c.h.b16 %v112
  %v134 = vunpack.c.l.b16 %v113
  %v135 = vunpack.c.h.b16 %v113
  %v136 = vunpack.c.l.b16 %v114
  %v137 = vunpack.c.h.b16 %v114
  %v138 = vunpack.c.l.b16 %v115
  %v139 = vunpack.c.h.b16 %v115
  %v140 = vpack.c.b16 %v124, %v124
  %v141 = vpack.c.b16 %v125, %v125
  %v142 = vpack.c.b16 %v126, %v126
  %v143 = vpack.c.b16 %v127, %v127
  %v144 = vpack.c.b16 %v128, %v128
  %v145 = vpack.c.b16 %v129, %v129
  %v146 = vpack.c.b16 %v130, %v130
  %v147 = vpack.c.b16 %v131, %v131
  %v148 = vpack.c.b16 %v132, %v132
  %v149 = vpack.c.b16 %v133, %v133
  %v150 = vpack.c.b16 %v134, %v134
  %v151 = vpack.c.b16 %v135, %v135
  %v152 = vpack.c.b16 %v136, %v136
  %v153 = vpack.c.b16 %v137, %v137
  %v154 = vpack.c.b16 %v138, %v138
  %v155 = vpack.c.b16 %v139, %v139
  %172 = vst [vmem:[%s3] sm:$0xf] %v140
  %173 = vst [vmem:[%s3 + $0x4] sm:$0xf] %v141
  %174 = vst [vmem:[%s3 + $0x8] sm:$0xf] %v142
  %175 = vst [vmem:[%s3 + $0xc] sm:$0xf] %v143
  %176 = vst [vmem:[%s3 + $0x10] sm:$0xf] %v144
  %177 = vst [vmem:[%s3 + $0x14] sm:$0xf] %v145
  %178 = vst [vmem:[%s3 + $0x18] sm:$0xf] %v146
  %179 = vst [vmem:[%s3 + $0x1c] sm:$0xf] %v147
  %180 = vst [vmem:[%s3 + $0x20] sm:$0xf] %v148
  %181 = vst [vmem:[%s3 + $0x24] sm:$0xf] %v149
  %182 = vst [vmem:[%s3 + $0x28] sm:$0xf] %v150
  %183 = vst [vmem:[%s3 + $0x2c] sm:$0xf] %v151
  %184 = vst [vmem:[%s3 + $0x30] sm:$0xf] %v152
  %185 = vst [vmem:[%s3 + $0x34] sm:$0xf] %v153
  %186 = vst [vmem:[%s3 + $0x38] sm:$0xf] %v154
  %187 = vst [vmem:[%s3 + $0x3c] sm:$0xf] %v155
  // Predicated region
  $region14: #{bottleneck_forward.10} parent=0 // pred_check
    _
  $region15: #{bottleneck_forward.10} parent=0 // pred_check_branch
    %189 = sbr.rel (0) target = $region17
  $region16: #{bottleneck_forward.10} parent=0 // pred_region
    _
  $region17: #{bottleneck_forward.10} parent=0 // pred_fallthru
    _
  // Predicated region
  $region18: #{bottleneck_forward.10} parent=0 // pred_check
    _
  $region19: #{bottleneck_forward.10} parent=0 // pred_check_branch
    %191 = sbr.rel (0) target = $region21
  $region20: #{bottleneck_forward.10} parent=0 // pred_region
    _
  $region21: #{bottleneck_forward.10} parent=0 // pred_fallthru
    _

// kernel: bottleneck_forward.11
$region0: #{bottleneck_forward.11}
  #allocation0 [shape = 'u32[]', space=smem, size = 0x4, offset = 0x4, fixed_abs, tag = 'smem constant byte address 0x4 - core index']
  #allocation1 [shape = 'u32[144,128]{1,0:T(1,128)}', space=vmem, size = 0x12000, scoped, tag = 'internal scratch']
  #allocation2 [shape = 'f32[128,128]{1,0:T(8,128)}', space=vmem, size = 0x10000, scoped, tag = 'scratch operand']
  %s0 = inlined_call_operand.vmem [shape: bf16[128,128], index: 0, kind: input, shape index: {}]
  %s1 = inlined_call_operand.vmem [shape: bf16[128,128], index: 1, kind: input, shape index: {}]
  %s2 = inlined_call_operand.vmem [shape: bf16[128,128], index: 2, kind: output, shape index: {0}]
  %s3 = inlined_call_operand.vmem [shape: f32[8,128], index: 3, kind: output, shape index: {1}]
  %4 = xla_tuple %s2, %s3
  %s5 = sld [smem:[#allocation0]]
  $region34: #{bottleneck_forward.11} parent=0
    _
  %s7 = ssub.s32 1, %s5
  %s8 = scalar_select 0, %s7, %s5
  // Predicated region
  $region2: #{bottleneck_forward.11} parent=0 // pred_check
    _
  $region3: #{bottleneck_forward.11} parent=0 // pred_check_branch
    %10 = sbr.rel (0) target = $region5
  $region4: #{bottleneck_forward.11} parent=0 // pred_region
    _
  $region5: #{bottleneck_forward.11} parent=0 // pred_fallthru
    _
  // Predicated region
  $region6: #{bottleneck_forward.11} parent=0 // pred_check
    _
  $region7: #{bottleneck_forward.11} parent=0 // pred_check_branch
    %12 = sbr.rel (0) target = $region9
  $region8: #{bottleneck_forward.11} parent=0 // pred_region
    _
  $region9: #{bottleneck_forward.11} parent=0 // pred_fallthru
    _
  %p14 = scmp.eq.s32.totalorder 0, 0
  // Predicated region
  $region10: #{bottleneck_forward.11} parent=0 // pred_check
    %p15 = pneg %p14
  $region11: #{bottleneck_forward.11} parent=0 // pred_check_branch
    %17 = sbr.rel (%p15) target = $region13
  $region12: #{bottleneck_forward.11} parent=0 // pred_region
    %18 = vst [vmem:[#allocation2] sm:$0xff] 0.0
    %19 = vst [vmem:[#allocation2 + $0x8] sm:$0xff] 0.0
    %20 = vst [vmem:[#allocation2 + $0x10] sm:$0xff] 0.0
    %21 = vst [vmem:[#allocation2 + $0x18] sm:$0xff] 0.0
    %22 = vst [vmem:[#allocation2 + $0x20] sm:$0xff] 0.0
    %23 = vst [vmem:[#allocation2 + $0x28] sm:$0xff] 0.0
    %24 = vst [vmem:[#allocation2 + $0x30] sm:$0xff] 0.0
    %25 = vst [vmem:[#allocation2 + $0x38] sm:$0xff] 0.0
    %26 = vst [vmem:[#allocation2 + $0x40] sm:$0xff] 0.0
    %27 = vst [vmem:[#allocation2 + $0x48] sm:$0xff] 0.0
    %28 = vst [vmem:[#allocation2 + $0x50] sm:$0xff] 0.0
    %29 = vst [vmem:[#allocation2 + $0x58] sm:$0xff] 0.0
    %30 = vst [vmem:[#allocation2 + $0x60] sm:$0xff] 0.0
    %31 = vst [vmem:[#allocation2 + $0x68] sm:$0xff] 0.0
    %32 = vst [vmem:[#allocation2 + $0x70] sm:$0xff] 0.0
    %33 = vst [vmem:[#allocation2 + $0x78] sm:$0xff] 0.0
  $region13: #{bottleneck_forward.11} parent=0 // pred_fallthru
    _
  %v34 = vld [vmem:[#allocation2] sm:$0xff]
  %v35 = vld [vmem:[#allocation2 + $0x8] sm:$0xff]
  %v36 = vld [vmem:[#allocation2 + $0x10] sm:$0xff]
  %v37 = vld [vmem:[#allocation2 + $0x18] sm:$0xff]
  %v38 = vld [vmem:[#allocation2 + $0x20] sm:$0xff]
  %v39 = vld [vmem:[#allocation2 + $0x28] sm:$0xff]
  %v40 = vld [vmem:[#allocation2 + $0x30] sm:$0xff]
  %v41 = vld [vmem:[#allocation2 + $0x38] sm:$0xff]
  %v42 = vld [vmem:[#allocation2 + $0x40] sm:$0xff]
  %v43 = vld [vmem:[#allocation2 + $0x48] sm:$0xff]
  %v44 = vld [vmem:[#allocation2 + $0x50] sm:$0xff]
  %v45 = vld [vmem:[#allocation2 + $0x58] sm:$0xff]
  %v46 = vld [vmem:[#allocation2 + $0x60] sm:$0xff]
  %v47 = vld [vmem:[#allocation2 + $0x68] sm:$0xff]
  %v48 = vld [vmem:[#allocation2 + $0x70] sm:$0xff]
  %v49 = vld [vmem:[#allocation2 + $0x78] sm:$0xff]
  %v50 = vld [vmem:[%s0] sm:$0xf]
  %v51 = vld [vmem:[%s0 + $0x4] sm:$0xf]
  %v52 = vld [vmem:[%s0 + $0x8] sm:$0xf]
  %v53 = vld [vmem:[%s0 + $0xc] sm:$0xf]
  %v54 = vld [vmem:[%s0 + $0x10] sm:$0xf]
  %v55 = vld [vmem:[%s0 + $0x14] sm:$0xf]
  %v56 = vld [vmem:[%s0 + $0x18] sm:$0xf]
  %v57 = vld [vmem:[%s0 + $0x1c] sm:$0xf]
  %v58 = vld [vmem:[%s0 + $0x20] sm:$0xf]
  %v59 = vld [vmem:[%s0 + $0x24] sm:$0xf]
  %v60 = vld [vmem:[%s0 + $0x28] sm:$0xf]
  %v61 = vld [vmem:[%s0 + $0x2c] sm:$0xf]
  %v62 = vld [vmem:[%s0 + $0x30] sm:$0xf]
  %v63 = vld [vmem:[%s0 + $0x34] sm:$0xf]
  %v64 = vld [vmem:[%s0 + $0x38] sm:$0xf]
  %v65 = vld [vmem:[%s0 + $0x3c] sm:$0xf]
  %v66 = vld [vmem:[%s1] sm:$0xf]
  %v67 = vld [vmem:[%s1 + $0x4] sm:$0xf]
  %v68 = vld [vmem:[%s1 + $0x8] sm:$0xf]
  %v69 = vld [vmem:[%s1 + $0xc] sm:$0xf]
  %v70 = vld [vmem:[%s1 + $0x10] sm:$0xf]
  %v71 = vld [vmem:[%s1 + $0x14] sm:$0xf]
  %v72 = vld [vmem:[%s1 + $0x18] sm:$0xf]
  %v73 = vld [vmem:[%s1 + $0x1c] sm:$0xf]
  %v74 = vld [vmem:[%s1 + $0x20] sm:$0xf]
  %v75 = vld [vmem:[%s1 + $0x24] sm:$0xf]
  %v76 = vld [vmem:[%s1 + $0x28] sm:$0xf]
  %v77 = vld [vmem:[%s1 + $0x2c] sm:$0xf]
  %v78 = vld [vmem:[%s1 + $0x30] sm:$0xf]
  %v79 = vld [vmem:[%s1 + $0x34] sm:$0xf]
  %v80 = vld [vmem:[%s1 + $0x38] sm:$0xf]
  %v81 = vld [vmem:[%s1 + $0x3c] sm:$0xf]
  %v98 = vunpack.c.l.b16 %v50
  %v99 = vunpack.c.l.b16 %v51
  %v100 = vunpack.c.l.b16 %v52
  %v101 = vunpack.c.l.b16 %v53
  %v102 = vunpack.c.l.b16 %v54
  %v103 = vunpack.c.l.b16 %v55
  %v104 = vunpack.c.l.b16 %v56
  %v105 = vunpack.c.l.b16 %v57
  %v106 = vunpack.c.l.b16 %v58
  %v107 = vunpack.c.l.b16 %v59
  %v108 = vunpack.c.l.b16 %v60
  %v109 = vunpack.c.l.b16 %v61
  %v110 = vunpack.c.l.b16 %v62
  %v111 = vunpack.c.l.b16 %v63
  %v112 = vunpack.c.l.b16 %v64
  %v113 = vunpack.c.l.b16 %v65
  %v114 = vpack.c.b16 %v99, %v98
  %v115 = vpack.c.b16 %v101, %v100
  %v116 = vpack.c.b16 %v103, %v102
  %v117 = vpack.c.b16 %v105, %v104
  %v118 = vpack.c.b16 %v107, %v106
  %v119 = vpack.c.b16 %v109, %v108
  %v120 = vpack.c.b16 %v111, %v110
  %v121 = vpack.c.b16 %v113, %v112
  %v146 = vunpack.c.l.b16 %v66
  %v147 = vunpack.c.l.b16 %v67
  %v148 = vunpack.c.l.b16 %v68
  %v149 = vunpack.c.l.b16 %v69
  %v150 = vunpack.c.l.b16 %v70
  %v151 = vunpack.c.l.b16 %v71
  %v152 = vunpack.c.l.b16 %v72
  %v153 = vunpack.c.l.b16 %v73
  %v154 = vunpack.c.l.b16 %v74
  %v155 = vunpack.c.l.b16 %v75
  %v156 = vunpack.c.l.b16 %v76
  %v157 = vunpack.c.l.b16 %v77
  %v158 = vunpack.c.l.b16 %v78
  %v159 = vunpack.c.l.b16 %v79
  %v160 = vunpack.c.l.b16 %v80
  %v161 = vunpack.c.l.b16 %v81
  %v162 = vpack.c.b16 %v147, %v146
  %v163 = vpack.c.b16 %v149, %v148
  %v164 = vpack.c.b16 %v151, %v150
  %v165 = vpack.c.b16 %v153, %v152
  %v166 = vpack.c.b16 %v155, %v154
  %v167 = vpack.c.b16 %v157, %v156
  %v168 = vpack.c.b16 %v159, %v158
  %v169 = vpack.c.b16 %v161, %v160
  %178 = vmatprep.subr.bf16.mxu0 0
  %179 = vmatpush1.bf16.msra.mxu0 %v169
  %180 = vmatprep.subr.bf16.mxu0 0
  %181 = vmatpush1.bf16.msra.mxu0 %v168
  %182 = vmatprep.subr.bf16.mxu0 0
  %183 = vmatpush1.bf16.msra.mxu0 %v167
  %184 = vmatprep.subr.bf16.mxu0 0
  %185 = vmatpush1.bf16.msra.mxu0 %v166
  %186 = vmatprep.subr.bf16.mxu0 0
  %187 = vmatpush1.bf16.msra.mxu0 %v165
  %188 = vmatprep.subr.bf16.mxu0 0
  %189 = vmatpush1.bf16.msra.mxu0 %v164
  %190 = vmatprep.subr.bf16.mxu0 0
  %191 = vmatpush1.bf16.msra.mxu0 %v163
  %192 = vmatprep.subr.bf16.mxu0 0
  %193 = vmatpush1.bf16.msra.mxu0 %v162
  %194 = vmatprep.subr.bf16.mxu0 0
  %195 = vmatpush2.bf16.msra.mxu0 0
  %196 = vmatprep.subr.bf16.mxu0 0
  %197 = vmatpush2.bf16.msra.mxu0 0
  %198 = vmatprep.subr.bf16.mxu0 0
  %199 = vmatpush2.bf16.msra.mxu0 0
  %200 = vmatprep.subr.bf16.mxu0 0
  %201 = vmatpush2.bf16.msra.mxu0 0
  %202 = vmatprep.subr.bf16.mxu0 0
  %203 = vmatpush2.bf16.msra.mxu0 0
  %204 = vmatprep.subr.bf16.mxu0 0
  %205 = vmatpush2.bf16.msra.mxu0 0
  %206 = vmatprep.subr.bf16.mxu0 0
  %207 = vmatpush2.bf16.msra.mxu0 0
  %208 = vmatprep.subr.bf16.mxu0 0
  %209 = vmatpush2.bf16.msra.mxu0 0
  %210 = vmatprep.mubr.bf16.mxu0 0
  %211 = vmatmul.mubr.bf16.gmra.mxu0 %v114
  %v212 = vpop.f32.mrf.mxu0
  %v213 = vadd.f32 0.0, %v212
  %v214 = vpop.f32.mrf.mxu0
  %v215 = vpop.f32.mrf.mxu0
  %v216 = vadd.f32 0.0, %v215
  %v217 = vpop.f32.mrf.mxu0
  %218 = vmatprep.mubr.bf16.mxu0 0
  %219 = vmatmul.mubr.bf16.gmra.mxu0 %v115
  %v220 = vpop.f32.mrf.mxu0
  %v221 = vadd.f32 0.0, %v220
  %v222 = vpop.f32.mrf.mxu0
  %v223 = vpop.f32.mrf.mxu0
  %v224 = vadd.f32 0.0, %v223
  %v225 = vpop.f32.mrf.mxu0
  %226 = vmatprep.mubr.bf16.mxu0 0
  %227 = vmatmul.mubr.bf16.gmra.mxu0 %v116
  %v228 = vpop.f32.mrf.mxu0
  %v229 = vadd.f32 0.0, %v228
  %v230 = vpop.f32.mrf.mxu0
  %v231 = vpop.f32.mrf.mxu0
  %v232 = vadd.f32 0.0, %v231
  %v233 = vpop.f32.mrf.mxu0
  %234 = vmatprep.mubr.bf16.mxu0 0
  %235 = vmatmul.mubr.bf16.gmra.mxu0 %v117
  %v236 = vpop.f32.mrf.mxu0
  %v237 = vadd.f32 0.0, %v236
  %v238 = vpop.f32.mrf.mxu0
  %v239 = vpop.f32.mrf.mxu0
  %v240 = vadd.f32 0.0, %v239
  %v241 = vpop.f32.mrf.mxu0
  %242 = vmatprep.mubr.bf16.mxu0 0
  %243 = vmatmul.mubr.bf16.gmra.mxu0 %v118
  %v244 = vpop.f32.mrf.mxu0
  %v245 = vadd.f32 0.0, %v244
  %v246 = vpop.f32.mrf.mxu0
  %v247 = vpop.f32.mrf.mxu0
  %v248 = vadd.f32 0.0, %v247
  %v249 = vpop.f32.mrf.mxu0
  %250 = vmatprep.mubr.bf16.mxu0 0
  %251 = vmatmul.mubr.bf16.gmra.mxu0 %v119
  %v252 = vpop.f32.mrf.mxu0
  %v253 = vadd.f32 0.0, %v252
  %v254 = vpop.f32.mrf.mxu0
  %v255 = vpop.f32.mrf.mxu0
  %v256 = vadd.f32 0.0, %v255
  %v257 = vpop.f32.mrf.mxu0
  %258 = vmatprep.mubr.bf16.mxu0 0
  %259 = vmatmul.mubr.bf16.gmra.mxu0 %v120
  %v260 = vpop.f32.mrf.mxu0
  %v261 = vadd.f32 0.0, %v260
  %v262 = vpop.f32.mrf.mxu0
  %v263 = vpop.f32.mrf.mxu0
  %v264 = vadd.f32 0.0, %v263
  %v265 = vpop.f32.mrf.mxu0
  %266 = vmatprep.mubr.bf16.mxu0 0
  %267 = vmatmul.mubr.bf16.gmra.mxu0 %v121
  %v268 = vpop.f32.mrf.mxu0
  %v269 = vadd.f32 0.0, %v268
  %v270 = vpop.f32.mrf.mxu0
  %v271 = vpop.f32.mrf.mxu0
  %v272 = vadd.f32 0.0, %v271
  %v273 = vpop.f32.mrf.mxu0
  %274 = vdwg.mxu0
  %v275 = vadd.f32 %v34, %v213
  %v276 = vadd.f32 %v35, %v216
  %v277 = vadd.f32 %v36, %v221
  %v278 = vadd.f32 %v37, %v224
  %v279 = vadd.f32 %v38, %v229
  %v280 = vadd.f32 %v39, %v232
  %v281 = vadd.f32 %v40, %v237
  %v282 = vadd.f32 %v41, %v240
  %v283 = vadd.f32 %v42, %v245
  %v284 = vadd.f32 %v43, %v248
  %v285 = vadd.f32 %v44, %v253
  %v286 = vadd.f32 %v45, %v256
  %v287 = vadd.f32 %v46, %v261
  %v288 = vadd.f32 %v47, %v264
  %v289 = vadd.f32 %v48, %v269
  %v290 = vadd.f32 %v49, %v272
  %291 = vst [vmem:[#allocation2] sm:$0xff] %v275
  %292 = vst [vmem:[#allocation2 + $0x8] sm:$0xff] %v276
  %293 = vst [vmem:[#allocation2 + $0x10] sm:$0xff] %v277
  %294 = vst [vmem:[#allocation2 + $0x18] sm:$0xff] %v278
  %295 = vst [vmem:[#allocation2 + $0x20] sm:$0xff] %v279
  %296 = vst [vmem:[#allocation2 + $0x28] sm:$0xff] %v280
  %297 = vst [vmem:[#allocation2 + $0x30] sm:$0xff] %v281
  %298 = vst [vmem:[#allocation2 + $0x38] sm:$0xff] %v282
  %299 = vst [vmem:[#allocation2 + $0x40] sm:$0xff] %v283
  %300 = vst [vmem:[#allocation2 + $0x48] sm:$0xff] %v284
  %301 = vst [vmem:[#allocation2 + $0x50] sm:$0xff] %v285
  %302 = vst [vmem:[#allocation2 + $0x58] sm:$0xff] %v286
  %303 = vst [vmem:[#allocation2 + $0x60] sm:$0xff] %v287
  %304 = vst [vmem:[#allocation2 + $0x68] sm:$0xff] %v288
  %305 = vst [vmem:[#allocation2 + $0x70] sm:$0xff] %v289
  %306 = vst [vmem:[#allocation2 + $0x78] sm:$0xff] %v290
  // Predicated region
  $region14: #{bottleneck_forward.11} parent=0 // pred_check
    %p307 = pneg %p14
  $region15: #{bottleneck_forward.11} parent=0 // pred_check_branch
    %309 = sbr.rel (%p307) target = $region17
  $region16: #{bottleneck_forward.11} parent=0 // pred_region
    %v310 = vld [vmem:[#allocation2] sm:$0xff]
    %v311 = vld [vmem:[#allocation2 + $0x8] sm:$0xff]
    %v312 = vld [vmem:[#allocation2 + $0x10] sm:$0xff]
    %v313 = vld [vmem:[#allocation2 + $0x18] sm:$0xff]
    %v314 = vld [vmem:[#allocation2 + $0x20] sm:$0xff]
    %v315 = vld [vmem:[#allocation2 + $0x28] sm:$0xff]
    %v316 = vld [vmem:[#allocation2 + $0x30] sm:$0xff]
    %v317 = vld [vmem:[#allocation2 + $0x38] sm:$0xff]
    %v318 = vld [vmem:[#allocation2 + $0x40] sm:$0xff]
    %v319 = vld [vmem:[#allocation2 + $0x48] sm:$0xff]
    %v320 = vld [vmem:[#allocation2 + $0x50] sm:$0xff]
    %v321 = vld [vmem:[#allocation2 + $0x58] sm:$0xff]
    %v322 = vld [vmem:[#allocation2 + $0x60] sm:$0xff]
    %v323 = vld [vmem:[#allocation2 + $0x68] sm:$0xff]
    %v324 = vld [vmem:[#allocation2 + $0x70] sm:$0xff]
    %v325 = vld [vmem:[#allocation2 + $0x78] sm:$0xff]
    %v326 = vpack.c.bf16 %v311, %v310
    %v327 = vpack.c.bf16 %v313, %v312
    %v328 = vpack.c.bf16 %v315, %v314
    %v329 = vpack.c.bf16 %v317, %v316
    %v330 = vpack.c.bf16 %v319, %v318
    %v331 = vpack.c.bf16 %v321, %v320
    %v332 = vpack.c.bf16 %v323, %v322
    %v333 = vpack.c.bf16 %v325, %v324
    %v342 = vunpack.c.l.b16 %v326
    %v343 = vunpack.c.h.b16 %v326
    %v344 = vunpack.c.l.b16 %v327
    %v345 = vunpack.c.h.b16 %v327
    %v346 = vunpack.c.l.b16 %v328
    %v347 = vunpack.c.h.b16 %v328
    %v348 = vunpack.c.l.b16 %v329
    %v349 = vunpack.c.h.b16 %v329
    %v350 = vunpack.c.l.b16 %v330
    %v351 = vunpack.c.h.b16 %v330
    %v352 = vunpack.c.l.b16 %v331
    %v353 = vunpack.c.h.b16 %v331
    %v354 = vunpack.c.l.b16 %v332
    %v355 = vunpack.c.h.b16 %v332
    %v356 = vunpack.c.l.b16 %v333
    %v357 = vunpack.c.h.b16 %v333
    %v358 = vpack.c.b16 %v342, %v342
    %v359 = vpack.c.b16 %v343, %v343
    %v360 = vpack.c.b16 %v344, %v344
    %v361 = vpack.c.b16 %v345, %v345
    %v362 = vpack.c.b16 %v346, %v346
    %v363 = vpack.c.b16 %v347, %v347
    %v364 = vpack.c.b16 %v348, %v348
    %v365 = vpack.c.b16 %v349, %v349
    %v366 = vpack.c.b16 %v350, %v350
    %v367 = vpack.c.b16 %v351, %v351
    %v368 = vpack.c.b16 %v352, %v352
    %v369 = vpack.c.b16 %v353, %v353
    %v370 = vpack.c.b16 %v354, %v354
    %v371 = vpack.c.b16 %v355, %v355
    %v372 = vpack.c.b16 %v356, %v356
    %v373 = vpack.c.b16 %v357, %v357
    %390 = vst [vmem:[%s2] sm:$0xf] %v358
    %391 = vst [vmem:[%s2 + $0x4] sm:$0xf] %v359
    %392 = vst [vmem:[%s2 + $0x8] sm:$0xf] %v360
    %393 = vst [vmem:[%s2 + $0xc] sm:$0xf] %v361
    %394 = vst [vmem:[%s2 + $0x10] sm:$0xf] %v362
    %395 = vst [vmem:[%s2 + $0x14] sm:$0xf] %v363
    %396 = vst [vmem:[%s2 + $0x18] sm:$0xf] %v364
    %397 = vst [vmem:[%s2 + $0x1c] sm:$0xf] %v365
    %398 = vst [vmem:[%s2 + $0x20] sm:$0xf] %v366
    %399 = vst [vmem:[%s2 + $0x24] sm:$0xf] %v367
    %400 = vst [vmem:[%s2 + $0x28] sm:$0xf] %v368
    %401 = vst [vmem:[%s2 + $0x2c] sm:$0xf] %v369
    %402 = vst [vmem:[%s2 + $0x30] sm:$0xf] %v370
    %403 = vst [vmem:[%s2 + $0x34] sm:$0xf] %v371
    %404 = vst [vmem:[%s2 + $0x38] sm:$0xf] %v372
    %405 = vst [vmem:[%s2 + $0x3c] sm:$0xf] %v373
    %v406 = vadd.f32 %v310, %v311
    %v407 = vadd.f32 %v406, %v312
    %v408 = vadd.f32 %v407, %v313
    %v409 = vadd.f32 %v408, %v314
    %v410 = vadd.f32 %v409, %v315
    %v411 = vadd.f32 %v410, %v316
    %v412 = vadd.f32 %v411, %v317
    %v413 = vadd.f32 %v412, %v318
    %v414 = vadd.f32 %v413, %v319
    %v415 = vadd.f32 %v414, %v320
    %v416 = vadd.f32 %v415, %v321
    %v417 = vadd.f32 %v416, %v322
    %v418 = vadd.f32 %v417, %v323
    %v419 = vadd.f32 %v418, %v324
    %v420 = vadd.f32 %v419, %v325
    %v421 = vrot.slane %v420, 4
    %v422 = vadd.f32 %v420, %v421
    %v423 = vrot.slane %v422, 2
    %v424 = vadd.f32 %v422, %v423
    %v425 = vrot.slane %v424, 1
    %v426 = vadd.f32 %v424, %v425
    %v427 = vmul.f32 %v310, %v310
    %v428 = vmul.f32 %v311, %v311
    %v429 = vmul.f32 %v312, %v312
    %v430 = vmul.f32 %v313, %v313
    %v431 = vmul.f32 %v314, %v314
    %v432 = vmul.f32 %v315, %v315
    %v433 = vmul.f32 %v316, %v316
    %v434 = vmul.f32 %v317, %v317
    %v435 = vmul.f32 %v318, %v318
    %v436 = vmul.f32 %v319, %v319
    %v437 = vmul.f32 %v320, %v320
    %v438 = vmul.f32 %v321, %v321
    %v439 = vmul.f32 %v322, %v322
    %v440 = vmul.f32 %v323, %v323
    %v441 = vmul.f32 %v324, %v324
    %v442 = vmul.f32 %v325, %v325
    %v443 = vadd.f32 %v427, %v428
    %v444 = vadd.f32 %v443, %v429
    %v445 = vadd.f32 %v444, %v430
    %v446 = vadd.f32 %v445, %v431
    %v447 = vadd.f32 %v446, %v432
    %v448 = vadd.f32 %v447, %v433
    %v449 = vadd.f32 %v448, %v434
    %v450 = vadd.f32 %v449, %v435
    %v451 = vadd.f32 %v450, %v436
    %v452 = vadd.f32 %v451, %v437
    %v453 = vadd.f32 %v452, %v438
    %v454 = vadd.f32 %v453, %v439
    %v455 = vadd.f32 %v454, %v440
    %v456 = vadd.f32 %v455, %v441
    %v457 = vadd.f32 %v456, %v442
    %v458 = vrot.slane %v457, 4
    %v459 = vadd.f32 %v457, %v458
    %v460 = vrot.slane %v459, 2
    %v461 = vadd.f32 %v459, %v460
    %v462 = vrot.slane %v461, 1
    %v463 = vadd.f32 %v461, %v462
    %vm464 = vcmask 1040384
    %v465 = vsel %vm464, %v426, %v463
    %vm466 = vcmask 1041408
    %v467 = vsel %vm466, %v465, 0.0
    %468 = vst [vmem:[%s3] sm:$0xff] %v467
  $region17: #{bottleneck_forward.11} parent=0 // pred_fallthru
    _
  // Predicated region
  $region18: #{bottleneck_forward.11} parent=0 // pred_check
    _
  $region19: #{bottleneck_forward.11} parent=0 // pred_check_branch
    %470 = sbr.rel (0) target = $region21
  $region20: #{bottleneck_forward.11} parent=0 // pred_region
    _
  $region21: #{bottleneck_forward.11} parent=0 // pred_fallthru
    _
  // Predicated region
  $region22: #{bottleneck_forward.11} parent=0 // pred_check
    _
  $region23: #{bottleneck_forward.11} parent=0 // pred_check_branch
    %472 = sbr.rel (0) target = $region25
  $region24: #{bottleneck_forward.11} parent=0 // pred_region
    _
  $region25: #{bottleneck_forward.11} parent=0 // pred_fallthru
    _
  // Predicated region
  $region26: #{bottleneck_forward.11} parent=0 // pred_check
    _
  $region27: #{bottleneck_forward.11} parent=0 // pred_check_branch
    %474 = sbr.rel (0) target = $region29
  $region28: #{bottleneck_forward.11} parent=0 // pred_region
    _
  $region29: #{bottleneck_forward.11} parent=0 // pred_fallthru
    _
  // Predicated region
  $region30: #{bottleneck_forward.11} parent=0 // pred_check
    _
  $region31: #{bottleneck_forward.11} parent=0 // pred_check_branch
    %476 = sbr.rel (0) target = $region33
  $region32: #{bottleneck_forward.11} parent=0 // pred_region
    _
  $region33: #{bottleneck_forward.11} parent=0 // pred_fallthru
    _

// kernel: bottleneck_forward.9
$region0: #{bottleneck_forward.9}
  #allocation0 [shape = 'u32[]', space=smem, size = 0x4, offset = 0x4, fixed_abs, tag = 'smem constant byte address 0x4 - core index']
  #allocation1 [shape = 'u32[144,128]{1,0:T(1,128)}', space=vmem, size = 0x12000, scoped, tag = 'internal scratch']
  %s0 = inlined_call_operand.vmem [shape: bf16[2,9,9,512], index: 0, kind: input, shape index: {}]
  %s1 = inlined_call_operand.vmem [shape: bf16[2,2,512,128], index: 1, kind: input, shape index: {}]
  %s2 = inlined_call_operand.vmem [shape: bf16[2,64,128], index: 2, kind: output, shape index: {0}]
  %s3 = inlined_call_operand.vmem [shape: f32[2,8,128], index: 3, kind: output, shape index: {1}]
  %4 = xla_tuple %s2, %s3
  %s5 = sld [smem:[#allocation0]]
  $region49: #{bottleneck_forward.9} parent=0
    _
  %s7 = ssub.s32 1, %s5
  %s8 = scalar_select 0, %s7, %s5
  loop: start=0, step=1, limit=4
  $region2: #{bottleneck_forward.9} parent=0 // loop_pre_header
    _
  $region3: #{bottleneck_forward.9} parent=0 // loop_header
    %s10 = sphi 0, %s14
    %p11 = scmp.ge.s32.totalorder %s10, 4
    %s20 = sphi 0, %s22
    %s23 = sphi 0, %s20
    %s24 = sphi 0, %s23
    %s40 = sphi 0, %s24
    %s44 = sphi 0, %s44
    %s46 = sphi 0, %s44
    %s47 = sphi 0, %s46
    %s61 = sphi 0, %s47
    %s67 = sphi 0, %s69
    %s70 = sphi 0, %s67
    %s71 = sphi 0, %s70
    %s87 = sphi 0, %s71
    %s93 = sphi 0, %s95
    %s96 = sphi 0, %s93
    %s97 = sphi 0, %s96
    %s113 = sphi 0, %s97
  $region4: #{bottleneck_forward.9} parent=0 // loop_header_branch
    %13 = sbr.rel (%p11) target = $region8
  $region5: #{bottleneck_forward.9} parent=0 // loop_body
    %s15 = ssub.s32 %s10, 1
    %s16 = ssub.s32 %s10, 2
    %s17 = sadd.s32 %s10, 1
    %s18 = ssub.s32 %s10, %s17
    %p19 = scmp.eq.s32.totalorder %s18, 0
    %s21 = sadd.s32 %s20, 1
    %s22 = scalar_select %p19, %s20, %s21
    %p25 = pneg %p19
    %p26 = scmp.eq.s32.totalorder %s10, 1
    %p27 = por %p25, %p26
    %p28 = scmp.ne.s32.totalorder %s20, %s23
    %p29 = scmp.eq.s32.totalorder %s10, 0
    %p30 = por %p28, %p29
    %p31 = scmp.ne.s32.totalorder %s20, %s23
    %p32 = scmp.eq.s32.totalorder %s15, 1
    %p33 = por %p31, %p32
    %p34 = scmp.ne.s32.totalorder %s23, %s24
    %p35 = scmp.eq.s32.totalorder %s15, 0
    %p36 = por %p34, %p35
    %p37 = scmp.ne.s32.totalorder %s23, %s24
    %p38 = scmp.eq.s32.totalorder %s16, 1
    %p39 = por %p37, %p38
    %p41 = scmp.ne.s32.totalorder %s24, %s40
    %p42 = scmp.eq.s32.totalorder %s16, 0
    %p43 = por %p41, %p42
    %s45 = sadd.s32 %s44, 1
    %p48 = scmp.eq.s32.totalorder %s10, 1
    %p49 = scmp.ne.s32.totalorder %s44, %s46
    %p50 = scmp.eq.s32.totalorder %s10, 0
    %p51 = por %p49, %p50
    %p52 = scmp.ne.s32.totalorder %s44, %s46
    %p53 = scmp.eq.s32.totalorder %s15, 1
    %p54 = por %p52, %p53
    %p55 = scmp.ne.s32.totalorder %s46, %s47
    %p56 = scmp.eq.s32.totalorder %s15, 0
    %p57 = por %p55, %p56
    %p58 = scmp.ne.s32.totalorder %s46, %s47
    %p59 = scmp.eq.s32.totalorder %s16, 1
    %p60 = por %p58, %p59
    %p62 = scmp.ne.s32.totalorder %s47, %s61
    %p63 = scmp.eq.s32.totalorder %s16, 0
    %p64 = por %p62, %p63
    %s65 = ssub.s32 %s10, %s17
    %p66 = scmp.eq.s32.totalorder %s65, 0
    %s68 = sadd.s32 %s67, 1
    %s69 = scalar_select %p66, %s67, %s68
    %p72 = pneg %p66
    %p73 = scmp.eq.s32.totalorder %s10, 1
    %p74 = por %p72, %p73
    %p75 = scmp.ne.s32.totalorder %s67, %s70
    %p76 = scmp.eq.s32.totalorder %s10, 0
    %p77 = por %p75, %p76
    %p78 = scmp.ne.s32.totalorder %s67, %s70
    %p79 = scmp.eq.s32.totalorder %s15, 1
    %p80 = por %p78, %p79
    %p81 = scmp.ne.s32.totalorder %s70, %s71
    %p82 = scmp.eq.s32.totalorder %s15, 0
    %p83 = por %p81, %p82
    %p84 = scmp.ne.s32.totalorder %s70, %s71
    %p85 = scmp.eq.s32.totalorder %s16, 1
    %p86 = por %p84, %p85
    %p88 = scmp.ne.s32.totalorder %s71, %s87
    %p89 = scmp.eq.s32.totalorder %s16, 0
    %p90 = por %p88, %p89
    %s91 = ssub.s32 %s10, %s17
    %p92 = scmp.eq.s32.totalorder %s91, 0
    %s94 = sadd.s32 %s93, 1
    %s95 = scalar_select %p92, %s93, %s94
    %p98 = pneg %p92
    %p99 = scmp.eq.s32.totalorder %s10, 1
    %p100 = por %p98, %p99
    %p101 = scmp.ne.s32.totalorder %s93, %s96
    %p102 = scmp.eq.s32.totalorder %s10, 0
    %p103 = por %p101, %p102
    %p104 = scmp.ne.s32.totalorder %s93, %s96
    %p105 = scmp.eq.s32.totalorder %s15, 1
    %p106 = por %p104, %p105
    %p107 = scmp.ne.s32.totalorder %s96, %s97
    %p108 = scmp.eq.s32.totalorder %s15, 0
    %p109 = por %p107, %p108
    %p110 = scmp.ne.s32.totalorder %s96, %s97
    %p111 = scmp.eq.s32.totalorder %s16, 1
    %p112 = por %p110, %p111
    %p114 = scmp.ne.s32.totalorder %s97, %s113
    %p115 = scmp.eq.s32.totalorder %s16, 0
    %p116 = por %p114, %p115
    %p117 = scmp.le.s32.totalorder 1, %s10
    %p118 = scmp.lt.s32.totalorder %s10, 3
    %p119 = pnand %p117, %p118
    %p120 = pneg %p119
    // Predicated region
    $region9: #{bottleneck_forward.9} parent=5 // pred_check
      _
    $region10: #{bottleneck_forward.9} parent=5 // pred_check_branch
      %122 = sbr.rel (%p119) target = $region12
    $region11: #{bottleneck_forward.9} parent=5 // pred_region
      %s123 = ssub.s32 %s10, 1
      // Predicated region
      $region13: #{bottleneck_forward.9} parent=11 // pred_check
        %p124 = pneg %p57
      $region14: #{bottleneck_forward.9} parent=11 // pred_check_branch
        %126 = sbr.rel (%p124) target = $region16
      $region15: #{bottleneck_forward.9} parent=11 // pred_region
        _
      $region16: #{bottleneck_forward.9} parent=11 // pred_fallthru
        _
    $region12: #{bottleneck_forward.9} parent=5 // pred_fallthru
      _
    %p127 = scmp.lt.s32.totalorder %s10, 2
    // Predicated region
    $region17: #{bottleneck_forward.9} parent=5 // pred_check
      %p128 = pneg %p127
    $region18: #{bottleneck_forward.9} parent=5 // pred_check_branch
      %130 = sbr.rel (%p128) target = $region20
    $region19: #{bottleneck_forward.9} parent=5 // pred_region
      // Predicated region
      $region21: #{bottleneck_forward.9} parent=19 // pred_check
        %p131 = pneg %p30
      $region22: #{bottleneck_forward.9} parent=19 // pred_check_branch
        %133 = sbr.rel (%p131) target = $region24
      $region23: #{bottleneck_forward.9} parent=19 // pred_region
        %p134 = scmp.lt.s32.totalorder %s10, 1
        %s135 = scalar_select %p134, %s10, 1
        %s136 = smul.addr %s135, 72
        %s137 = smul.addr %s136, 4
        %s138 = scalar_lea.vmem %s0, %s137
      $region24: #{bottleneck_forward.9} parent=19 // pred_fallthru
        _
    $region20: #{bottleneck_forward.9} parent=5 // pred_fallthru
      _
    %p139 = scmp.le.s32.totalorder 1, %s10
    %p140 = scmp.lt.s32.totalorder %s10, 3
    %p141 = pnand %p139, %p140
    %p142 = pneg %p141
    // Predicated region
    $region25: #{bottleneck_forward.9} parent=5 // pred_check
      _
    $region26: #{bottleneck_forward.9} parent=5 // pred_check_branch
      %144 = sbr.rel (%p141) target = $region28
    $region27: #{bottleneck_forward.9} parent=5 // pred_region
      %s145 = ssub.s32 %s10, 1
      %p146 = scmp.lt.s32.totalorder %s15, 1
      %s147 = scalar_select %p146, %s15, 1
      %s148 = smul.addr %s147, 72
      %s149 = smul.addr %s148, 4
      %s150 = scalar_lea.vmem %s0, %s149
      %p151 = pneg %p36
      %p152 = pneg %p33
      %p153 = pneg %p57
      %p154 = pneg %p54
      %p155 = pneg %p83
      %p156 = pneg %p80
      %p157 = scmp.lt.s32.totalorder %s15, 1
      %s158 = scalar_select %p157, %s15, 1
      %s159 = smul.addr %s158, 8
      %s160 = smul.addr %s159, 4
      %s161 = scalar_lea.vmem %s2, %s160
      %p162 = pneg %p109
      %p163 = pneg %p106
      %p164 = scmp.lt.s32.totalorder %s15, 1
      %s165 = scalar_select %p164, %s15, 1
      %s166 = smul.addr %s165, 8
      %s167 = scalar_lea.vmem %s3, %s166
      %p168 = scmp.lt.s32.totalorder %s15, 1
      %s169 = scalar_select %p168, %s15, 1
      %s170 = smul.addr %s169, 72
      %s171 = smul.addr %s170, 4
      %s172 = scalar_lea.vmem %s0, %s171
      %p173 = scmp.lt.s32.totalorder %s15, 1
      %s174 = scalar_select %p173, %s15, 1
      %s175 = smul.addr %s174, 8
      %s176 = smul.addr %s175, 4
      %s177 = scalar_lea.vmem %s2, %s176
      %p178 = scmp.lt.s32.totalorder %s15, 1
      %s179 = scalar_select %p178, %s15, 1
      %s180 = smul.addr %s179, 8
      %s181 = scalar_lea.vmem %s3, %s180
      %v183 = vld [vmem:[%s172] sm:$0xff]
      %v184 = vld [vmem:[%s172 + $0x8] sm:$0xff]
      %v185 = vld [vmem:[%s172 + $0x20] sm:$0xff]
      %v186 = vld [vmem:[%s172 + $0x28] sm:$0xff]
      %v187 = vld [vmem:[%s172 + $0x40] sm:$0xff]
      %v188 = vld [vmem:[%s172 + $0x48] sm:$0xff]
      %v189 = vld [vmem:[%s172 + $0x60] sm:$0xff]
      %v190 = vld [vmem:[%s172 + $0x68] sm:$0xff]
      %v191 = vld [vmem:[%s172 + $0x80] sm:$0xff]
      %v192 = vld [vmem:[%s172 + $0x88] sm:$0xff]
      %v193 = vld [vmem:[%s172 + $0xa0] sm:$0xff]
      %v194 = vld [vmem:[%s172 + $0xa8] sm:$0xff]
      %v195 = vld [vmem:[%s172 + $0xc0] sm:$0xff]
      %v196 = vld [vmem:[%s172 + $0xc8] sm:$0xff]
      %v197 = vld [vmem:[%s172 + $0xe0] sm:$0xff]
      %v198 = vld [vmem:[%s172 + $0xe8] sm:$0xff]
      %v199 = vld [vmem:[%s1] sm:$0xf]
      %v200 = vld [vmem:[%s1 + $0x4] sm:$0xf]
      %v201 = vld [vmem:[%s1 + $0x8] sm:$0xf]
      %v202 = vld [vmem:[%s1 + $0xc] sm:$0xf]
      %v203 = vld [vmem:[%s1 + $0x10] sm:$0xf]
      %v204 = vld [vmem:[%s1 + $0x14] sm:$0xf]
      %v205 = vld [vmem:[%s1 + $0x18] sm:$0xf]
      %v206 = vld [vmem:[%s1 + $0x1c] sm:$0xf]
      %v207 = vld [vmem:[%s1 + $0x20] sm:$0xf]
      %v208 = vld [vmem:[%s1 + $0x24] sm:$0xf]
      %v209 = vld [vmem:[%s1 + $0x28] sm:$0xf]
      %v210 = vld [vmem:[%s1 + $0x2c] sm:$0xf]
      %v211 = vld [vmem:[%s1 + $0x30] sm:$0xf]
      %v212 = vld [vmem:[%s1 + $0x34] sm:$0xf]
      %v213 = vld [vmem:[%s1 + $0x38] sm:$0xf]
      %v214 = vld [vmem:[%s1 + $0x3c] sm:$0xf]
      %v215 = vld [vmem:[%s1 + $0x40] sm:$0xf]
      %v216 = vld [vmem:[%s1 + $0x44] sm:$0xf]
      %v217 = vld [vmem:[%s1 + $0x48] sm:$0xf]
      %v218 = vld [vmem:[%s1 + $0x4c] sm:$0xf]
      %v219 = vld [vmem:[%s1 + $0x50] sm:$0xf]
      %v220 = vld [vmem:[%s1 + $0x54] sm:$0xf]
      %v221 = vld [vmem:[%s1 + $0x58] sm:$0xf]
      %v222 = vld [vmem:[%s1 + $0x5c] sm:$0xf]
      %v223 = vld [vmem:[%s1 + $0x60] sm:$0xf]
      %v224 = vld [vmem:[%s1 + $0x64] sm:$0xf]
      %v225 = vld [vmem:[%s1 + $0x68] sm:$0xf]
      %v226 = vld [vmem:[%s1 + $0x6c] sm:$0xf]
      %v227 = vld [vmem:[%s1 + $0x70] sm:$0xf]
      %v228 = vld [vmem:[%s1 + $0x74] sm:$0xf]
      %v229 = vld [vmem:[%s1 + $0x78] sm:$0xf]
      %v230 = vld [vmem:[%s1 + $0x7c] sm:$0xf]
      %v231 = vld [vmem:[%s1 + $0x80] sm:$0xf]
      %v232 = vld [vmem:[%s1 + $0x84] sm:$0xf]
      %v233 = vld [vmem:[%s1 + $0x88] sm:$0xf]
      %v234 = vld [vmem:[%s1 + $0x8c] sm:$0xf]
      %v235 = vld [vmem:[%s1 + $0x90] sm:$0xf]
      %v236 = vld [vmem:[%s1 + $0x94] sm:$0xf]
      %v237 = vld [vmem:[%s1 + $0x98] sm:$0xf]
      %v238 = vld [vmem:[%s1 + $0x9c] sm:$0xf]
      %v239 = vld [vmem:[%s1 + $0xa0] sm:$0xf]
      %v240 = vld [vmem:[%s1 + $0xa4] sm:$0xf]
      %v241 = vld [vmem:[%s1 + $0xa8] sm:$0xf]
      %v242 = vld [vmem:[%s1 + $0xac] sm:$0xf]
      %v243 = vld [vmem:[%s1 + $0xb0] sm:$0xf]
      %v244 = vld [vmem:[%s1 + $0xb4] sm:$0xf]
      %v245 = vld [vmem:[%s1 + $0xb8] sm:$0xf]
      %v246 = vld [vmem:[%s1 + $0xbc] sm:$0xf]
      %v247 = vld [vmem:[%s1 + $0xc0] sm:$0xf]
      %v248 = vld [vmem:[%s1 + $0xc4] sm:$0xf]
      %v249 = vld [vmem:[%s1 + $0xc8] sm:$0xf]
      %v250 = vld [vmem:[%s1 + $0xcc] sm:$0xf]
      %v251 = vld [vmem:[%s1 + $0xd0] sm:$0xf]
      %v252 = vld [vmem:[%s1 + $0xd4] sm:$0xf]
      %v253 = vld [vmem:[%s1 + $0xd8] sm:$0xf]
      %v254 = vld [vmem:[%s1 + $0xdc] sm:$0xf]
      %v255 = vld [vmem:[%s1 + $0xe0] sm:$0xf]
      %v256 = vld [vmem:[%s1 + $0xe4] sm:$0xf]
      %v257 = vld [vmem:[%s1 + $0xe8] sm:$0xf]
      %v258 = vld [vmem:[%s1 + $0xec] sm:$0xf]
      %v259 = vld [vmem:[%s1 + $0xf0] sm:$0xf]
      %v260 = vld [vmem:[%s1 + $0xf4] sm:$0xf]
      %v261 = vld [vmem:[%s1 + $0xf8] sm:$0xf]
      %v262 = vld [vmem:[%s1 + $0xfc] sm:$0xf]
      %v263 = vld [vmem:[%s172 + $0x10] sm:$0x11]
      %v264 = vld [vmem:[%s172 + $0x18] sm:$0x11]
      %v265 = vld [vmem:[%s172 + $0x30] sm:$0x11]
      %v266 = vld [vmem:[%s172 + $0x38] sm:$0x11]
      %v267 = vld [vmem:[%s172 + $0x50] sm:$0x11]
      %v268 = vld [vmem:[%s172 + $0x58] sm:$0x11]
      %v269 = vld [vmem:[%s172 + $0x70] sm:$0x11]
      %v270 = vld [vmem:[%s172 + $0x78] sm:$0x11]
      %v271 = vld [vmem:[%s172 + $0x90] sm:$0x11]
      %v272 = vld [vmem:[%s172 + $0x98] sm:$0x11]
      %v273 = vld [vmem:[%s172 + $0xb0] sm:$0x11]
      %v274 = vld [vmem:[%s172 + $0xb8] sm:$0x11]
      %v275 = vld [vmem:[%s172 + $0xd0] sm:$0x11]
      %v276 = vld [vmem:[%s172 + $0xd8] sm:$0x11]
      %v277 = vld [vmem:[%s172 + $0xf0] sm:$0x11]
      %v278 = vld [vmem:[%s172 + $0xf8] sm:$0x11]
      %vm279 = vsmask.f32 3328
      %vm280 = vsmask.f32 7440
      %vm281 = vmor %vm279, %vm280
      %v283 = vshrl.u32 %v183, 16
      %v285 = vrot.slane %v283, 4
      %v286 = vshll.u32 %v183, 16
      %v288 = vrot.slane %v286, 5
      %v289 = vor.u32 %v285, %v288
      %v290 = vrot.slane %v289, 4
      %v292 = vshll.u32 %v263, 16
      %v294 = vrot.slane %v292, 5
      %v295 = vsel %vm281, %v290, %v294
      %v297 = vshrl.u32 %v184, 16
      %v299 = vrot.slane %v297, 4
      %v300 = vshll.u32 %v184, 16
      %v302 = vrot.slane %v300, 5
      %v303 = vor.u32 %v299, %v302
      %v304 = vrot.slane %v303, 4
      %v306 = vshll.u32 %v264, 16
      %v308 = vrot.slane %v306, 5
      %v309 = vsel %vm281, %v304, %v308
      %v311 = vshrl.u32 %v185, 16
      %v313 = vrot.slane %v311, 4
      %v314 = vshll.u32 %v185, 16
      %v316 = vrot.slane %v314, 5
      %v317 = vor.u32 %v313, %v316
      %v318 = vrot.slane %v317, 4
      %v320 = vshll.u32 %v265, 16
      %v322 = vrot.slane %v320, 5
      %v323 = vsel %vm281, %v318, %v322
      %v325 = vshrl.u32 %v186, 16
      %v327 = vrot.slane %v325, 4
      %v328 = vshll.u32 %v186, 16
      %v330 = vrot.slane %v328, 5
      %v331 = vor.u32 %v327, %v330
      %v332 = vrot.slane %v331, 4
      %v334 = vshll.u32 %v266, 16
      %v336 = vrot.slane %v334, 5
      %v337 = vsel %vm281, %v332, %v336
      %v339 = vshrl.u32 %v187, 16
      %v341 = vrot.slane %v339, 4
      %v342 = vshll.u32 %v187, 16
      %v344 = vrot.slane %v342, 5
      %v345 = vor.u32 %v341, %v344
      %v346 = vrot.slane %v345, 4
      %v348 = vshll.u32 %v267, 16
      %v350 = vrot.slane %v348, 5
      %v351 = vsel %vm281, %v346, %v350
      %v353 = vshrl.u32 %v188, 16
      %v355 = vrot.slane %v353, 4
      %v356 = vshll.u32 %v188, 16
      %v358 = vrot.slane %v356, 5
      %v359 = vor.u32 %v355, %v358
      %v360 = vrot.slane %v359, 4
      %v362 = vshll.u32 %v268, 16
      %v364 = vrot.slane %v362, 5
      %v365 = vsel %vm281, %v360, %v364
      %v367 = vshrl.u32 %v189, 16
      %v369 = vrot.slane %v367, 4
      %v370 = vshll.u32 %v189, 16
      %v372 = vrot.slane %v370, 5
      %v373 = vor.u32 %v369, %v372
      %v374 = vrot.slane %v373, 4
      %v376 = vshll.u32 %v269, 16
      %v378 = vrot.slane %v376, 5
      %v379 = vsel %vm281, %v374, %v378
      %v381 = vshrl.u32 %v190, 16
      %v383 = vrot.slane %v381, 4
      %v384 = vshll.u32 %v190, 16
      %v386 = vrot.slane %v384, 5
      %v387 = vor.u32 %v383, %v386
      %v388 = vrot.slane %v387, 4
      %v390 = vshll.u32 %v270, 16
      %v392 = vrot.slane %v390, 5
      %v393 = vsel %vm281, %v388, %v392
      %v395 = vshrl.u32 %v191, 16
      %v397 = vrot.slane %v395, 4
      %v398 = vshll.u32 %v191, 16
      %v400 = vrot.slane %v398, 5
      %v401 = vor.u32 %v397, %v400
      %v402 = vrot.slane %v401, 4
      %v404 = vshll.u32 %v271, 16
      %v406 = vrot.slane %v404, 5
      %v407 = vsel %vm281, %v402, %v406
      %v409 = vshrl.u32 %v192, 16
      %v411 = vrot.slane %v409, 4
      %v412 = vshll.u32 %v192, 16
      %v414 = vrot.slane %v412, 5
      %v415 = vor.u32 %v411, %v414
      %v416 = vrot.slane %v415, 4
      %v418 = vshll.u32 %v272, 16
      %v420 = vrot.slane %v418, 5
      %v421 = vsel %vm281, %v416, %v420
      %v423 = vshrl.u32 %v193, 16
      %v425 = vrot.slane %v423, 4
      %v426 = vshll.u32 %v193, 16
      %v428 = vrot.slane %v426, 5
      %v429 = vor.u32 %v425, %v428
      %v430 = vrot.slane %v429, 4
      %v432 = vshll.u32 %v273, 16
      %v434 = vrot.slane %v432, 5
      %v435 = vsel %vm281, %v430, %v434
      %v437 = vshrl.u32 %v194, 16
      %v439 = vrot.slane %v437, 4
      %v440 = vshll.u32 %v194, 16
      %v442 = vrot.slane %v440, 5
      %v443 = vor.u32 %v439, %v442
      %v444 = vrot.slane %v443, 4
      %v446 = vshll.u32 %v274, 16
      %v448 = vrot.slane %v446, 5
      %v449 = vsel %vm281, %v444, %v448
      %v451 = vshrl.u32 %v195, 16
      %v453 = vrot.slane %v451, 4
      %v454 = vshll.u32 %v195, 16
      %v456 = vrot.slane %v454, 5
      %v457 = vor.u32 %v453, %v456
      %v458 = vrot.slane %v457, 4
      %v460 = vshll.u32 %v275, 16
      %v462 = vrot.slane %v460, 5
      %v463 = vsel %vm281, %v458, %v462
      %v465 = vshrl.u32 %v196, 16
      %v467 = vrot.slane %v465, 4
      %v468 = vshll.u32 %v196, 16
      %v470 = vrot.slane %v468, 5
      %v471 = vor.u32 %v467, %v470
      %v472 = vrot.slane %v471, 4
      %v474 = vshll.u32 %v276, 16
      %v476 = vrot.slane %v474, 5
      %v477 = vsel %vm281, %v472, %v476
      %v479 = vshrl.u32 %v197, 16
      %v481 = vrot.slane %v479, 4
      %v482 = vshll.u32 %v197, 16
      %v484 = vrot.slane %v482, 5
      %v485 = vor.u32 %v481, %v484
      %v486 = vrot.slane %v485, 4
      %v488 = vshll.u32 %v277, 16
      %v490 = vrot.slane %v488, 5
      %v491 = vsel %vm281, %v486, %v490
      %v493 = vshrl.u32 %v198, 16
      %v495 = vrot.slane %v493, 4
      %v496 = vshll.u32 %v198, 16
      %v498 = vrot.slane %v496, 5
      %v499 = vor.u32 %v495, %v498
      %v500 = vrot.slane %v499, 4
      %v502 = vshll.u32 %v278, 16
      %v504 = vrot.slane %v502, 5
      %v505 = vsel %vm281, %v500, %v504
      %s506 = scalar_lea.vmem %s1, 256
      %v507 = vld [vmem:[%s506] sm:$0xf]
      %v508 = vld [vmem:[%s506 + $0x4] sm:$0xf]
      %v509 = vld [vmem:[%s506 + $0x8] sm:$0xf]
      %v510 = vld [vmem:[%s506 + $0xc] sm:$0xf]
      %v511 = vld [vmem:[%s506 + $0x10] sm:$0xf]
      %v512 = vld [vmem:[%s506 + $0x14] sm:$0xf]
      %v513 = vld [vmem:[%s506 + $0x18] sm:$0xf]
      %v514 = vld [vmem:[%s506 + $0x1c] sm:$0xf]
      %v515 = vld [vmem:[%s506 + $0x20] sm:$0xf]
      %v516 = vld [vmem:[%s506 + $0x24] sm:$0xf]
      %v517 = vld [vmem:[%s506 + $0x28] sm:$0xf]
      %v518 = vld [vmem:[%s506 + $0x2c] sm:$0xf]
      %v519 = vld [vmem:[%s506 + $0x30] sm:$0xf]
      %v520 = vld [vmem:[%s506 + $0x34] sm:$0xf]
      %v521 = vld [vmem:[%s506 + $0x38] sm:$0xf]
      %v522 = vld [vmem:[%s506 + $0x3c] sm:$0xf]
      %v523 = vld [vmem:[%s506 + $0x40] sm:$0xf]
      %v524 = vld [vmem:[%s506 + $0x44] sm:$0xf]
      %v525 = vld [vmem:[%s506 + $0x48] sm:$0xf]
      %v526 = vld [vmem:[%s506 + $0x4c] sm:$0xf]
      %v527 = vld [vmem:[%s506 + $0x50] sm:$0xf]
      %v528 = vld [vmem:[%s506 + $0x54] sm:$0xf]
      %v529 = vld [vmem:[%s506 + $0x58] sm:$0xf]
      %v530 = vld [vmem:[%s506 + $0x5c] sm:$0xf]
      %v531 = vld [vmem:[%s506 + $0x60] sm:$0xf]
      %v532 = vld [vmem:[%s506 + $0x64] sm:$0xf]
      %v533 = vld [vmem:[%s506 + $0x68] sm:$0xf]
      %v534 = vld [vmem:[%s506 + $0x6c] sm:$0xf]
      %v535 = vld [vmem:[%s506 + $0x70] sm:$0xf]
      %v536 = vld [vmem:[%s506 + $0x74] sm:$0xf]
      %v537 = vld [vmem:[%s506 + $0x78] sm:$0xf]
      %v538 = vld [vmem:[%s506 + $0x7c] sm:$0xf]
      %v539 = vld [vmem:[%s506 + $0x80] sm:$0xf]
      %v540 = vld [vmem:[%s506 + $0x84] sm:$0xf]
      %v541 = vld [vmem:[%s506 + $0x88] sm:$0xf]
      %v542 = vld [vmem:[%s506 + $0x8c] sm:$0xf]
      %v543 = vld [vmem:[%s506 + $0x90] sm:$0xf]
      %v544 = vld [vmem:[%s506 + $0x94] sm:$0xf]
      %v545 = vld [vmem:[%s506 + $0x98] sm:$0xf]
      %v546 = vld [vmem:[%s506 + $0x9c] sm:$0xf]
      %v547 = vld [vmem:[%s506 + $0xa0] sm:$0xf]
      %v548 = vld [vmem:[%s506 + $0xa4] sm:$0xf]
      %v549 = vld [vmem:[%s506 + $0xa8] sm:$0xf]
      %v550 = vld [vmem:[%s506 + $0xac] sm:$0xf]
      %v551 = vld [vmem:[%s506 + $0xb0] sm:$0xf]
      %v552 = vld [vmem:[%s506 + $0xb4] sm:$0xf]
      %v553 = vld [vmem:[%s506 + $0xb8] sm:$0xf]
      %v554 = vld [vmem:[%s506 + $0xbc] sm:$0xf]
      %v555 = vld [vmem:[%s506 + $0xc0] sm:$0xf]
      %v556 = vld [vmem:[%s506 + $0xc4] sm:$0xf]
      %v557 = vld [vmem:[%s506 + $0xc8] sm:$0xf]
      %v558 = vld [vmem:[%s506 + $0xcc] sm:$0xf]
      %v559 = vld [vmem:[%s506 + $0xd0] sm:$0xf]
      %v560 = vld [vmem:[%s506 + $0xd4] sm:$0xf]
      %v561 = vld [vmem:[%s506 + $0xd8] sm:$0xf]
      %v562 = vld [vmem:[%s506 + $0xdc] sm:$0xf]
      %v563 = vld [vmem:[%s506 + $0xe0] sm:$0xf]
      %v564 = vld [vmem:[%s506 + $0xe4] sm:$0xf]
      %v565 = vld [vmem:[%s506 + $0xe8] sm:$0xf]
      %v566 = vld [vmem:[%s506 + $0xec] sm:$0xf]
      %v567 = vld [vmem:[%s506 + $0xf0] sm:$0xf]
      %v568 = vld [vmem:[%s506 + $0xf4] sm:$0xf]
      %v569 = vld [vmem:[%s506 + $0xf8] sm:$0xf]
      %v570 = vld [vmem:[%s506 + $0xfc] sm:$0xf]
      %v571 = vunpack.c.l.b16 %v295
      %v572 = vunpack.c.h.b16 %v295
      %v573 = vunpack.c.l.b16 %v309
      %v574 = vunpack.c.h.b16 %v309
      %v575 = vunpack.c.l.b16 %v323
      %v576 = vunpack.c.h.b16 %v323
      %v577 = vunpack.c.l.b16 %v337
      %v578 = vunpack.c.h.b16 %v337
      %v579 = vunpack.c.l.b16 %v351
      %v580 = vunpack.c.h.b16 %v351
      %v581 = vunpack.c.l.b16 %v365
      %v582 = vunpack.c.h.b16 %v365
      %v583 = vunpack.c.l.b16 %v379
      %v584 = vunpack.c.h.b16 %v379
      %v585 = vunpack.c.l.b16 %v393
      %v586 = vunpack.c.h.b16 %v393
      %v587 = vunpack.c.l.b16 %v407
      %v588 = vunpack.c.h.b16 %v407
      %v589 = vunpack.c.l.b16 %v421
      %v590 = vunpack.c.h.b16 %v421
      %v591 = vunpack.c.l.b16 %v435
      %v592 = vunpack.c.h.b16 %v435
      %v593 = vunpack.c.l.b16 %v449
      %v594 = vunpack.c.h.b16 %v449
      %v595 = vunpack.c.l.b16 %v463
      %v596 = vunpack.c.h.b16 %v463
      %v597 = vunpack.c.l.b16 %v477
      %v598 = vunpack.c.h.b16 %v477
      %v599 = vunpack.c.l.b16 %v491
      %v600 = vunpack.c.h.b16 %v491
      %v601 = vunpack.c.l.b16 %v505
      %v602 = vunpack.c.h.b16 %v505
      %v603 = vpack.c.b16 %v575, %v571
      %v604 = vpack.c.b16 %v576, %v572
      %v605 = vpack.c.b16 %v577, %v573
      %v606 = vpack.c.b16 %v578, %v574
      %v607 = vpack.c.b16 %v583, %v579
      %v608 = vpack.c.b16 %v584, %v580
      %v609 = vpack.c.b16 %v585, %v581
      %v610 = vpack.c.b16 %v586, %v582
      %v611 = vpack.c.b16 %v591, %v587
      %v612 = vpack.c.b16 %v592, %v588
      %v613 = vpack.c.b16 %v593, %v589
      %v614 = vpack.c.b16 %v594, %v590
      %v615 = vpack.c.b16 %v599, %v595
      %v616 = vpack.c.b16 %v600, %v596
      %v617 = vpack.c.b16 %v601, %v597
      %v618 = vpack.c.b16 %v602, %v598
      %v699 = vunpack.c.l.b16 %v507
      %v700 = vunpack.c.l.b16 %v508
      %v701 = vunpack.c.l.b16 %v509
      %v702 = vunpack.c.l.b16 %v510
      %v703 = vunpack.c.l.b16 %v511
      %v704 = vunpack.c.l.b16 %v512
      %v705 = vunpack.c.l.b16 %v513
      %v706 = vunpack.c.l.b16 %v514
      %v707 = vunpack.c.l.b16 %v515
      %v708 = vunpack.c.l.b16 %v516
      %v709 = vunpack.c.l.b16 %v517
      %v710 = vunpack.c.l.b16 %v518
      %v711 = vunpack.c.l.b16 %v519
      %v712 = vunpack.c.l.b16 %v520
      %v713 = vunpack.c.l.b16 %v521
      %v714 = vunpack.c.l.b16 %v522
      %v715 = vunpack.c.l.b16 %v523
      %v716 = vunpack.c.l.b16 %v524
      %v717 = vunpack.c.l.b16 %v525
      %v718 = vunpack.c.l.b16 %v526
      %v719 = vunpack.c.l.b16 %v527
      %v720 = vunpack.c.l.b16 %v528
      %v721 = vunpack.c.l.b16 %v529
      %v722 = vunpack.c.l.b16 %v530
      %v723 = vunpack.c.l.b16 %v531
      %v724 = vunpack.c.l.b16 %v532
      %v725 = vunpack.c.l.b16 %v533
      %v726 = vunpack.c.l.b16 %v534
      %v727 = vunpack.c.l.b16 %v535
      %v728 = vunpack.c.l.b16 %v536
      %v729 = vunpack.c.l.b16 %v537
      %v730 = vunpack.c.l.b16 %v538
      %v731 = vunpack.c.l.b16 %v539
      %v732 = vunpack.c.l.b16 %v540
      %v733 = vunpack.c.l.b16 %v541
      %v734 = vunpack.c.l.b16 %v542
      %v735 = vunpack.c.l.b16 %v543
      %v736 = vunpack.c.l.b16 %v544
      %v737 = vunpack.c.l.b16 %v545
      %v738 = vunpack.c.l.b16 %v546
      %v739 = vunpack.c.l.b16 %v547
      %v740 = vunpack.c.l.b16 %v548
      %v741 = vunpack.c.l.b16 %v549
      %v742 = vunpack.c.l.b16 %v550
      %v743 = vunpack.c.l.b16 %v551
      %v744 = vunpack.c.l.b16 %v552
      %v745 = vunpack.c.l.b16 %v553
      %v746 = vunpack.c.l.b16 %v554
      %v747 = vunpack.c.l.b16 %v555
      %v748 = vunpack.c.l.b16 %v556
      %v749 = vunpack.c.l.b16 %v557
      %v750 = vunpack.c.l.b16 %v558
      %v751 = vunpack.c.l.b16 %v559
      %v752 = vunpack.c.l.b16 %v560
      %v753 = vunpack.c.l.b16 %v561
      %v754 = vunpack.c.l.b16 %v562
      %v755 = vunpack.c.l.b16 %v563
      %v756 = vunpack.c.l.b16 %v564
      %v757 = vunpack.c.l.b16 %v565
      %v758 = vunpack.c.l.b16 %v566
      %v759 = vunpack.c.l.b16 %v567
      %v760 = vunpack.c.l.b16 %v568
      %v761 = vunpack.c.l.b16 %v569
      %v762 = vunpack.c.l.b16 %v570
      %v763 = vpack.c.b16 %v700, %v699
      %v764 = vpack.c.b16 %v702, %v701
      %v765 = vpack.c.b16 %v704, %v703
      %v766 = vpack.c.b16 %v706, %v705
      %v767 = vpack.c.b16 %v708, %v707
      %v768 = vpack.c.b16 %v710, %v709
      %v769 = vpack.c.b16 %v712, %v711
      %v770 = vpack.c.b16 %v714, %v713
      %v771 = vpack.c.b16 %v716, %v715
      %v772 = vpack.c.b16 %v718, %v717
      %v773 = vpack.c.b16 %v720, %v719
      %v774 = vpack.c.b16 %v722, %v721
      %v775 = vpack.c.b16 %v724, %v723
      %v776 = vpack.c.b16 %v726, %v725
      %v777 = vpack.c.b16 %v728, %v727
      %v778 = vpack.c.b16 %v730, %v729
      %v779 = vpack.c.b16 %v732, %v731
      %v780 = vpack.c.b16 %v734, %v733
      %v781 = vpack.c.b16 %v736, %v735
      %v782 = vpack.c.b16 %v738, %v737
      %v783 = vpack.c.b16 %v740, %v739
      %v784 = vpack.c.b16 %v742, %v741
      %v785 = vpack.c.b16 %v744, %v743
      %v786 = vpack.c.b16 %v746, %v745
      %v787 = vpack.c.b16 %v748, %v747
      %v788 = vpack.c.b16 %v750, %v749
      %v789 = vpack.c.b16 %v752, %v751
      %v790 = vpack.c.b16 %v754, %v753
      %v791 = vpack.c.b16 %v756, %v755
      %v792 = vpack.c.b16 %v758, %v757
      %v793 = vpack.c.b16 %v760, %v759
      %v794 = vpack.c.b16 %v762, %v761
      %827 = vmatprep.subr.bf16.mxu0 0
      %828 = vmatpush1.bf16.msra.mxu0 %v770
      %829 = vmatprep.subr.bf16.mxu0 0
      %830 = vmatpush1.bf16.msra.mxu0 %v769
      %831 = vmatprep.subr.bf16.mxu0 0
      %832 = vmatpush1.bf16.msra.mxu0 %v768
      %833 = vmatprep.subr.bf16.mxu0 0
      %834 = vmatpush1.bf16.msra.mxu0 %v767
      %835 = vmatprep.subr.bf16.mxu0 0
      %836 = vmatpush1.bf16.msra.mxu0 %v766
      %837 = vmatprep.subr.bf16.mxu0 0
      %838 = vmatpush1.bf16.msra.mxu0 %v765
      %839 = vmatprep.subr.bf16.mxu0 0
      %840 = vmatpush1.bf16.msra.mxu0 %v764
      %841 = vmatprep.subr.bf16.mxu0 0
      %842 = vmatpush1.bf16.msra.mxu0 %v763
      %843 = vmatprep.subr.bf16.mxu0 0
      %844 = vmatpush2.bf16.msra.mxu0 %v778
      %845 = vmatprep.subr.bf16.mxu0 0
      %846 = vmatpush2.bf16.msra.mxu0 %v777
      %847 = vmatprep.subr.bf16.mxu0 0
      %848 = vmatpush2.bf16.msra.mxu0 %v776
      %849 = vmatprep.subr.bf16.mxu0 0
      %850 = vmatpush2.bf16.msra.mxu0 %v775
      %851 = vmatprep.subr.bf16.mxu0 0
      %852 = vmatpush2.bf16.msra.mxu0 %v774
      %853 = vmatprep.subr.bf16.mxu0 0
      %854 = vmatpush2.bf16.msra.mxu0 %v773
      %855 = vmatprep.subr.bf16.mxu0 0
      %856 = vmatpush2.bf16.msra.mxu0 %v772
      %857 = vmatprep.subr.bf16.mxu0 0
      %858 = vmatpush2.bf16.msra.mxu0 %v771
      %859 = vmatprep.mubr.bf16.mxu0 %v604
      %860 = vmatmul.mubr.bf16.gmra.mxu0 %v603
      %v861 = vpop.f32.mrf.mxu0
      %v862 = vadd.f32 0.0, %v861
      %v863 = vpop.f32.mrf.mxu0
      %v864 = vpop.f32.mrf.mxu0
      %v865 = vadd.f32 0.0, %v864
      %v866 = vpop.f32.mrf.mxu0
      %867 = vmatprep.mubr.bf16.mxu0 %v608
      %868 = vmatmul.mubr.bf16.gmra.mxu0 %v607
      %v869 = vpop.f32.mrf.mxu0
      %v870 = vadd.f32 0.0, %v869
      %v871 = vpop.f32.mrf.mxu0
      %v872 = vpop.f32.mrf.mxu0
      %v873 = vadd.f32 0.0, %v872
      %v874 = vpop.f32.mrf.mxu0
      %875 = vmatprep.mubr.bf16.mxu0 %v612
      %876 = vmatmul.mubr.bf16.gmra.mxu0 %v611
      %v877 = vpop.f32.mrf.mxu0
      %v878 = vadd.f32 0.0, %v877
      %v879 = vpop.f32.mrf.mxu0
      %v880 = vpop.f32.mrf.mxu0
      %v881 = vadd.f32 0.0, %v880
      %v882 = vpop.f32.mrf.mxu0
      %883 = vmatprep.mubr.bf16.mxu0 %v616
      %884 = vmatmul.mubr.bf16.gmra.mxu0 %v615
      %v885 = vpop.f32.mrf.mxu0
      %v886 = vadd.f32 0.0, %v885
      %v887 = vpop.f32.mrf.mxu0
      %v888 = vpop.f32.mrf.mxu0
      %v889 = vadd.f32 0.0, %v888
      %v890 = vpop.f32.mrf.mxu0
      %891 = vdwg.mxu0
      %892 = vmatprep.subr.bf16.mxu0 0
      %893 = vmatpush1.bf16.msra.mxu0 %v786
      %894 = vmatprep.subr.bf16.mxu0 0
      %895 = vmatpush1.bf16.msra.mxu0 %v785
      %896 = vmatprep.subr.bf16.mxu0 0
      %897 = vmatpush1.bf16.msra.mxu0 %v784
      %898 = vmatprep.subr.bf16.mxu0 0
      %899 = vmatpush1.bf16.msra.mxu0 %v783
      %900 = vmatprep.subr.bf16.mxu0 0
      %901 = vmatpush1.bf16.msra.mxu0 %v782
      %902 = vmatprep.subr.bf16.mxu0 0
      %903 = vmatpush1.bf16.msra.mxu0 %v781
      %904 = vmatprep.subr.bf16.mxu0 0
      %905 = vmatpush1.bf16.msra.mxu0 %v780
      %906 = vmatprep.subr.bf16.mxu0 0
      %907 = vmatpush1.bf16.msra.mxu0 %v779
      %908 = vmatprep.subr.bf16.mxu0 0
      %909 = vmatpush2.bf16.msra.mxu0 %v794
      %910 = vmatprep.subr.bf16.mxu0 0
      %911 = vmatpush2.bf16.msra.mxu0 %v793
      %912 = vmatprep.subr.bf16.mxu0 0
      %913 = vmatpush2.bf16.msra.mxu0 %v792
      %914 = vmatprep.subr.bf16.mxu0 0
      %915 = vmatpush2.bf16.msra.mxu0 %v791
      %916 = vmatprep.subr.bf16.mxu0 0
      %917 = vmatpush2.bf16.msra.mxu0 %v790
      %918 = vmatprep.subr.bf16.mxu0 0
      %919 = vmatpush2.bf16.msra.mxu0 %v789
      %920 = vmatprep.subr.bf16.mxu0 0
      %921 = vmatpush2.bf16.msra.mxu0 %v788
      %922 = vmatprep.subr.bf16.mxu0 0
      %923 = vmatpush2.bf16.msra.mxu0 %v787
      %924 = vmatprep.mubr.bf16.mxu0 %v606
      %925 = vmatmul.mubr.bf16.gmra.mxu0 %v605
      %v926 = vpop.f32.mrf.mxu0
      %v927 = vadd.f32 %v862, %v926
      %v928 = vpop.f32.mrf.mxu0
      %v929 = vpop.f32.mrf.mxu0
      %v930 = vadd.f32 %v865, %v929
      %v931 = vpop.f32.mrf.mxu0
      %932 = vmatprep.mubr.bf16.mxu0 %v610
      %933 = vmatmul.mubr.bf16.gmra.mxu0 %v609
      %v934 = vpop.f32.mrf.mxu0
      %v935 = vadd.f32 %v870, %v934
      %v936 = vpop.f32.mrf.mxu0
      %v937 = vpop.f32.mrf.mxu0
      %v938 = vadd.f32 %v873, %v937
      %v939 = vpop.f32.mrf.mxu0
      %940 = vmatprep.mubr.bf16.mxu0 %v614
      %941 = vmatmul.mubr.bf16.gmra.mxu0 %v613
      %v942 = vpop.f32.mrf.mxu0
      %v943 = vadd.f32 %v878, %v942
      %v944 = vpop.f32.mrf.mxu0
      %v945 = vpop.f32.mrf.mxu0
      %v946 = vadd.f32 %v881, %v945
      %v947 = vpop.f32.mrf.mxu0
      %948 = vmatprep.mubr.bf16.mxu0 %v618
      %949 = vmatmul.mubr.bf16.gmra.mxu0 %v617
      %v950 = vpop.f32.mrf.mxu0
      %v951 = vadd.f32 %v886, %v950
      %v952 = vpop.f32.mrf.mxu0
      %v953 = vpop.f32.mrf.mxu0
      %v954 = vadd.f32 %v889, %v953
      %v955 = vpop.f32.mrf.mxu0
      %956 = vdwg.mxu0
      %v973 = vunpack.c.l.b16 %v183
      %v974 = vunpack.c.h.b16 %v183
      %v975 = vunpack.c.l.b16 %v184
      %v976 = vunpack.c.h.b16 %v184
      %v977 = vunpack.c.l.b16 %v185
      %v978 = vunpack.c.h.b16 %v185
      %v979 = vunpack.c.l.b16 %v186
      %v980 = vunpack.c.h.b16 %v186
      %v981 = vunpack.c.l.b16 %v187
      %v982 = vunpack.c.h.b16 %v187
      %v983 = vunpack.c.l.b16 %v188
      %v984 = vunpack.c.h.b16 %v188
      %v985 = vunpack.c.l.b16 %v189
      %v986 = vunpack.c.h.b16 %v189
      %v987 = vunpack.c.l.b16 %v190
      %v988 = vunpack.c.h.b16 %v190
      %v989 = vunpack.c.l.b16 %v191
      %v990 = vunpack.c.h.b16 %v191
      %v991 = vunpack.c.l.b16 %v192
      %v992 = vunpack.c.h.b16 %v192
      %v993 = vunpack.c.l.b16 %v193
      %v994 = vunpack.c.h.b16 %v193
      %v995 = vunpack.c.l.b16 %v194
      %v996 = vunpack.c.h.b16 %v194
      %v997 = vunpack.c.l.b16 %v195
      %v998 = vunpack.c.h.b16 %v195
      %v999 = vunpack.c.l.b16 %v196
      %v1000 = vunpack.c.h.b16 %v196
      %v1001 = vunpack.c.l.b16 %v197
      %v1002 = vunpack.c.h.b16 %v197
      %v1003 = vunpack.c.l.b16 %v198
      %v1004 = vunpack.c.h.b16 %v198
      %v1005 = vpack.c.b16 %v977, %v973
      %v1006 = vpack.c.b16 %v978, %v974
      %v1007 = vpack.c.b16 %v979, %v975
      %v1008 = vpack.c.b16 %v980, %v976
      %v1009 = vpack.c.b16 %v985, %v981
      %v1010 = vpack.c.b16 %v986, %v982
      %v1011 = vpack.c.b16 %v987, %v983
      %v1012 = vpack.c.b16 %v988, %v984
      %v1013 = vpack.c.b16 %v993, %v989
      %v1014 = vpack.c.b16 %v994, %v990
      %v1015 = vpack.c.b16 %v995, %v991
      %v1016 = vpack.c.b16 %v996, %v992
      %v1017 = vpack.c.b16 %v1001, %v997
      %v1018 = vpack.c.b16 %v1002, %v998
      %v1019 = vpack.c.b16 %v1003, %v999
      %v1020 = vpack.c.b16 %v1004, %v1000
      %v1101 = vunpack.c.l.b16 %v199
      %v1102 = vunpack.c.l.b16 %v200
      %v1103 = vunpack.c.l.b16 %v201
      %v1104 = vunpack.c.l.b16 %v202
      %v1105 = vunpack.c.l.b16 %v203
      %v1106 = vunpack.c.l.b16 %v204
      %v1107 = vunpack.c.l.b16 %v205
      %v1108 = vunpack.c.l.b16 %v206
      %v1109 = vunpack.c.l.b16 %v207
      %v1110 = vunpack.c.l.b16 %v208
      %v1111 = vunpack.c.l.b16 %v209
      %v1112 = vunpack.c.l.b16 %v210
      %v1113 = vunpack.c.l.b16 %v211
      %v1114 = vunpack.c.l.b16 %v212
      %v1115 = vunpack.c.l.b16 %v213
      %v1116 = vunpack.c.l.b16 %v214
      %v1117 = vunpack.c.l.b16 %v215
      %v1118 = vunpack.c.l.b16 %v216
      %v1119 = vunpack.c.l.b16 %v217
      %v1120 = vunpack.c.l.b16 %v218
      %v1121 = vunpack.c.l.b16 %v219
      %v1122 = vunpack.c.l.b16 %v220
      %v1123 = vunpack.c.l.b16 %v221
      %v1124 = vunpack.c.l.b16 %v222
      %v1125 = vunpack.c.l.b16 %v223
      %v1126 = vunpack.c.l.b16 %v224
      %v1127 = vunpack.c.l.b16 %v225
      %v1128 = vunpack.c.l.b16 %v226
      %v1129 = vunpack.c.l.b16 %v227
      %v1130 = vunpack.c.l.b16 %v228
      %v1131 = vunpack.c.l.b16 %v229
      %v1132 = vunpack.c.l.b16 %v230
      %v1133 = vunpack.c.l.b16 %v231
      %v1134 = vunpack.c.l.b16 %v232
      %v1135 = vunpack.c.l.b16 %v233
      %v1136 = vunpack.c.l.b16 %v234
      %v1137 = vunpack.c.l.b16 %v235
      %v1138 = vunpack.c.l.b16 %v236
      %v1139 = vunpack.c.l.b16 %v237
      %v1140 = vunpack.c.l.b16 %v238
      %v1141 = vunpack.c.l.b16 %v239
      %v1142 = vunpack.c.l.b16 %v240
      %v1143 = vunpack.c.l.b16 %v241
      %v1144 = vunpack.c.l.b16 %v242
      %v1145 = vunpack.c.l.b16 %v243
      %v1146 = vunpack.c.l.b16 %v244
      %v1147 = vunpack.c.l.b16 %v245
      %v1148 = vunpack.c.l.b16 %v246
      %v1149 = vunpack.c.l.b16 %v247
      %v1150 = vunpack.c.l.b16 %v248
      %v1151 = vunpack.c.l.b16 %v249
      %v1152 = vunpack.c.l.b16 %v250
      %v1153 = vunpack.c.l.b16 %v251
      %v1154 = vunpack.c.l.b16 %v252
      %v1155 = vunpack.c.l.b16 %v253
      %v1156 = vunpack.c.l.b16 %v254
      %v1157 = vunpack.c.l.b16 %v255
      %v1158 = vunpack.c.l.b16 %v256
      %v1159 = vunpack.c.l.b16 %v257
      %v1160 = vunpack.c.l.b16 %v258
      %v1161 = vunpack.c.l.b16 %v259
      %v1162 = vunpack.c.l.b16 %v260
      %v1163 = vunpack.c.l.b16 %v261
      %v1164 = vunpack.c.l.b16 %v262
      %v1165 = vpack.c.b16 %v1102, %v1101
      %v1166 = vpack.c.b16 %v1104, %v1103
      %v1167 = vpack.c.b16 %v1106, %v1105
      %v1168 = vpack.c.b16 %v1108, %v1107
      %v1169 = vpack.c.b16 %v1110, %v1109
      %v1170 = vpack.c.b16 %v1112, %v1111
      %v1171 = vpack.c.b16 %v1114, %v1113
      %v1172 = vpack.c.b16 %v1116, %v1115
      %v1173 = vpack.c.b16 %v1118, %v1117
      %v1174 = vpack.c.b16 %v1120, %v1119
      %v1175 = vpack.c.b16 %v1122, %v1121
      %v1176 = vpack.c.b16 %v1124, %v1123
      %v1177 = vpack.c.b16 %v1126, %v1125
      %v1178 = vpack.c.b16 %v1128, %v1127
      %v1179 = vpack.c.b16 %v1130, %v1129
      %v1180 = vpack.c.b16 %v1132, %v1131
      %v1181 = vpack.c.b16 %v1134, %v1133
      %v1182 = vpack.c.b16 %v1136, %v1135
      %v1183 = vpack.c.b16 %v1138, %v1137
      %v1184 = vpack.c.b16 %v1140, %v1139
      %v1185 = vpack.c.b16 %v1142, %v1141
      %v1186 = vpack.c.b16 %v1144, %v1143
      %v1187 = vpack.c.b16 %v1146, %v1145
      %v1188 = vpack.c.b16 %v1148, %v1147
      %v1189 = vpack.c.b16 %v1150, %v1149
      %v1190 = vpack.c.b16 %v1152, %v1151
      %v1191 = vpack.c.b16 %v1154, %v1153
      %v1192 = vpack.c.b16 %v1156, %v1155
      %v1193 = vpack.c.b16 %v1158, %v1157
      %v1194 = vpack.c.b16 %v1160, %v1159
      %v1195 = vpack.c.b16 %v1162, %v1161
      %v1196 = vpack.c.b16 %v1164, %v1163
      %1229 = vmatprep.subr.bf16.mxu0 0
      %1230 = vmatpush1.bf16.msra.mxu0 %v1172
      %1231 = vmatprep.subr.bf16.mxu0 0
      %1232 = vmatpush1.bf16.msra.mxu0 %v1171
      %1233 = vmatprep.subr.bf16.mxu0 0
      %1234 = vmatpush1.bf16.msra.mxu0 %v1170
      %1235 = vmatprep.subr.bf16.mxu0 0
      %1236 = vmatpush1.bf16.msra.mxu0 %v1169
      %1237 = vmatprep.subr.bf16.mxu0 0
      %1238 = vmatpush1.bf16.msra.mxu0 %v1168
      %1239 = vmatprep.subr.bf16.mxu0 0
      %1240 = vmatpush1.bf16.msra.mxu0 %v1167
      %1241 = vmatprep.subr.bf16.mxu0 0
      %1242 = vmatpush1.bf16.msra.mxu0 %v1166
      %1243 = vmatprep.subr.bf16.mxu0 0
      %1244 = vmatpush1.bf16.msra.mxu0 %v1165
      %1245 = vmatprep.subr.bf16.mxu0 0
      %1246 = vmatpush2.bf16.msra.mxu0 %v1180
      %1247 = vmatprep.subr.bf16.mxu0 0
      %1248 = vmatpush2.bf16.msra.mxu0 %v1179
      %1249 = vmatprep.subr.bf16.mxu0 0
      %1250 = vmatpush2.bf16.msra.mxu0 %v1178
      %1251 = vmatprep.subr.bf16.mxu0 0
      %1252 = vmatpush2.bf16.msra.mxu0 %v1177
      %1253 = vmatprep.subr.bf16.mxu0 0
      %1254 = vmatpush2.bf16.msra.mxu0 %v1176
      %1255 = vmatprep.subr.bf16.mxu0 0
      %1256 = vmatpush2.bf16.msra.mxu0 %v1175
      %1257 = vmatprep.subr.bf16.mxu0 0
      %1258 = vmatpush2.bf16.msra.mxu0 %v1174
      %1259 = vmatprep.subr.bf16.mxu0 0
      %1260 = vmatpush2.bf16.msra.mxu0 %v1173
      %1261 = vmatprep.mubr.bf16.mxu0 %v1006
      %1262 = vmatmul.mubr.bf16.gmra.mxu0 %v1005
      %v1263 = vpop.f32.mrf.mxu0
      %v1264 = vadd.f32 %v927, %v1263
      %v1265 = vpop.f32.mrf.mxu0
      %v1266 = vpop.f32.mrf.mxu0
      %v1267 = vadd.f32 %v930, %v1266
      %v1268 = vpop.f32.mrf.mxu0
      %1269 = vmatprep.mubr.bf16.mxu0 %v1010
      %1270 = vmatmul.mubr.bf16.gmra.mxu0 %v1009
      %v1271 = vpop.f32.mrf.mxu0
      %v1272 = vadd.f32 %v935, %v1271
      %v1273 = vpop.f32.mrf.mxu0
      %v1274 = vpop.f32.mrf.mxu0
      %v1275 = vadd.f32 %v938, %v1274
      %v1276 = vpop.f32.mrf.mxu0
      %1277 = vmatprep.mubr.bf16.mxu0 %v1014
      %1278 = vmatmul.mubr.bf16.gmra.mxu0 %v1013
      %v1279 = vpop.f32.mrf.mxu0
      %v1280 = vadd.f32 %v943, %v1279
      %v1281 = vpop.f32.mrf.mxu0
      %v1282 = vpop.f32.mrf.mxu0
      %v1283 = vadd.f32 %v946, %v1282
      %v1284 = vpop.f32.mrf.mxu0
      %1285 = vmatprep.mubr.bf16.mxu0 %v1018
      %1286 = vmatmul.mubr.bf16.gmra.mxu0 %v1017
      %v1287 = vpop.f32.mrf.mxu0
      %v1288 = vadd.f32 %v951, %v1287
      %v1289 = vpop.f32.mrf.mxu0
      %v1290 = vpop.f32.mrf.mxu0
      %v1291 = vadd.f32 %v954, %v1290
      %v1292 = vpop.f32.mrf.mxu0
      %1293 = vdwg.mxu0
      %1294 = vmatprep.subr.bf16.mxu0 0
      %1295 = vmatpush1.bf16.msra.mxu0 %v1188
      %1296 = vmatprep.subr.bf16.mxu0 0
      %1297 = vmatpush1.bf16.msra.mxu0 %v1187
      %1298 = vmatprep.subr.bf16.mxu0 0
      %1299 = vmatpush1.bf16.msra.mxu0 %v1186
      %1300 = vmatprep.subr.bf16.mxu0 0
      %1301 = vmatpush1.bf16.msra.mxu0 %v1185
      %1302 = vmatprep.subr.bf16.mxu0 0
      %1303 = vmatpush1.bf16.msra.mxu0 %v1184
      %1304 = vmatprep.subr.bf16.mxu0 0
      %1305 = vmatpush1.bf16.msra.mxu0 %v1183
      %1306 = vmatprep.subr.bf16.mxu0 0
      %1307 = vmatpush1.bf16.msra.mxu0 %v1182
      %1308 = vmatprep.subr.bf16.mxu0 0
      %1309 = vmatpush1.bf16.msra.mxu0 %v1181
      %1310 = vmatprep.subr.bf16.mxu0 0
      %1311 = vmatpush2.bf16.msra.mxu0 %v1196
      %1312 = vmatprep.subr.bf16.mxu0 0
      %1313 = vmatpush2.bf16.msra.mxu0 %v1195
      %1314 = vmatprep.subr.bf16.mxu0 0
      %1315 = vmatpush2.bf16.msra.mxu0 %v1194
      %1316 = vmatprep.subr.bf16.mxu0 0
      %1317 = vmatpush2.bf16.msra.mxu0 %v1193
      %1318 = vmatprep.subr.bf16.mxu0 0
      %1319 = vmatpush2.bf16.msra.mxu0 %v1192
      %1320 = vmatprep.subr.bf16.mxu0 0
      %1321 = vmatpush2.bf16.msra.mxu0 %v1191
      %1322 = vmatprep.subr.bf16.mxu0 0
      %1323 = vmatpush2.bf16.msra.mxu0 %v1190
      %1324 = vmatprep.subr.bf16.mxu0 0
      %1325 = vmatpush2.bf16.msra.mxu0 %v1189
      %1326 = vmatprep.mubr.bf16.mxu0 %v1008
      %1327 = vmatmul.mubr.bf16.gmra.mxu0 %v1007
      %v1328 = vpop.f32.mrf.mxu0
      %v1329 = vadd.f32 %v1264, %v1328
      %v1330 = vpop.f32.mrf.mxu0
      %v1331 = vpop.f32.mrf.mxu0
      %v1332 = vadd.f32 %v1267, %v1331
      %v1333 = vpop.f32.mrf.mxu0
      %1334 = vmatprep.mubr.bf16.mxu0 %v1012
      %1335 = vmatmul.mubr.bf16.gmra.mxu0 %v1011
      %v1336 = vpop.f32.mrf.mxu0
      %v1337 = vadd.f32 %v1272, %v1336
      %v1338 = vpop.f32.mrf.mxu0
      %v1339 = vpop.f32.mrf.mxu0
      %v1340 = vadd.f32 %v1275, %v1339
      %v1341 = vpop.f32.mrf.mxu0
      %1342 = vmatprep.mubr.bf16.mxu0 %v1016
      %1343 = vmatmul.mubr.bf16.gmra.mxu0 %v1015
      %v1344 = vpop.f32.mrf.mxu0
      %v1345 = vadd.f32 %v1280, %v1344
      %v1346 = vpop.f32.mrf.mxu0
      %v1347 = vpop.f32.mrf.mxu0
      %v1348 = vadd.f32 %v1283, %v1347
      %v1349 = vpop.f32.mrf.mxu0
      %1350 = vmatprep.mubr.bf16.mxu0 %v1020
      %1351 = vmatmul.mubr.bf16.gmra.mxu0 %v1019
      %v1352 = vpop.f32.mrf.mxu0
      %v1353 = vadd.f32 %v1288, %v1352
      %v1354 = vpop.f32.mrf.mxu0
      %v1355 = vpop.f32.mrf.mxu0
      %v1356 = vadd.f32 %v1291, %v1355
      %v1357 = vpop.f32.mrf.mxu0
      %1358 = vdwg.mxu0
      %s1359 = scalar_lea.vmem %s172, 32
      %v1360 = vld [vmem:[%s1359] sm:$0xff]
      %v1361 = vld [vmem:[%s1359 + $0x8] sm:$0xff]
      %v1362 = vld [vmem:[%s1359 + $0x20] sm:$0xff]
      %v1363 = vld [vmem:[%s1359 + $0x28] sm:$0xff]
      %v1364 = vld [vmem:[%s1359 + $0x40] sm:$0xff]
      %v1365 = vld [vmem:[%s1359 + $0x48] sm:$0xff]
      %v1366 = vld [vmem:[%s1359 + $0x60] sm:$0xff]
      %v1367 = vld [vmem:[%s1359 + $0x68] sm:$0xff]
      %v1368 = vld [vmem:[%s1359 + $0x80] sm:$0xff]
      %v1369 = vld [vmem:[%s1359 + $0x88] sm:$0xff]
      %v1370 = vld [vmem:[%s1359 + $0xa0] sm:$0xff]
      %v1371 = vld [vmem:[%s1359 + $0xa8] sm:$0xff]
      %v1372 = vld [vmem:[%s1359 + $0xc0] sm:$0xff]
      %v1373 = vld [vmem:[%s1359 + $0xc8] sm:$0xff]
      %v1374 = vld [vmem:[%s1359 + $0xe0] sm:$0xff]
      %v1375 = vld [vmem:[%s1359 + $0xe8] sm:$0xff]
      %s1376 = scalar_lea.vmem %s1, 512
      %v1377 = vld [vmem:[%s1376] sm:$0xf]
      %v1378 = vld [vmem:[%s1376 + $0x4] sm:$0xf]
      %v1379 = vld [vmem:[%s1376 + $0x8] sm:$0xf]
      %v1380 = vld [vmem:[%s1376 + $0xc] sm:$0xf]
      %v1381 = vld [vmem:[%s1376 + $0x10] sm:$0xf]
      %v1382 = vld [vmem:[%s1376 + $0x14] sm:$0xf]
      %v1383 = vld [vmem:[%s1376 + $0x18] sm:$0xf]
      %v1384 = vld [vmem:[%s1376 + $0x1c] sm:$0xf]
      %v1385 = vld [vmem:[%s1376 + $0x20] sm:$0xf]
      %v1386 = vld [vmem:[%s1376 + $0x24] sm:$0xf]
      %v1387 = vld [vmem:[%s1376 + $0x28] sm:$0xf]
      %v1388 = vld [vmem:[%s1376 + $0x2c] sm:$0xf]
      %v1389 = vld [vmem:[%s1376 + $0x30] sm:$0xf]
      %v1390 = vld [vmem:[%s1376 + $0x34] sm:$0xf]
      %v1391 = vld [vmem:[%s1376 + $0x38] sm:$0xf]
      %v1392 = vld [vmem:[%s1376 + $0x3c] sm:$0xf]
      %v1393 = vld [vmem:[%s1376 + $0x40] sm:$0xf]
      %v1394 = vld [vmem:[%s1376 + $0x44] sm:$0xf]
      %v1395 = vld [vmem:[%s1376 + $0x48] sm:$0xf]
      %v1396 = vld [vmem:[%s1376 + $0x4c] sm:$0xf]
      %v1397 = vld [vmem:[%s1376 + $0x50] sm:$0xf]
      %v1398 = vld [vmem:[%s1376 + $0x54] sm:$0xf]
      %v1399 = vld [vmem:[%s1376 + $0x58] sm:$0xf]
      %v1400 = vld [vmem:[%s1376 + $0x5c] sm:$0xf]
      %v1401 = vld [vmem:[%s1376 + $0x60] sm:$0xf]
      %v1402 = vld [vmem:[%s1376 + $0x64] sm:$0xf]
      %v1403 = vld [vmem:[%s1376 + $0x68] sm:$0xf]
      %v1404 = vld [vmem:[%s1376 + $0x6c] sm:$0xf]
      %v1405 = vld [vmem:[%s1376 + $0x70] sm:$0xf]
      %v1406 = vld [vmem:[%s1376 + $0x74] sm:$0xf]
      %v1407 = vld [vmem:[%s1376 + $0x78] sm:$0xf]
      %v1408 = vld [vmem:[%s1376 + $0x7c] sm:$0xf]
      %v1409 = vld [vmem:[%s1376 + $0x80] sm:$0xf]
      %v1410 = vld [vmem:[%s1376 + $0x84] sm:$0xf]
      %v1411 = vld [vmem:[%s1376 + $0x88] sm:$0xf]
      %v1412 = vld [vmem:[%s1376 + $0x8c] sm:$0xf]
      %v1413 = vld [vmem:[%s1376 + $0x90] sm:$0xf]
      %v1414 = vld [vmem:[%s1376 + $0x94] sm:$0xf]
      %v1415 = vld [vmem:[%s1376 + $0x98] sm:$0xf]
      %v1416 = vld [vmem:[%s1376 + $0x9c] sm:$0xf]
      %v1417 = vld [vmem:[%s1376 + $0xa0] sm:$0xf]
      %v1418 = vld [vmem:[%s1376 + $0xa4] sm:$0xf]
      %v1419 = vld [vmem:[%s1376 + $0xa8] sm:$0xf]
      %v1420 = vld [vmem:[%s1376 + $0xac] sm:$0xf]
      %v1421 = vld [vmem:[%s1376 + $0xb0] sm:$0xf]
      %v1422 = vld [vmem:[%s1376 + $0xb4] sm:$0xf]
      %v1423 = vld [vmem:[%s1376 + $0xb8] sm:$0xf]
      %v1424 = vld [vmem:[%s1376 + $0xbc] sm:$0xf]
      %v1425 = vld [vmem:[%s1376 + $0xc0] sm:$0xf]
      %v1426 = vld [vmem:[%s1376 + $0xc4] sm:$0xf]
      %v1427 = vld [vmem:[%s1376 + $0xc8] sm:$0xf]
      %v1428 = vld [vmem:[%s1376 + $0xcc] sm:$0xf]
      %v1429 = vld [vmem:[%s1376 + $0xd0] sm:$0xf]
      %v1430 = vld [vmem:[%s1376 + $0xd4] sm:$0xf]
      %v1431 = vld [vmem:[%s1376 + $0xd8] sm:$0xf]
      %v1432 = vld [vmem:[%s1376 + $0xdc] sm:$0xf]
      %v1433 = vld [vmem:[%s1376 + $0xe0] sm:$0xf]
      %v1434 = vld [vmem:[%s1376 + $0xe4] sm:$0xf]
      %v1435 = vld [vmem:[%s1376 + $0xe8] sm:$0xf]
      %v1436 = vld [vmem:[%s1376 + $0xec] sm:$0xf]
      %v1437 = vld [vmem:[%s1376 + $0xf0] sm:$0xf]
      %v1438 = vld [vmem:[%s1376 + $0xf4] sm:$0xf]
      %v1439 = vld [vmem:[%s1376 + $0xf8] sm:$0xf]
      %v1440 = vld [vmem:[%s1376 + $0xfc] sm:$0xf]
      %v1457 = vunpack.c.l.b16 %v1360
      %v1458 = vunpack.c.h.b16 %v1360
      %v1459 = vunpack.c.l.b16 %v1361
      %v1460 = vunpack.c.h.b16 %v1361
      %v1461 = vunpack.c.l.b16 %v1362
      %v1462 = vunpack.c.h.b16 %v1362
      %v1463 = vunpack.c.l.b16 %v1363
      %v1464 = vunpack.c.h.b16 %v1363
      %v1465 = vunpack.c.l.b16 %v1364
      %v1466 = vunpack.c.h.b16 %v1364
      %v1467 = vunpack.c.l.b16 %v1365
      %v1468 = vunpack.c.h.b16 %v1365
      %v1469 = vunpack.c.l.b16 %v1366
      %v1470 = vunpack.c.h.b16 %v1366
      %v1471 = vunpack.c.l.b16 %v1367
      %v1472 = vunpack.c.h.b16 %v1367
      %v1473 = vunpack.c.l.b16 %v1368
      %v1474 = vunpack.c.h.b16 %v1368
      %v1475 = vunpack.c.l.b16 %v1369
      %v1476 = vunpack.c.h.b16 %v1369
      %v1477 = vunpack.c.l.b16 %v1370
      %v1478 = vunpack.c.h.b16 %v1370
      %v1479 = vunpack.c.l.b16 %v1371
      %v1480 = vunpack.c.h.b16 %v1371
      %v1481 = vunpack.c.l.b16 %v1372
      %v1482 = vunpack.c.h.b16 %v1372
      %v1483 = vunpack.c.l.b16 %v1373
      %v1484 = vunpack.c.h.b16 %v1373
      %v1485 = vunpack.c.l.b16 %v1374
      %v1486 = vunpack.c.h.b16 %v1374
      %v1487 = vunpack.c.l.b16 %v1375
      %v1488 = vunpack.c.h.b16 %v1375
      %v1489 = vpack.c.b16 %v1461, %v1457
      %v1490 = vpack.c.b16 %v1462, %v1458
      %v1491 = vpack.c.b16 %v1463, %v1459
      %v1492 = vpack.c.b16 %v1464, %v1460
      %v1493 = vpack.c.b16 %v1469, %v1465
      %v1494 = vpack.c.b16 %v1470, %v1466
      %v1495 = vpack.c.b16 %v1471, %v1467
      %v1496 = vpack.c.b16 %v1472, %v1468
      %v1497 = vpack.c.b16 %v1477, %v1473
      %v1498 = vpack.c.b16 %v1478, %v1474
      %v1499 = vpack.c.b16 %v1479, %v1475
      %v1500 = vpack.c.b16 %v1480, %v1476
      %v1501 = vpack.c.b16 %v1485, %v1481
      %v1502 = vpack.c.b16 %v1486, %v1482
      %v1503 = vpack.c.b16 %v1487, %v1483
      %v1504 = vpack.c.b16 %v1488, %v1484
      %v1585 = vunpack.c.l.b16 %v1377
      %v1586 = vunpack.c.l.b16 %v1378
      %v1587 = vunpack.c.l.b16 %v1379
      %v1588 = vunpack.c.l.b16 %v1380
      %v1589 = vunpack.c.l.b16 %v1381
      %v1590 = vunpack.c.l.b16 %v1382
      %v1591 = vunpack.c.l.b16 %v1383
      %v1592 = vunpack.c.l.b16 %v1384
      %v1593 = vunpack.c.l.b16 %v1385
      %v1594 = vunpack.c.l.b16 %v1386
      %v1595 = vunpack.c.l.b16 %v1387
      %v1596 = vunpack.c.l.b16 %v1388
      %v1597 = vunpack.c.l.b16 %v1389
      %v1598 = vunpack.c.l.b16 %v1390
      %v1599 = vunpack.c.l.b16 %v1391
      %v1600 = vunpack.c.l.b16 %v1392
      %v1601 = vunpack.c.l.b16 %v1393
      %v1602 = vunpack.c.l.b16 %v1394
      %v1603 = vunpack.c.l.b16 %v1395
      %v1604 = vunpack.c.l.b16 %v1396
      %v1605 = vunpack.c.l.b16 %v1397
      %v1606 = vunpack.c.l.b16 %v1398
      %v1607 = vunpack.c.l.b16 %v1399
      %v1608 = vunpack.c.l.b16 %v1400
      %v1609 = vunpack.c.l.b16 %v1401
      %v1610 = vunpack.c.l.b16 %v1402
      %v1611 = vunpack.c.l.b16 %v1403
      %v1612 = vunpack.c.l.b16 %v1404
      %v1613 = vunpack.c.l.b16 %v1405
      %v1614 = vunpack.c.l.b16 %v1406
      %v1615 = vunpack.c.l.b16 %v1407
      %v1616 = vunpack.c.l.b16 %v1408
      %v1617 = vunpack.c.l.b16 %v1409
      %v1618 = vunpack.c.l.b16 %v1410
      %v1619 = vunpack.c.l.b16 %v1411
      %v1620 = vunpack.c.l.b16 %v1412
      %v1621 = vunpack.c.l.b16 %v1413
      %v1622 = vunpack.c.l.b16 %v1414
      %v1623 = vunpack.c.l.b16 %v1415
      %v1624 = vunpack.c.l.b16 %v1416
      %v1625 = vunpack.c.l.b16 %v1417
      %v1626 = vunpack.c.l.b16 %v1418
      %v1627 = vunpack.c.l.b16 %v1419
      %v1628 = vunpack.c.l.b16 %v1420
      %v1629 = vunpack.c.l.b16 %v1421
      %v1630 = vunpack.c.l.b16 %v1422
      %v1631 = vunpack.c.l.b16 %v1423
      %v1632 = vunpack.c.l.b16 %v1424
      %v1633 = vunpack.c.l.b16 %v1425
      %v1634 = vunpack.c.l.b16 %v1426
      %v1635 = vunpack.c.l.b16 %v1427
      %v1636 = vunpack.c.l.b16 %v1428
      %v1637 = vunpack.c.l.b16 %v1429
      %v1638 = vunpack.c.l.b16 %v1430
      %v1639 = vunpack.c.l.b16 %v1431
      %v1640 = vunpack.c.l.b16 %v1432
      %v1641 = vunpack.c.l.b16 %v1433
      %v1642 = vunpack.c.l.b16 %v1434
      %v1643 = vunpack.c.l.b16 %v1435
      %v1644 = vunpack.c.l.b16 %v1436
      %v1645 = vunpack.c.l.b16 %v1437
      %v1646 = vunpack.c.l.b16 %v1438
      %v1647 = vunpack.c.l.b16 %v1439
      %v1648 = vunpack.c.l.b16 %v1440
      %v1649 = vpack.c.b16 %v1586, %v1585
      %v1650 = vpack.c.b16 %v1588, %v1587
      %v1651 = vpack.c.b16 %v1590, %v1589
      %v1652 = vpack.c.b16 %v1592, %v1591
      %v1653 = vpack.c.b16 %v1594, %v1593
      %v1654 = vpack.c.b16 %v1596, %v1595
      %v1655 = vpack.c.b16 %v1598, %v1597
      %v1656 = vpack.c.b16 %v1600, %v1599
      %v1657 = vpack.c.b16 %v1602, %v1601
      %v1658 = vpack.c.b16 %v1604, %v1603
      %v1659 = vpack.c.b16 %v1606, %v1605
      %v1660 = vpack.c.b16 %v1608, %v1607
      %v1661 = vpack.c.b16 %v1610, %v1609
      %v1662 = vpack.c.b16 %v1612, %v1611
      %v1663 = vpack.c.b16 %v1614, %v1613
      %v1664 = vpack.c.b16 %v1616, %v1615
      %v1665 = vpack.c.b16 %v1618, %v1617
      %v1666 = vpack.c.b16 %v1620, %v1619
      %v1667 = vpack.c.b16 %v1622, %v1621
      %v1668 = vpack.c.b16 %v1624, %v1623
      %v1669 = vpack.c.b16 %v1626, %v1625
      %v1670 = vpack.c.b16 %v1628, %v1627
      %v1671 = vpack.c.b16 %v1630, %v1629
      %v1672 = vpack.c.b16 %v1632, %v1631
      %v1673 = vpack.c.b16 %v1634, %v1633
      %v1674 = vpack.c.b16 %v1636, %v1635
      %v1675 = vpack.c.b16 %v1638, %v1637
      %v1676 = vpack.c.b16 %v1640, %v1639
      %v1677 = vpack.c.b16 %v1642, %v1641
      %v1678 = vpack.c.b16 %v1644, %v1643
      %v1679 = vpack.c.b16 %v1646, %v1645
      %v1680 = vpack.c.b16 %v1648, %v1647
      %1713 = vmatprep.subr.bf16.mxu0 0
      %1714 = vmatpush1.bf16.msra.mxu0 %v1656
      %1715 = vmatprep.subr.bf16.mxu0 0
      %1716 = vmatpush1.bf16.msra.mxu0 %v1655
      %1717 = vmatprep.subr.bf16.mxu0 0
      %1718 = vmatpush1.bf16.msra.mxu0 %v1654
      %1719 = vmatprep.subr.bf16.mxu0 0
      %1720 = vmatpush1.bf16.msra.mxu0 %v1653
      %1721 = vmatprep.subr.bf16.mxu0 0
      %1722 = vmatpush1.bf16.msra.mxu0 %v1652
      %1723 = vmatprep.subr.bf16.mxu0 0
      %1724 = vmatpush1.bf16.msra.mxu0 %v1651
      %1725 = vmatprep.subr.bf16.mxu0 0
      %1726 = vmatpush1.bf16.msra.mxu0 %v1650
      %1727 = vmatprep.subr.bf16.mxu0 0
      %1728 = vmatpush1.bf16.msra.mxu0 %v1649
      %1729 = vmatprep.subr.bf16.mxu0 0
      %1730 = vmatpush2.bf16.msra.mxu0 %v1664
      %1731 = vmatprep.subr.bf16.mxu0 0
      %1732 = vmatpush2.bf16.msra.mxu0 %v1663
      %1733 = vmatprep.subr.bf16.mxu0 0
      %1734 = vmatpush2.bf16.msra.mxu0 %v1662
      %1735 = vmatprep.subr.bf16.mxu0 0
      %1736 = vmatpush2.bf16.msra.mxu0 %v1661
      %1737 = vmatprep.subr.bf16.mxu0 0
      %1738 = vmatpush2.bf16.msra.mxu0 %v1660
      %1739 = vmatprep.subr.bf16.mxu0 0
      %1740 = vmatpush2.bf16.msra.mxu0 %v1659
      %1741 = vmatprep.subr.bf16.mxu0 0
      %1742 = vmatpush2.bf16.msra.mxu0 %v1658
      %1743 = vmatprep.subr.bf16.mxu0 0
      %1744 = vmatpush2.bf16.msra.mxu0 %v1657
      %1745 = vmatprep.mubr.bf16.mxu0 %v1490
      %1746 = vmatmul.mubr.bf16.gmra.mxu0 %v1489
      %v1747 = vpop.f32.mrf.mxu0
      %v1748 = vadd.f32 0.0, %v1747
      %v1749 = vpop.f32.mrf.mxu0
      %v1750 = vpop.f32.mrf.mxu0
      %v1751 = vadd.f32 0.0, %v1750
      %v1752 = vpop.f32.mrf.mxu0
      %1753 = vmatprep.mubr.bf16.mxu0 %v1494
      %1754 = vmatmul.mubr.bf16.gmra.mxu0 %v1493
      %v1755 = vpop.f32.mrf.mxu0
      %v1756 = vadd.f32 0.0, %v1755
      %v1757 = vpop.f32.mrf.mxu0
      %v1758 = vpop.f32.mrf.mxu0
      %v1759 = vadd.f32 0.0, %v1758
      %v1760 = vpop.f32.mrf.mxu0
      %1761 = vmatprep.mubr.bf16.mxu0 %v1498
      %1762 = vmatmul.mubr.bf16.gmra.mxu0 %v1497
      %v1763 = vpop.f32.mrf.mxu0
      %v1764 = vadd.f32 0.0, %v1763
      %v1765 = vpop.f32.mrf.mxu0
      %v1766 = vpop.f32.mrf.mxu0
      %v1767 = vadd.f32 0.0, %v1766
      %v1768 = vpop.f32.mrf.mxu0
      %1769 = vmatprep.mubr.bf16.mxu0 %v1502
      %1770 = vmatmul.mubr.bf16.gmra.mxu0 %v1501
      %v1771 = vpop.f32.mrf.mxu0
      %v1772 = vadd.f32 0.0, %v1771
      %v1773 = vpop.f32.mrf.mxu0
      %v1774 = vpop.f32.mrf.mxu0
      %v1775 = vadd.f32 0.0, %v1774
      %v1776 = vpop.f32.mrf.mxu0
      %1777 = vdwg.mxu0
      %1778 = vmatprep.subr.bf16.mxu0 0
      %1779 = vmatpush1.bf16.msra.mxu0 %v1672
      %1780 = vmatprep.subr.bf16.mxu0 0
      %1781 = vmatpush1.bf16.msra.mxu0 %v1671
      %1782 = vmatprep.subr.bf16.mxu0 0
      %1783 = vmatpush1.bf16.msra.mxu0 %v1670
      %1784 = vmatprep.subr.bf16.mxu0 0
      %1785 = vmatpush1.bf16.msra.mxu0 %v1669
      %1786 = vmatprep.subr.bf16.mxu0 0
      %1787 = vmatpush1.bf16.msra.mxu0 %v1668
      %1788 = vmatprep.subr.bf16.mxu0 0
      %1789 = vmatpush1.bf16.msra.mxu0 %v1667
      %1790 = vmatprep.subr.bf16.mxu0 0
      %1791 = vmatpush1.bf16.msra.mxu0 %v1666
      %1792 = vmatprep.subr.bf16.mxu0 0
      %1793 = vmatpush1.bf16.msra.mxu0 %v1665
      %1794 = vmatprep.subr.bf16.mxu0 0
      %1795 = vmatpush2.bf16.msra.mxu0 %v1680
      %1796 = vmatprep.subr.bf16.mxu0 0
      %1797 = vmatpush2.bf16.msra.mxu0 %v1679
      %1798 = vmatprep.subr.bf16.mxu0 0
      %1799 = vmatpush2.bf16.msra.mxu0 %v1678
      %1800 = vmatprep.subr.bf16.mxu0 0
      %1801 = vmatpush2.bf16.msra.mxu0 %v1677
      %1802 = vmatprep.subr.bf16.mxu0 0
      %1803 = vmatpush2.bf16.msra.mxu0 %v1676
      %1804 = vmatprep.subr.bf16.mxu0 0
      %1805 = vmatpush2.bf16.msra.mxu0 %v1675
      %1806 = vmatprep.subr.bf16.mxu0 0
      %1807 = vmatpush2.bf16.msra.mxu0 %v1674
      %1808 = vmatprep.subr.bf16.mxu0 0
      %1809 = vmatpush2.bf16.msra.mxu0 %v1673
      %1810 = vmatprep.mubr.bf16.mxu0 %v1492
      %1811 = vmatmul.mubr.bf16.gmra.mxu0 %v1491
      %v1812 = vpop.f32.mrf.mxu0
      %v1813 = vadd.f32 %v1748, %v1812
      %v1814 = vpop.f32.mrf.mxu0
      %v1815 = vpop.f32.mrf.mxu0
      %v1816 = vadd.f32 %v1751, %v1815
      %v1817 = vpop.f32.mrf.mxu0
      %1818 = vmatprep.mubr.bf16.mxu0 %v1496
      %1819 = vmatmul.mubr.bf16.gmra.mxu0 %v1495
      %v1820 = vpop.f32.mrf.mxu0
      %v1821 = vadd.f32 %v1756, %v1820
      %v1822 = vpop.f32.mrf.mxu0
      %v1823 = vpop.f32.mrf.mxu0
      %v1824 = vadd.f32 %v1759, %v1823
      %v1825 = vpop.f32.mrf.mxu0
      %1826 = vmatprep.mubr.bf16.mxu0 %v1500
      %1827 = vmatmul.mubr.bf16.gmra.mxu0 %v1499
      %v1828 = vpop.f32.mrf.mxu0
      %v1829 = vadd.f32 %v1764, %v1828
      %v1830 = vpop.f32.mrf.mxu0
      %v1831 = vpop.f32.mrf.mxu0
      %v1832 = vadd.f32 %v1767, %v1831
      %v1833 = vpop.f32.mrf.mxu0
      %1834 = vmatprep.mubr.bf16.mxu0 %v1504
      %1835 = vmatmul.mubr.bf16.gmra.mxu0 %v1503
      %v1836 = vpop.f32.mrf.mxu0
      %v1837 = vadd.f32 %v1772, %v1836
      %v1838 = vpop.f32.mrf.mxu0
      %v1839 = vpop.f32.mrf.mxu0
      %v1840 = vadd.f32 %v1775, %v1839
      %v1841 = vpop.f32.mrf.mxu0
      %1842 = vdwg.mxu0
      %v1843 = vadd.f32 %v1329, %v1813
      %v1844 = vadd.f32 %v1332, %v1816
      %v1845 = vadd.f32 %v1337, %v1821
      %v1846 = vadd.f32 %v1340, %v1824
      %v1847 = vadd.f32 %v1345, %v1829
      %v1848 = vadd.f32 %v1348, %v1832
      %v1849 = vadd.f32 %v1353, %v1837
      %v1850 = vadd.f32 %v1356, %v1840
      %v1851 = vld [vmem:[%s1359] sm:$0xff]
      %v1852 = vld [vmem:[%s1359 + $0x8] sm:$0xff]
      %v1853 = vld [vmem:[%s1359 + $0x10] sm:$0x11]
      %v1854 = vld [vmem:[%s1359 + $0x18] sm:$0x11]
      %v1855 = vld [vmem:[%s1359 + $0x20] sm:$0xff]
      %v1856 = vld [vmem:[%s1359 + $0x28] sm:$0xff]
      %v1857 = vld [vmem:[%s1359 + $0x30] sm:$0x11]
      %v1858 = vld [vmem:[%s1359 + $0x38] sm:$0x11]
      %v1859 = vld [vmem:[%s1359 + $0x40] sm:$0xff]
      %v1860 = vld [vmem:[%s1359 + $0x48] sm:$0xff]
      %v1861 = vld [vmem:[%s1359 + $0x50] sm:$0x11]
      %v1862 = vld [vmem:[%s1359 + $0x58] sm:$0x11]
      %v1863 = vld [vmem:[%s1359 + $0x60] sm:$0xff]
      %v1864 = vld [vmem:[%s1359 + $0x68] sm:$0xff]
      %v1865 = vld [vmem:[%s1359 + $0x70] sm:$0x11]
      %v1866 = vld [vmem:[%s1359 + $0x78] sm:$0x11]
      %v1867 = vld [vmem:[%s1359 + $0x80] sm:$0xff]
      %v1868 = vld [vmem:[%s1359 + $0x88] sm:$0xff]
      %v1869 = vld [vmem:[%s1359 + $0x90] sm:$0x11]
      %v1870 = vld [vmem:[%s1359 + $0x98] sm:$0x11]
      %v1871 = vld [vmem:[%s1359 + $0xa0] sm:$0xff]
      %v1872 = vld [vmem:[%s1359 + $0xa8] sm:$0xff]
      %v1873 = vld [vmem:[%s1359 + $0xb0] sm:$0x11]
      %v1874 = vld [vmem:[%s1359 + $0xb8] sm:$0x11]
      %v1875 = vld [vmem:[%s1359 + $0xc0] sm:$0xff]
      %v1876 = vld [vmem:[%s1359 + $0xc8] sm:$0xff]
      %v1877 = vld [vmem:[%s1359 + $0xd0] sm:$0x11]
      %v1878 = vld [vmem:[%s1359 + $0xd8] sm:$0x11]
      %v1879 = vld [vmem:[%s1359 + $0xe0] sm:$0xff]
      %v1880 = vld [vmem:[%s1359 + $0xe8] sm:$0xff]
      %v1881 = vld [vmem:[%s1359 + $0xf0] sm:$0x11]
      %v1882 = vld [vmem:[%s1359 + $0xf8] sm:$0x11]
      %v1884 = vshrl.u32 %v1851, 16
      %v1886 = vrot.slane %v1884, 4
      %v1887 = vshll.u32 %v1851, 16
      %v1889 = vrot.slane %v1887, 5
      %v1890 = vor.u32 %v1886, %v1889
      %v1891 = vrot.slane %v1890, 4
      %v1893 = vshll.u32 %v1853, 16
      %v1895 = vrot.slane %v1893, 5
      %v1896 = vsel %vm281, %v1891, %v1895
      %v1898 = vshrl.u32 %v1852, 16
      %v1900 = vrot.slane %v1898, 4
      %v1901 = vshll.u32 %v1852, 16
      %v1903 = vrot.slane %v1901, 5
      %v1904 = vor.u32 %v1900, %v1903
      %v1905 = vrot.slane %v1904, 4
      %v1907 = vshll.u32 %v1854, 16
      %v1909 = vrot.slane %v1907, 5
      %v1910 = vsel %vm281, %v1905, %v1909
      %v1912 = vshrl.u32 %v1855, 16
      %v1914 = vrot.slane %v1912, 4
      %v1915 = vshll.u32 %v1855, 16
      %v1917 = vrot.slane %v1915, 5
      %v1918 = vor.u32 %v1914, %v1917
      %v1919 = vrot.slane %v1918, 4
      %v1921 = vshll.u32 %v1857, 16
      %v1923 = vrot.slane %v1921, 5
      %v1924 = vsel %vm281, %v1919, %v1923
      %v1926 = vshrl.u32 %v1856, 16
      %v1928 = vrot.slane %v1926, 4
      %v1929 = vshll.u32 %v1856, 16
      %v1931 = vrot.slane %v1929, 5
      %v1932 = vor.u32 %v1928, %v1931
      %v1933 = vrot.slane %v1932, 4
      %v1935 = vshll.u32 %v1858, 16
      %v1937 = vrot.slane %v1935, 5
      %v1938 = vsel %vm281, %v1933, %v1937
      %v1940 = vshrl.u32 %v1859, 16
      %v1942 = vrot.slane %v1940, 4
      %v1943 = vshll.u32 %v1859, 16
      %v1945 = vrot.slane %v1943, 5
      %v1946 = vor.u32 %v1942, %v1945
      %v1947 = vrot.slane %v1946, 4
      %v1949 = vshll.u32 %v1861, 16
      %v1951 = vrot.slane %v1949, 5
      %v1952 = vsel %vm281, %v1947, %v1951
      %v1954 = vshrl.u32 %v1860, 16
      %v1956 = vrot.slane %v1954, 4
      %v1957 = vshll.u32 %v1860, 16
      %v1959 = vrot.slane %v1957, 5
      %v1960 = vor.u32 %v1956, %v1959
      %v1961 = vrot.slane %v1960, 4
      %v1963 = vshll.u32 %v1862, 16
      %v1965 = vrot.slane %v1963, 5
      %v1966 = vsel %vm281, %v1961, %v1965
      %v1968 = vshrl.u32 %v1863, 16
      %v1970 = vrot.slane %v1968, 4
      %v1971 = vshll.u32 %v1863, 16
      %v1973 = vrot.slane %v1971, 5
      %v1974 = vor.u32 %v1970, %v1973
      %v1975 = vrot.slane %v1974, 4
      %v1977 = vshll.u32 %v1865, 16
      %v1979 = vrot.slane %v1977, 5
      %v1980 = vsel %vm281, %v1975, %v1979
      %v1982 = vshrl.u32 %v1864, 16
      %v1984 = vrot.slane %v1982, 4
      %v1985 = vshll.u32 %v1864, 16
      %v1987 = vrot.slane %v1985, 5
      %v1988 = vor.u32 %v1984, %v1987
      %v1989 = vrot.slane %v1988, 4
      %v1991 = vshll.u32 %v1866, 16
      %v1993 = vrot.slane %v1991, 5
      %v1994 = vsel %vm281, %v1989, %v1993
      %v1996 = vshrl.u32 %v1867, 16
      %v1998 = vrot.slane %v1996, 4
      %v1999 = vshll.u32 %v1867, 16
      %v2001 = vrot.slane %v1999, 5
      %v2002 = vor.u32 %v1998, %v2001
      %v2003 = vrot.slane %v2002, 4
      %v2005 = vshll.u32 %v1869, 16
      %v2007 = vrot.slane %v2005, 5
      %v2008 = vsel %vm281, %v2003, %v2007
      %v2010 = vshrl.u32 %v1868, 16
      %v2012 = vrot.slane %v2010, 4
      %v2013 = vshll.u32 %v1868, 16
      %v2015 = vrot.slane %v2013, 5
      %v2016 = vor.u32 %v2012, %v2015
      %v2017 = vrot.slane %v2016, 4
      %v2019 = vshll.u32 %v1870, 16
      %v2021 = vrot.slane %v2019, 5
      %v2022 = vsel %vm281, %v2017, %v2021
      %v2024 = vshrl.u32 %v1871, 16
      %v2026 = vrot.slane %v2024, 4
      %v2027 = vshll.u32 %v1871, 16
      %v2029 = vrot.slane %v2027, 5
      %v2030 = vor.u32 %v2026, %v2029
      %v2031 = vrot.slane %v2030, 4
      %v2033 = vshll.u32 %v1873, 16
      %v2035 = vrot.slane %v2033, 5
      %v2036 = vsel %vm281, %v2031, %v2035
      %v2038 = vshrl.u32 %v1872, 16
      %v2040 = vrot.slane %v2038, 4
      %v2041 = vshll.u32 %v1872, 16
      %v2043 = vrot.slane %v2041, 5
      %v2044 = vor.u32 %v2040, %v2043
      %v2045 = vrot.slane %v2044, 4
      %v2047 = vshll.u32 %v1874, 16
      %v2049 = vrot.slane %v2047, 5
      %v2050 = vsel %vm281, %v2045, %v2049
      %v2052 = vshrl.u32 %v1875, 16
      %v2054 = vrot.slane %v2052, 4
      %v2055 = vshll.u32 %v1875, 16
      %v2057 = vrot.slane %v2055, 5
      %v2058 = vor.u32 %v2054, %v2057
      %v2059 = vrot.slane %v2058, 4
      %v2061 = vshll.u32 %v1877, 16
      %v2063 = vrot.slane %v2061, 5
      %v2064 = vsel %vm281, %v2059, %v2063
      %v2066 = vshrl.u32 %v1876, 16
      %v2068 = vrot.slane %v2066, 4
      %v2069 = vshll.u32 %v1876, 16
      %v2071 = vrot.slane %v2069, 5
      %v2072 = vor.u32 %v2068, %v2071
      %v2073 = vrot.slane %v2072, 4
      %v2075 = vshll.u32 %v1878, 16
      %v2077 = vrot.slane %v2075, 5
      %v2078 = vsel %vm281, %v2073, %v2077
      %v2080 = vshrl.u32 %v1879, 16
      %v2082 = vrot.slane %v2080, 4
      %v2083 = vshll.u32 %v1879, 16
      %v2085 = vrot.slane %v2083, 5
      %v2086 = vor.u32 %v2082, %v2085
      %v2087 = vrot.slane %v2086, 4
      %v2089 = vshll.u32 %v1881, 16
      %v2091 = vrot.slane %v2089, 5
      %v2092 = vsel %vm281, %v2087, %v2091
      %v2094 = vshrl.u32 %v1880, 16
      %v2096 = vrot.slane %v2094, 4
      %v2097 = vshll.u32 %v1880, 16
      %v2099 = vrot.slane %v2097, 5
      %v2100 = vor.u32 %v2096, %v2099
      %v2101 = vrot.slane %v2100, 4
      %v2103 = vshll.u32 %v1882, 16
      %v2105 = vrot.slane %v2103, 5
      %v2106 = vsel %vm281, %v2101, %v2105
      %s2107 = scalar_lea.vmem %s1, 768
      %v2108 = vld [vmem:[%s2107] sm:$0xf]
      %v2109 = vld [vmem:[%s2107 + $0x4] sm:$0xf]
      %v2110 = vld [vmem:[%s2107 + $0x8] sm:$0xf]
      %v2111 = vld [vmem:[%s2107 + $0xc] sm:$0xf]
      %v2112 = vld [vmem:[%s2107 + $0x10] sm:$0xf]
      %v2113 = vld [vmem:[%s2107 + $0x14] sm:$0xf]
      %v2114 = vld [vmem:[%s2107 + $0x18] sm:$0xf]
      %v2115 = vld [vmem:[%s2107 + $0x1c] sm:$0xf]
      %v2116 = vld [vmem:[%s2107 + $0x20] sm:$0xf]
      %v2117 = vld [vmem:[%s2107 + $0x24] sm:$0xf]
      %v2118 = vld [vmem:[%s2107 + $0x28] sm:$0xf]
      %v2119 = vld [vmem:[%s2107 + $0x2c] sm:$0xf]
      %v2120 = vld [vmem:[%s2107 + $0x30] sm:$0xf]
      %v2121 = vld [vmem:[%s2107 + $0x34] sm:$0xf]
      %v2122 = vld [vmem:[%s2107 + $0x38] sm:$0xf]
      %v2123 = vld [vmem:[%s2107 + $0x3c] sm:$0xf]
      %v2124 = vld [vmem:[%s2107 + $0x40] sm:$0xf]
      %v2125 = vld [vmem:[%s2107 + $0x44] sm:$0xf]
      %v2126 = vld [vmem:[%s2107 + $0x48] sm:$0xf]
      %v2127 = vld [vmem:[%s2107 + $0x4c] sm:$0xf]
      %v2128 = vld [vmem:[%s2107 + $0x50] sm:$0xf]
      %v2129 = vld [vmem:[%s2107 + $0x54] sm:$0xf]
      %v2130 = vld [vmem:[%s2107 + $0x58] sm:$0xf]
      %v2131 = vld [vmem:[%s2107 + $0x5c] sm:$0xf]
      %v2132 = vld [vmem:[%s2107 + $0x60] sm:$0xf]
      %v2133 = vld [vmem:[%s2107 + $0x64] sm:$0xf]
      %v2134 = vld [vmem:[%s2107 + $0x68] sm:$0xf]
      %v2135 = vld [vmem:[%s2107 + $0x6c] sm:$0xf]
      %v2136 = vld [vmem:[%s2107 + $0x70] sm:$0xf]
      %v2137 = vld [vmem:[%s2107 + $0x74] sm:$0xf]
      %v2138 = vld [vmem:[%s2107 + $0x78] sm:$0xf]
      %v2139 = vld [vmem:[%s2107 + $0x7c] sm:$0xf]
      %v2140 = vld [vmem:[%s2107 + $0x80] sm:$0xf]
      %v2141 = vld [vmem:[%s2107 + $0x84] sm:$0xf]
      %v2142 = vld [vmem:[%s2107 + $0x88] sm:$0xf]
      %v2143 = vld [vmem:[%s2107 + $0x8c] sm:$0xf]
      %v2144 = vld [vmem:[%s2107 + $0x90] sm:$0xf]
      %v2145 = vld [vmem:[%s2107 + $0x94] sm:$0xf]
      %v2146 = vld [vmem:[%s2107 + $0x98] sm:$0xf]
      %v2147 = vld [vmem:[%s2107 + $0x9c] sm:$0xf]
      %v2148 = vld [vmem:[%s2107 + $0xa0] sm:$0xf]
      %v2149 = vld [vmem:[%s2107 + $0xa4] sm:$0xf]
      %v2150 = vld [vmem:[%s2107 + $0xa8] sm:$0xf]
      %v2151 = vld [vmem:[%s2107 + $0xac] sm:$0xf]
      %v2152 = vld [vmem:[%s2107 + $0xb0] sm:$0xf]
      %v2153 = vld [vmem:[%s2107 + $0xb4] sm:$0xf]
      %v2154 = vld [vmem:[%s2107 + $0xb8] sm:$0xf]
      %v2155 = vld [vmem:[%s2107 + $0xbc] sm:$0xf]
      %v2156 = vld [vmem:[%s2107 + $0xc0] sm:$0xf]
      %v2157 = vld [vmem:[%s2107 + $0xc4] sm:$0xf]
      %v2158 = vld [vmem:[%s2107 + $0xc8] sm:$0xf]
      %v2159 = vld [vmem:[%s2107 + $0xcc] sm:$0xf]
      %v2160 = vld [vmem:[%s2107 + $0xd0] sm:$0xf]
      %v2161 = vld [vmem:[%s2107 + $0xd4] sm:$0xf]
      %v2162 = vld [vmem:[%s2107 + $0xd8] sm:$0xf]
      %v2163 = vld [vmem:[%s2107 + $0xdc] sm:$0xf]
      %v2164 = vld [vmem:[%s2107 + $0xe0] sm:$0xf]
      %v2165 = vld [vmem:[%s2107 + $0xe4] sm:$0xf]
      %v2166 = vld [vmem:[%s2107 + $0xe8] sm:$0xf]
      %v2167 = vld [vmem:[%s2107 + $0xec] sm:$0xf]
      %v2168 = vld [vmem:[%s2107 + $0xf0] sm:$0xf]
      %v2169 = vld [vmem:[%s2107 + $0xf4] sm:$0xf]
      %v2170 = vld [vmem:[%s2107 + $0xf8] sm:$0xf]
      %v2171 = vld [vmem:[%s2107 + $0xfc] sm:$0xf]
      %v2172 = vunpack.c.l.b16 %v1896
      %v2173 = vunpack.c.h.b16 %v1896
      %v2174 = vunpack.c.l.b16 %v1910
      %v2175 = vunpack.c.h.b16 %v1910
      %v2176 = vunpack.c.l.b16 %v1924
      %v2177 = vunpack.c.h.b16 %v1924
      %v2178 = vunpack.c.l.b16 %v1938
      %v2179 = vunpack.c.h.b16 %v1938
      %v2180 = vunpack.c.l.b16 %v1952
      %v2181 = vunpack.c.h.b16 %v1952
      %v2182 = vunpack.c.l.b16 %v1966
      %v2183 = vunpack.c.h.b16 %v1966
      %v2184 = vunpack.c.l.b16 %v1980
      %v2185 = vunpack.c.h.b16 %v1980
      %v2186 = vunpack.c.l.b16 %v1994
      %v2187 = vunpack.c.h.b16 %v1994
      %v2188 = vunpack.c.l.b16 %v2008
      %v2189 = vunpack.c.h.b16 %v2008
      %v2190 = vunpack.c.l.b16 %v2022
      %v2191 = vunpack.c.h.b16 %v2022
      %v2192 = vunpack.c.l.b16 %v2036
      %v2193 = vunpack.c.h.b16 %v2036
      %v2194 = vunpack.c.l.b16 %v2050
      %v2195 = vunpack.c.h.b16 %v2050
      %v2196 = vunpack.c.l.b16 %v2064
      %v2197 = vunpack.c.h.b16 %v2064
      %v2198 = vunpack.c.l.b16 %v2078
      %v2199 = vunpack.c.h.b16 %v2078
      %v2200 = vunpack.c.l.b16 %v2092
      %v2201 = vunpack.c.h.b16 %v2092
      %v2202 = vunpack.c.l.b16 %v2106
      %v2203 = vunpack.c.h.b16 %v2106
      %v2204 = vpack.c.b16 %v2176, %v2172
      %v2205 = vpack.c.b16 %v2177, %v2173
      %v2206 = vpack.c.b16 %v2178, %v2174
      %v2207 = vpack.c.b16 %v2179, %v2175
      %v2208 = vpack.c.b16 %v2184, %v2180
      %v2209 = vpack.c.b16 %v2185, %v2181
      %v2210 = vpack.c.b16 %v2186, %v2182
      %v2211 = vpack.c.b16 %v2187, %v2183
      %v2212 = vpack.c.b16 %v2192, %v2188
      %v2213 = vpack.c.b16 %v2193, %v2189
      %v2214 = vpack.c.b16 %v2194, %v2190
      %v2215 = vpack.c.b16 %v2195, %v2191
      %v2216 = vpack.c.b16 %v2200, %v2196
      %v2217 = vpack.c.b16 %v2201, %v2197
      %v2218 = vpack.c.b16 %v2202, %v2198
      %v2219 = vpack.c.b16 %v2203, %v2199
      %v2300 = vunpack.c.l.b16 %v2108
      %v2301 = vunpack.c.l.b16 %v2109
      %v2302 = vunpack.c.l.b16 %v2110
      %v2303 = vunpack.c.l.b16 %v2111
      %v2304 = vunpack.c.l.b16 %v2112
      %v2305 = vunpack.c.l.b16 %v2113
      %v2306 = vunpack.c.l.b16 %v2114
      %v2307 = vunpack.c.l.b16 %v2115
      %v2308 = vunpack.c.l.b16 %v2116
      %v2309 = vunpack.c.l.b16 %v2117
      %v2310 = vunpack.c.l.b16 %v2118
      %v2311 = vunpack.c.l.b16 %v2119
      %v2312 = vunpack.c.l.b16 %v2120
      %v2313 = vunpack.c.l.b16 %v2121
      %v2314 = vunpack.c.l.b16 %v2122
      %v2315 = vunpack.c.l.b16 %v2123
      %v2316 = vunpack.c.l.b16 %v2124
      %v2317 = vunpack.c.l.b16 %v2125
      %v2318 = vunpack.c.l.b16 %v2126
      %v2319 = vunpack.c.l.b16 %v2127
      %v2320 = vunpack.c.l.b16 %v2128
      %v2321 = vunpack.c.l.b16 %v2129
      %v2322 = vunpack.c.l.b16 %v2130
      %v2323 = vunpack.c.l.b16 %v2131
      %v2324 = vunpack.c.l.b16 %v2132
      %v2325 = vunpack.c.l.b16 %v2133
      %v2326 = vunpack.c.l.b16 %v2134
      %v2327 = vunpack.c.l.b16 %v2135
      %v2328 = vunpack.c.l.b16 %v2136
      %v2329 = vunpack.c.l.b16 %v2137
      %v2330 = vunpack.c.l.b16 %v2138
      %v2331 = vunpack.c.l.b16 %v2139
      %v2332 = vunpack.c.l.b16 %v2140
      %v2333 = vunpack.c.l.b16 %v2141
      %v2334 = vunpack.c.l.b16 %v2142
      %v2335 = vunpack.c.l.b16 %v2143
      %v2336 = vunpack.c.l.b16 %v2144
      %v2337 = vunpack.c.l.b16 %v2145
      %v2338 = vunpack.c.l.b16 %v2146
      %v2339 = vunpack.c.l.b16 %v2147
      %v2340 = vunpack.c.l.b16 %v2148
      %v2341 = vunpack.c.l.b16 %v2149
      %v2342 = vunpack.c.l.b16 %v2150
      %v2343 = vunpack.c.l.b16 %v2151
      %v2344 = vunpack.c.l.b16 %v2152
      %v2345 = vunpack.c.l.b16 %v2153
      %v2346 = vunpack.c.l.b16 %v2154
      %v2347 = vunpack.c.l.b16 %v2155
      %v2348 = vunpack.c.l.b16 %v2156
      %v2349 = vunpack.c.l.b16 %v2157
      %v2350 = vunpack.c.l.b16 %v2158
      %v2351 = vunpack.c.l.b16 %v2159
      %v2352 = vunpack.c.l.b16 %v2160
      %v2353 = vunpack.c.l.b16 %v2161
      %v2354 = vunpack.c.l.b16 %v2162
      %v2355 = vunpack.c.l.b16 %v2163
      %v2356 = vunpack.c.l.b16 %v2164
      %v2357 = vunpack.c.l.b16 %v2165
      %v2358 = vunpack.c.l.b16 %v2166
      %v2359 = vunpack.c.l.b16 %v2167
      %v2360 = vunpack.c.l.b16 %v2168
      %v2361 = vunpack.c.l.b16 %v2169
      %v2362 = vunpack.c.l.b16 %v2170
      %v2363 = vunpack.c.l.b16 %v2171
      %v2364 = vpack.c.b16 %v2301, %v2300
      %v2365 = vpack.c.b16 %v2303, %v2302
      %v2366 = vpack.c.b16 %v2305, %v2304
      %v2367 = vpack.c.b16 %v2307, %v2306
      %v2368 = vpack.c.b16 %v2309, %v2308
      %v2369 = vpack.c.b16 %v2311, %v2310
      %v2370 = vpack.c.b16 %v2313, %v2312
      %v2371 = vpack.c.b16 %v2315, %v2314
      %v2372 = vpack.c.b16 %v2317, %v2316
      %v2373 = vpack.c.b16 %v2319, %v2318
      %v2374 = vpack.c.b16 %v2321, %v2320
      %v2375 = vpack.c.b16 %v2323, %v2322
      %v2376 = vpack.c.b16 %v2325, %v2324
      %v2377 = vpack.c.b16 %v2327, %v2326
      %v2378 = vpack.c.b16 %v2329, %v2328
      %v2379 = vpack.c.b16 %v2331, %v2330
      %v2380 = vpack.c.b16 %v2333, %v2332
      %v2381 = vpack.c.b16 %v2335, %v2334
      %v2382 = vpack.c.b16 %v2337, %v2336
      %v2383 = vpack.c.b16 %v2339, %v2338
      %v2384 = vpack.c.b16 %v2341, %v2340
      %v2385 = vpack.c.b16 %v2343, %v2342
      %v2386 = vpack.c.b16 %v2345, %v2344
      %v2387 = vpack.c.b16 %v2347, %v2346
      %v2388 = vpack.c.b16 %v2349, %v2348
      %v2389 = vpack.c.b16 %v2351, %v2350
      %v2390 = vpack.c.b16 %v2353, %v2352
      %v2391 = vpack.c.b16 %v2355, %v2354
      %v2392 = vpack.c.b16 %v2357, %v2356
      %v2393 = vpack.c.b16 %v2359, %v2358
      %v2394 = vpack.c.b16 %v2361, %v2360
      %v2395 = vpack.c.b16 %v2363, %v2362
      %2428 = vmatprep.subr.bf16.mxu0 0
      %2429 = vmatpush1.bf16.msra.mxu0 %v2371
      %2430 = vmatprep.subr.bf16.mxu0 0
      %2431 = vmatpush1.bf16.msra.mxu0 %v2370
      %2432 = vmatprep.subr.bf16.mxu0 0
      %2433 = vmatpush1.bf16.msra.mxu0 %v2369
      %2434 = vmatprep.subr.bf16.mxu0 0
      %2435 = vmatpush1.bf16.msra.mxu0 %v2368
      %2436 = vmatprep.subr.bf16.mxu0 0
      %2437 = vmatpush1.bf16.msra.mxu0 %v2367
      %2438 = vmatprep.subr.bf16.mxu0 0
      %2439 = vmatpush1.bf16.msra.mxu0 %v2366
      %2440 = vmatprep.subr.bf16.mxu0 0
      %2441 = vmatpush1.bf16.msra.mxu0 %v2365
      %2442 = vmatprep.subr.bf16.mxu0 0
      %2443 = vmatpush1.bf16.msra.mxu0 %v2364
      %2444 = vmatprep.subr.bf16.mxu0 0
      %2445 = vmatpush2.bf16.msra.mxu0 %v2379
      %2446 = vmatprep.subr.bf16.mxu0 0
      %2447 = vmatpush2.bf16.msra.mxu0 %v2378
      %2448 = vmatprep.subr.bf16.mxu0 0
      %2449 = vmatpush2.bf16.msra.mxu0 %v2377
      %2450 = vmatprep.subr.bf16.mxu0 0
      %2451 = vmatpush2.bf16.msra.mxu0 %v2376
      %2452 = vmatprep.subr.bf16.mxu0 0
      %2453 = vmatpush2.bf16.msra.mxu0 %v2375
      %2454 = vmatprep.subr.bf16.mxu0 0
      %2455 = vmatpush2.bf16.msra.mxu0 %v2374
      %2456 = vmatprep.subr.bf16.mxu0 0
      %2457 = vmatpush2.bf16.msra.mxu0 %v2373
      %2458 = vmatprep.subr.bf16.mxu0 0
      %2459 = vmatpush2.bf16.msra.mxu0 %v2372
      %2460 = vmatprep.mubr.bf16.mxu0 %v2205
      %2461 = vmatmul.mubr.bf16.gmra.mxu0 %v2204
      %v2462 = vpop.f32.mrf.mxu0
      %v2463 = vadd.f32 0.0, %v2462
      %v2464 = vpop.f32.mrf.mxu0
      %v2465 = vpop.f32.mrf.mxu0
      %v2466 = vadd.f32 0.0, %v2465
      %v2467 = vpop.f32.mrf.mxu0
      %2468 = vmatprep.mubr.bf16.mxu0 %v2209
      %2469 = vmatmul.mubr.bf16.gmra.mxu0 %v2208
      %v2470 = vpop.f32.mrf.mxu0
      %v2471 = vadd.f32 0.0, %v2470
      %v2472 = vpop.f32.mrf.mxu0
      %v2473 = vpop.f32.mrf.mxu0
      %v2474 = vadd.f32 0.0, %v2473
      %v2475 = vpop.f32.mrf.mxu0
      %2476 = vmatprep.mubr.bf16.mxu0 %v2213
      %2477 = vmatmul.mubr.bf16.gmra.mxu0 %v2212
      %v2478 = vpop.f32.mrf.mxu0
      %v2479 = vadd.f32 0.0, %v2478
      %v2480 = vpop.f32.mrf.mxu0
      %v2481 = vpop.f32.mrf.mxu0
      %v2482 = vadd.f32 0.0, %v2481
      %v2483 = vpop.f32.mrf.mxu0
      %2484 = vmatprep.mubr.bf16.mxu0 %v2217
      %2485 = vmatmul.mubr.bf16.gmra.mxu0 %v2216
      %v2486 = vpop.f32.mrf.mxu0
      %v2487 = vadd.f32 0.0, %v2486
      %v2488 = vpop.f32.mrf.mxu0
      %v2489 = vpop.f32.mrf.mxu0
      %v2490 = vadd.f32 0.0, %v2489
      %v2491 = vpop.f32.mrf.mxu0
      %2492 = vdwg.mxu0
      %2493 = vmatprep.subr.bf16.mxu0 0
      %2494 = vmatpush1.bf16.msra.mxu0 %v2387
      %2495 = vmatprep.subr.bf16.mxu0 0
      %2496 = vmatpush1.bf16.msra.mxu0 %v2386
      %2497 = vmatprep.subr.bf16.mxu0 0
      %2498 = vmatpush1.bf16.msra.mxu0 %v2385
      %2499 = vmatprep.subr.bf16.mxu0 0
      %2500 = vmatpush1.bf16.msra.mxu0 %v2384
      %2501 = vmatprep.subr.bf16.mxu0 0
      %2502 = vmatpush1.bf16.msra.mxu0 %v2383
      %2503 = vmatprep.subr.bf16.mxu0 0
      %2504 = vmatpush1.bf16.msra.mxu0 %v2382
      %2505 = vmatprep.subr.bf16.mxu0 0
      %2506 = vmatpush1.bf16.msra.mxu0 %v2381
      %2507 = vmatprep.subr.bf16.mxu0 0
      %2508 = vmatpush1.bf16.msra.mxu0 %v2380
      %2509 = vmatprep.subr.bf16.mxu0 0
      %2510 = vmatpush2.bf16.msra.mxu0 %v2395
      %2511 = vmatprep.subr.bf16.mxu0 0
      %2512 = vmatpush2.bf16.msra.mxu0 %v2394
      %2513 = vmatprep.subr.bf16.mxu0 0
      %2514 = vmatpush2.bf16.msra.mxu0 %v2393
      %2515 = vmatprep.subr.bf16.mxu0 0
      %2516 = vmatpush2.bf16.msra.mxu0 %v2392
      %2517 = vmatprep.subr.bf16.mxu0 0
      %2518 = vmatpush2.bf16.msra.mxu0 %v2391
      %2519 = vmatprep.subr.bf16.mxu0 0
      %2520 = vmatpush2.bf16.msra.mxu0 %v2390
      %2521 = vmatprep.subr.bf16.mxu0 0
      %2522 = vmatpush2.bf16.msra.mxu0 %v2389
      %2523 = vmatprep.subr.bf16.mxu0 0
      %2524 = vmatpush2.bf16.msra.mxu0 %v2388
      %2525 = vmatprep.mubr.bf16.mxu0 %v2207
      %2526 = vmatmul.mubr.bf16.gmra.mxu0 %v2206
      %v2527 = vpop.f32.mrf.mxu0
      %v2528 = vadd.f32 %v2463, %v2527
      %v2529 = vpop.f32.mrf.mxu0
      %v2530 = vpop.f32.mrf.mxu0
      %v2531 = vadd.f32 %v2466, %v2530
      %v2532 = vpop.f32.mrf.mxu0
      %2533 = vmatprep.mubr.bf16.mxu0 %v2211
      %2534 = vmatmul.mubr.bf16.gmra.mxu0 %v2210
      %v2535 = vpop.f32.mrf.mxu0
      %v2536 = vadd.f32 %v2471, %v2535
      %v2537 = vpop.f32.mrf.mxu0
      %v2538 = vpop.f32.mrf.mxu0
      %v2539 = vadd.f32 %v2474, %v2538
      %v2540 = vpop.f32.mrf.mxu0
      %2541 = vmatprep.mubr.bf16.mxu0 %v2215
      %2542 = vmatmul.mubr.bf16.gmra.mxu0 %v2214
      %v2543 = vpop.f32.mrf.mxu0
      %v2544 = vadd.f32 %v2479, %v2543
      %v2545 = vpop.f32.mrf.mxu0
      %v2546 = vpop.f32.mrf.mxu0
      %v2547 = vadd.f32 %v2482, %v2546
      %v2548 = vpop.f32.mrf.mxu0
      %2549 = vmatprep.mubr.bf16.mxu0 %v2219
      %2550 = vmatmul.mubr.bf16.gmra.mxu0 %v2218
      %v2551 = vpop.f32.mrf.mxu0
      %v2552 = vadd.f32 %v2487, %v2551
      %v2553 = vpop.f32.mrf.mxu0
      %v2554 = vpop.f32.mrf.mxu0
      %v2555 = vadd.f32 %v2490, %v2554
      %v2556 = vpop.f32.mrf.mxu0
      %2557 = vdwg.mxu0
      %v2558 = vadd.f32 %v1843, %v2528
      %v2559 = vadd.f32 %v1844, %v2531
      %v2560 = vadd.f32 %v1845, %v2536
      %v2561 = vadd.f32 %v1846, %v2539
      %v2562 = vadd.f32 %v1847, %v2544
      %v2563 = vadd.f32 %v1848, %v2547
      %v2564 = vadd.f32 %v1849, %v2552
      %v2565 = vadd.f32 %v1850, %v2555
      %v2566 = vpack.c.bf16 %v2559, %v2558
      %v2567 = vpack.c.bf16 %v2561, %v2560
      %v2568 = vpack.c.bf16 %v2563, %v2562
      %v2569 = vpack.c.bf16 %v2565, %v2564
      %v2574 = vunpack.c.l.b16 %v2566
      %v2575 = vunpack.c.h.b16 %v2566
      %v2576 = vunpack.c.l.b16 %v2567
      %v2577 = vunpack.c.h.b16 %v2567
      %v2578 = vunpack.c.l.b16 %v2568
      %v2579 = vunpack.c.h.b16 %v2568
      %v2580 = vunpack.c.l.b16 %v2569
      %v2581 = vunpack.c.h.b16 %v2569
      %v2582 = vpack.c.b16 %v2574, %v2574
      %v2583 = vpack.c.b16 %v2575, %v2575
      %v2584 = vpack.c.b16 %v2576, %v2576
      %v2585 = vpack.c.b16 %v2577, %v2577
      %v2586 = vpack.c.b16 %v2578, %v2578
      %v2587 = vpack.c.b16 %v2579, %v2579
      %v2588 = vpack.c.b16 %v2580, %v2580
      %v2589 = vpack.c.b16 %v2581, %v2581
      %2598 = vst [vmem:[%s177] sm:$0xf] %v2582
      %2599 = vst [vmem:[%s177 + $0x4] sm:$0xf] %v2583
      %2600 = vst [vmem:[%s177 + $0x8] sm:$0xf] %v2584
      %2601 = vst [vmem:[%s177 + $0xc] sm:$0xf] %v2585
      %2602 = vst [vmem:[%s177 + $0x10] sm:$0xf] %v2586
      %2603 = vst [vmem:[%s177 + $0x14] sm:$0xf] %v2587
      %2604 = vst [vmem:[%s177 + $0x18] sm:$0xf] %v2588
      %2605 = vst [vmem:[%s177 + $0x1c] sm:$0xf] %v2589
      %v2606 = vadd.f32 %v2558, %v2559
      %v2607 = vadd.f32 %v2606, %v2560
      %v2608 = vadd.f32 %v2607, %v2561
      %v2609 = vadd.f32 %v2608, %v2562
      %v2610 = vadd.f32 %v2609, %v2563
      %v2611 = vadd.f32 %v2610, %v2564
      %v2612 = vadd.f32 %v2611, %v2565
      %v2613 = vrot.slane %v2612, 4
      %v2614 = vadd.f32 %v2612, %v2613
      %v2615 = vrot.slane %v2614, 2
      %v2616 = vadd.f32 %v2614, %v2615
      %v2617 = vrot.slane %v2616, 1
      %v2618 = vadd.f32 %v2616, %v2617
      %v2619 = vmul.f32 %v2558, %v2558
      %v2620 = vmul.f32 %v2559, %v2559
      %v2621 = vmul.f32 %v2560, %v2560
      %v2622 = vmul.f32 %v2561, %v2561
      %v2623 = vmul.f32 %v2562, %v2562
      %v2624 = vmul.f32 %v2563, %v2563
      %v2625 = vmul.f32 %v2564, %v2564
      %v2626 = vmul.f32 %v2565, %v2565
      %v2627 = vadd.f32 %v2619, %v2620
      %v2628 = vadd.f32 %v2627, %v2621
      %v2629 = vadd.f32 %v2628, %v2622
      %v2630 = vadd.f32 %v2629, %v2623
      %v2631 = vadd.f32 %v2630, %v2624
      %v2632 = vadd.f32 %v2631, %v2625
      %v2633 = vadd.f32 %v2632, %v2626
      %v2634 = vrot.slane %v2633, 4
      %v2635 = vadd.f32 %v2633, %v2634
      %v2636 = vrot.slane %v2635, 2
      %v2637 = vadd.f32 %v2635, %v2636
      %v2638 = vrot.slane %v2637, 1
      %v2639 = vadd.f32 %v2637, %v2638
      %vm2640 = vcmask 1040384
      %v2641 = vsel %vm2640, %v2618, %v2639
      %vm2642 = vcmask 1041408
      %v2643 = vsel %vm2642, %v2641, 0.0
      %2644 = vst [vmem:[%s181] sm:$0xff] %v2643
      %p2645 = scmp.lt.s32.totalorder %s15, 1
      %s2646 = scalar_select %p2645, %s15, 1
      %s2647 = smul.addr %s2646, 8
      %s2648 = smul.addr %s2647, 4
      %s2649 = scalar_lea.vmem %s2, %s2648
      %p2650 = scmp.lt.s32.totalorder %s15, 1
      %s2651 = scalar_select %p2650, %s15, 1
      %s2652 = smul.addr %s2651, 8
      %s2653 = scalar_lea.vmem %s3, %s2652
      // Predicated region
      $region29: #{bottleneck_forward.9} parent=27 // pred_check
        %p2654 = pneg %p80
      $region30: #{bottleneck_forward.9} parent=27 // pred_check_branch
        %2656 = sbr.rel (%p2654) target = $region32
      $region31: #{bottleneck_forward.9} parent=27 // pred_region
        _
      $region32: #{bottleneck_forward.9} parent=27 // pred_fallthru
        _
      // Predicated region
      $region33: #{bottleneck_forward.9} parent=27 // pred_check
        %p2657 = pneg %p106
      $region34: #{bottleneck_forward.9} parent=27 // pred_check_branch
        %2659 = sbr.rel (%p2657) target = $region36
      $region35: #{bottleneck_forward.9} parent=27 // pred_region
        _
      $region36: #{bottleneck_forward.9} parent=27 // pred_fallthru
        _
    $region28: #{bottleneck_forward.9} parent=5 // pred_fallthru
      _
    %p2660 = scmp.le.s32.totalorder 2, %s10
    // Predicated region
    $region37: #{bottleneck_forward.9} parent=5 // pred_check
      %p2661 = pneg %p2660
    $region38: #{bottleneck_forward.9} parent=5 // pred_check_branch
      %2663 = sbr.rel (%p2661) target = $region40
    $region39: #{bottleneck_forward.9} parent=5 // pred_region
      %s2664 = ssub.s32 %s10, 2
      // Predicated region
      $region41: #{bottleneck_forward.9} parent=39 // pred_check
        %p2665 = pneg %p86
      $region42: #{bottleneck_forward.9} parent=39 // pred_check_branch
        %2667 = sbr.rel (%p2665) target = $region44
      $region43: #{bottleneck_forward.9} parent=39 // pred_region
        %p2668 = scmp.lt.s32.totalorder %s16, 1
        %s2669 = scalar_select %p2668, %s16, 1
        %s2670 = smul.addr %s2669, 8
        %s2671 = smul.addr %s2670, 4
        %s2672 = scalar_lea.vmem %s2, %s2671
      $region44: #{bottleneck_forward.9} parent=39 // pred_fallthru
        _
      // Predicated region
      $region45: #{bottleneck_forward.9} parent=39 // pred_check
        %p2673 = pneg %p112
      $region46: #{bottleneck_forward.9} parent=39 // pred_check_branch
        %2675 = sbr.rel (%p2673) target = $region48
      $region47: #{bottleneck_forward.9} parent=39 // pred_region
        %p2676 = scmp.lt.s32.totalorder %s16, 1
        %s2677 = scalar_select %p2676, %s16, 1
        %s2678 = smul.addr %s2677, 8
        %s2679 = scalar_lea.vmem %s3, %s2678
      $region48: #{bottleneck_forward.9} parent=39 // pred_fallthru
        _
    $region40: #{bottleneck_forward.9} parent=5 // pred_fallthru
      _
  $region6: #{bottleneck_forward.9} parent=0 // loop_footer
    %s14 = sadd.s32 1, %s10
  $region7: #{bottleneck_forward.9} parent=0 // loop_footer_branch
    %9 = sbr.rel target = $region3
  $region8: #{bottleneck_forward.9} parent=0 // loop_exit
    _

// kernel: bottleneck_forward.13
$region0: #{bottleneck_forward.13}
  #allocation0 [shape = 'u32[]', space=smem, size = 0x4, offset = 0x4, fixed_abs, tag = 'smem constant byte address 0x4 - core index']
  #allocation1 [shape = 'u32[144,128]{1,0:T(1,128)}', space=vmem, size = 0x12000, scoped, tag = 'internal scratch']
  %s0 = inlined_call_operand.vmem [shape: bf16[128,128], index: 0, kind: input, shape index: {}]
  %s1 = inlined_call_operand.vmem [shape: f32[1,128], index: 1, kind: input, shape index: {}]
  %s2 = inlined_call_operand.vmem [shape: f32[1,128], index: 2, kind: input, shape index: {}]
  %s3 = inlined_call_operand.vmem [shape: bf16[128,128], index: 3, kind: input, shape index: {}]
  %s4 = inlined_call_operand.vmem [shape: f32[1,128], index: 4, kind: input, shape index: {}]
  %s5 = inlined_call_operand.vmem [shape: f32[1,128], index: 5, kind: input, shape index: {}]
  %s6 = inlined_call_operand.vmem [shape: f32[128,128], index: 6, kind: output, shape index: {}]
  %s7 = sld [smem:[#allocation0]]
  $region34: #{bottleneck_forward.13} parent=0
    _
  %s9 = ssub.s32 1, %s7
  %s10 = scalar_select 0, %s9, %s7
  // Predicated region
  $region2: #{bottleneck_forward.13} parent=0 // pred_check
    _
  $region3: #{bottleneck_forward.13} parent=0 // pred_check_branch
    %12 = sbr.rel (0) target = $region5
  $region4: #{bottleneck_forward.13} parent=0 // pred_region
    _
  $region5: #{bottleneck_forward.13} parent=0 // pred_fallthru
    _
  // Predicated region
  $region6: #{bottleneck_forward.13} parent=0 // pred_check
    _
  $region7: #{bottleneck_forward.13} parent=0 // pred_check_branch
    %14 = sbr.rel (0) target = $region9
  $region8: #{bottleneck_forward.13} parent=0 // pred_region
    _
  $region9: #{bottleneck_forward.13} parent=0 // pred_fallthru
    _
  // Predicated region
  $region10: #{bottleneck_forward.13} parent=0 // pred_check
    _
  $region11: #{bottleneck_forward.13} parent=0 // pred_check_branch
    %16 = sbr.rel (0) target = $region13
  $region12: #{bottleneck_forward.13} parent=0 // pred_region
    _
  $region13: #{bottleneck_forward.13} parent=0 // pred_fallthru
    _
  // Predicated region
  $region14: #{bottleneck_forward.13} parent=0 // pred_check
    _
  $region15: #{bottleneck_forward.13} parent=0 // pred_check_branch
    %18 = sbr.rel (0) target = $region17
  $region16: #{bottleneck_forward.13} parent=0 // pred_region
    _
  $region17: #{bottleneck_forward.13} parent=0 // pred_fallthru
    _
  // Predicated region
  $region18: #{bottleneck_forward.13} parent=0 // pred_check
    _
  $region19: #{bottleneck_forward.13} parent=0 // pred_check_branch
    %20 = sbr.rel (0) target = $region21
  $region20: #{bottleneck_forward.13} parent=0 // pred_region
    _
  $region21: #{bottleneck_forward.13} parent=0 // pred_fallthru
    _
  // Predicated region
  $region22: #{bottleneck_forward.13} parent=0 // pred_check
    _
  $region23: #{bottleneck_forward.13} parent=0 // pred_check_branch
    %22 = sbr.rel (0) target = $region25
  $region24: #{bottleneck_forward.13} parent=0 // pred_region
    _
  $region25: #{bottleneck_forward.13} parent=0 // pred_fallthru
    _
  %v23 = vld [vmem:[%s0] sm:$0xf]
  %v24 = vld [vmem:[%s0 + $0x4] sm:$0xf]
  %v25 = vld [vmem:[%s0 + $0x8] sm:$0xf]
  %v26 = vld [vmem:[%s0 + $0xc] sm:$0xf]
  %v27 = vld [vmem:[%s0 + $0x10] sm:$0xf]
  %v28 = vld [vmem:[%s0 + $0x14] sm:$0xf]
  %v29 = vld [vmem:[%s0 + $0x18] sm:$0xf]
  %v30 = vld [vmem:[%s0 + $0x1c] sm:$0xf]
  %v31 = vld [vmem:[%s0 + $0x20] sm:$0xf]
  %v32 = vld [vmem:[%s0 + $0x24] sm:$0xf]
  %v33 = vld [vmem:[%s0 + $0x28] sm:$0xf]
  %v34 = vld [vmem:[%s0 + $0x2c] sm:$0xf]
  %v35 = vld [vmem:[%s0 + $0x30] sm:$0xf]
  %v36 = vld [vmem:[%s0 + $0x34] sm:$0xf]
  %v37 = vld [vmem:[%s0 + $0x38] sm:$0xf]
  %v38 = vld [vmem:[%s0 + $0x3c] sm:$0xf]
  %v39 = vunpack.c.l.bf16 %v23
  %v40 = vunpack.c.l.bf16 %v24
  %v41 = vunpack.c.l.bf16 %v25
  %v42 = vunpack.c.l.bf16 %v26
  %v43 = vunpack.c.l.bf16 %v27
  %v44 = vunpack.c.l.bf16 %v28
  %v45 = vunpack.c.l.bf16 %v29
  %v46 = vunpack.c.l.bf16 %v30
  %v47 = vunpack.c.l.bf16 %v31
  %v48 = vunpack.c.l.bf16 %v32
  %v49 = vunpack.c.l.bf16 %v33
  %v50 = vunpack.c.l.bf16 %v34
  %v51 = vunpack.c.l.bf16 %v35
  %v52 = vunpack.c.l.bf16 %v36
  %v53 = vunpack.c.l.bf16 %v37
  %v54 = vunpack.c.l.bf16 %v38
  %v55 = vld [vmem:[%s1] sm:$0x1]
  %v57 = vlaneseq
  %v58 = vshrl.u32 %v57, 7
  %v59 = vsub.s32 0, %v58
  %v60 = vrot.slane %v55, %v59
  %v62 = vmul.f32 %v39, %v60
  %v63 = vmul.f32 %v40, %v60
  %v64 = vmul.f32 %v41, %v60
  %v65 = vmul.f32 %v42, %v60
  %v66 = vmul.f32 %v43, %v60
  %v67 = vmul.f32 %v44, %v60
  %v68 = vmul.f32 %v45, %v60
  %v69 = vmul.f32 %v46, %v60
  %v70 = vmul.f32 %v47, %v60
  %v71 = vmul.f32 %v48, %v60
  %v72 = vmul.f32 %v49, %v60
  %v73 = vmul.f32 %v50, %v60
  %v74 = vmul.f32 %v51, %v60
  %v75 = vmul.f32 %v52, %v60
  %v76 = vmul.f32 %v53, %v60
  %v77 = vmul.f32 %v54, %v60
  %v78 = vld [vmem:[%s2] sm:$0x1]
  %v80 = vlaneseq
  %v81 = vshrl.u32 %v80, 7
  %v82 = vsub.s32 0, %v81
  %v83 = vrot.slane %v78, %v82
  %v85 = vadd.f32 %v62, %v83
  %v86 = vadd.f32 %v63, %v83
  %v87 = vadd.f32 %v64, %v83
  %v88 = vadd.f32 %v65, %v83
  %v89 = vadd.f32 %v66, %v83
  %v90 = vadd.f32 %v67, %v83
  %v91 = vadd.f32 %v68, %v83
  %v92 = vadd.f32 %v69, %v83
  %v93 = vadd.f32 %v70, %v83
  %v94 = vadd.f32 %v71, %v83
  %v95 = vadd.f32 %v72, %v83
  %v96 = vadd.f32 %v73, %v83
  %v97 = vadd.f32 %v74, %v83
  %v98 = vadd.f32 %v75, %v83
  %v99 = vadd.f32 %v76, %v83
  %v100 = vadd.f32 %v77, %v83
  %v101 = vld [vmem:[%s3] sm:$0xf]
  %v102 = vld [vmem:[%s3 + $0x4] sm:$0xf]
  %v103 = vld [vmem:[%s3 + $0x8] sm:$0xf]
  %v104 = vld [vmem:[%s3 + $0xc] sm:$0xf]
  %v105 = vld [vmem:[%s3 + $0x10] sm:$0xf]
  %v106 = vld [vmem:[%s3 + $0x14] sm:$0xf]
  %v107 = vld [vmem:[%s3 + $0x18] sm:$0xf]
  %v108 = vld [vmem:[%s3 + $0x1c] sm:$0xf]
  %v109 = vld [vmem:[%s3 + $0x20] sm:$0xf]
  %v110 = vld [vmem:[%s3 + $0x24] sm:$0xf]
  %v111 = vld [vmem:[%s3 + $0x28] sm:$0xf]
  %v112 = vld [vmem:[%s3 + $0x2c] sm:$0xf]
  %v113 = vld [vmem:[%s3 + $0x30] sm:$0xf]
  %v114 = vld [vmem:[%s3 + $0x34] sm:$0xf]
  %v115 = vld [vmem:[%s3 + $0x38] sm:$0xf]
  %v116 = vld [vmem:[%s3 + $0x3c] sm:$0xf]
  %v117 = vunpack.c.l.bf16 %v101
  %v118 = vunpack.c.l.bf16 %v102
  %v119 = vunpack.c.l.bf16 %v103
  %v120 = vunpack.c.l.bf16 %v104
  %v121 = vunpack.c.l.bf16 %v105
  %v122 = vunpack.c.l.bf16 %v106
  %v123 = vunpack.c.l.bf16 %v107
  %v124 = vunpack.c.l.bf16 %v108
  %v125 = vunpack.c.l.bf16 %v109
  %v126 = vunpack.c.l.bf16 %v110
  %v127 = vunpack.c.l.bf16 %v111
  %v128 = vunpack.c.l.bf16 %v112
  %v129 = vunpack.c.l.bf16 %v113
  %v130 = vunpack.c.l.bf16 %v114
  %v131 = vunpack.c.l.bf16 %v115
  %v132 = vunpack.c.l.bf16 %v116
  %v133 = vld [vmem:[%s4] sm:$0x1]
  %v135 = vlaneseq
  %v136 = vshrl.u32 %v135, 7
  %v137 = vsub.s32 0, %v136
  %v138 = vrot.slane %v133, %v137
  %v140 = vmul.f32 %v117, %v138
  %v141 = vmul.f32 %v118, %v138
  %v142 = vmul.f32 %v119, %v138
  %v143 = vmul.f32 %v120, %v138
  %v144 = vmul.f32 %v121, %v138
  %v145 = vmul.f32 %v122, %v138
  %v146 = vmul.f32 %v123, %v138
  %v147 = vmul.f32 %v124, %v138
  %v148 = vmul.f32 %v125, %v138
  %v149 = vmul.f32 %v126, %v138
  %v150 = vmul.f32 %v127, %v138
  %v151 = vmul.f32 %v128, %v138
  %v152 = vmul.f32 %v129, %v138
  %v153 = vmul.f32 %v130, %v138
  %v154 = vmul.f32 %v131, %v138
  %v155 = vmul.f32 %v132, %v138
  %v156 = vadd.f32 %v85, %v140
  %v157 = vadd.f32 %v86, %v141
  %v158 = vadd.f32 %v87, %v142
  %v159 = vadd.f32 %v88, %v143
  %v160 = vadd.f32 %v89, %v144
  %v161 = vadd.f32 %v90, %v145
  %v162 = vadd.f32 %v91, %v146
  %v163 = vadd.f32 %v92, %v147
  %v164 = vadd.f32 %v93, %v148
  %v165 = vadd.f32 %v94, %v149
  %v166 = vadd.f32 %v95, %v150
  %v167 = vadd.f32 %v96, %v151
  %v168 = vadd.f32 %v97, %v152
  %v169 = vadd.f32 %v98, %v153
  %v170 = vadd.f32 %v99, %v154
  %v171 = vadd.f32 %v100, %v155
  %v172 = vld [vmem:[%s5] sm:$0x1]
  %v174 = vlaneseq
  %v175 = vshrl.u32 %v174, 7
  %v176 = vsub.s32 0, %v175
  %v177 = vrot.slane %v172, %v176
  %v179 = vadd.f32 %v156, %v177
  %v180 = vadd.f32 %v157, %v177
  %v181 = vadd.f32 %v158, %v177
  %v182 = vadd.f32 %v159, %v177
  %v183 = vadd.f32 %v160, %v177
  %v184 = vadd.f32 %v161, %v177
  %v185 = vadd.f32 %v162, %v177
  %v186 = vadd.f32 %v163, %v177
  %v187 = vadd.f32 %v164, %v177
  %v188 = vadd.f32 %v165, %v177
  %v189 = vadd.f32 %v166, %v177
  %v190 = vadd.f32 %v167, %v177
  %v191 = vadd.f32 %v168, %v177
  %v192 = vadd.f32 %v169, %v177
  %v193 = vadd.f32 %v170, %v177
  %v194 = vadd.f32 %v171, %v177
  %v195 = vmax.f32 %v179, 0.0
  %v196 = vmax.f32 %v180, 0.0
  %v197 = vmax.f32 %v181, 0.0
  %v198 = vmax.f32 %v182, 0.0
  %v199 = vmax.f32 %v183, 0.0
  %v200 = vmax.f32 %v184, 0.0
  %v201 = vmax.f32 %v185, 0.0
  %v202 = vmax.f32 %v186, 0.0
  %v203 = vmax.f32 %v187, 0.0
  %v204 = vmax.f32 %v188, 0.0
  %v205 = vmax.f32 %v189, 0.0
  %v206 = vmax.f32 %v190, 0.0
  %v207 = vmax.f32 %v191, 0.0
  %v208 = vmax.f32 %v192, 0.0
  %v209 = vmax.f32 %v193, 0.0
  %v210 = vmax.f32 %v194, 0.0
  %211 = vst [vmem:[%s6] sm:$0xff] %v195
  %212 = vst [vmem:[%s6 + $0x8] sm:$0xff] %v196
  %213 = vst [vmem:[%s6 + $0x10] sm:$0xff] %v197
  %214 = vst [vmem:[%s6 + $0x18] sm:$0xff] %v198
  %215 = vst [vmem:[%s6 + $0x20] sm:$0xff] %v199
  %216 = vst [vmem:[%s6 + $0x28] sm:$0xff] %v200
  %217 = vst [vmem:[%s6 + $0x30] sm:$0xff] %v201
  %218 = vst [vmem:[%s6 + $0x38] sm:$0xff] %v202
  %219 = vst [vmem:[%s6 + $0x40] sm:$0xff] %v203
  %220 = vst [vmem:[%s6 + $0x48] sm:$0xff] %v204
  %221 = vst [vmem:[%s6 + $0x50] sm:$0xff] %v205
  %222 = vst [vmem:[%s6 + $0x58] sm:$0xff] %v206
  %223 = vst [vmem:[%s6 + $0x60] sm:$0xff] %v207
  %224 = vst [vmem:[%s6 + $0x68] sm:$0xff] %v208
  %225 = vst [vmem:[%s6 + $0x70] sm:$0xff] %v209
  %226 = vst [vmem:[%s6 + $0x78] sm:$0xff] %v210
  // Predicated region
  $region26: #{bottleneck_forward.13} parent=0 // pred_check
    _
  $region27: #{bottleneck_forward.13} parent=0 // pred_check_branch
    %228 = sbr.rel (0) target = $region29
  $region28: #{bottleneck_forward.13} parent=0 // pred_region
    _
  $region29: #{bottleneck_forward.13} parent=0 // pred_fallthru
    _
  // Predicated region
  $region30: #{bottleneck_forward.13} parent=0 // pred_check
    _
  $region31: #{bottleneck_forward.13} parent=0 // pred_check_branch
    %230 = sbr.rel (0) target = $region33
  $region32: #{bottleneck_forward.13} parent=0 // pred_region
    _
  $region33: #{bottleneck_forward.13} parent=0 // pred_fallthru
    _

</llo_original>
